<compile_context>
chip_gen: v7x
topology: tpu7x:2x2x1
jax: 0.10.0
libtpu: 0.0.40
codegen_flags: <defaults>
</compile_context>

<pallas_src>
import functools

import jax
import jax.numpy as jnp
from jax.experimental import pallas as pl
from jax.experimental.pallas import tpu as pltpu


# ----------------------------------------------------------------------------
# Fused Pallas kernel
# ----------------------------------------------------------------------------
def _vqa_fused_kernel(
    # ---- inputs (all full-array VMEM blocks) ----
    emb_ref,        # (S, Bp, WEp) f32  word embeddings (tanh applied in-kernel)
    pooled_ref,     # (Bp, Cp)     f32  global-average-pooled image
    wih_f_ref,      # (WEp, 3*Hp)  bf16 forward-GRU W_ih (gate blocks [r|z|n])
    whh_f_ref,      # (Hp, 3*Hp)   bf16 forward-GRU W_hh
    bih_f_ref,      # (1, 3*Hp)    f32
    bhh_f_ref,      # (1, 3*Hp)    f32
    img_w_ref,      # (Cp, Fp)     bf16 resnet-stand-in projection
    img_b_ref,      # (1, Fp)      f32
    enc_wh_ref,     # (Hp, Hp)     bf16 imgenc fc, hidden half
    enc_wf_ref,     # (Fp, Hp)     bf16 imgenc fc, image half
    enc_b_ref,      # (1, Hp)      f32
    wih_b_enc_ref,  # (Hp, 3*Ep)   bf16 backward-GRU W_ih, enc half
    wih_b_q_ref,    # (WEp, 3*Ep)  bf16 backward-GRU W_ih, qst half
    whh_b_ref,      # (Ep, 3*Ep)   bf16 backward-GRU W_hh
    bih_b_ref,      # (1, 3*Ep)    f32
    bhh_b_ref,      # (1, 3*Ep)    f32
    w1_ref,         # (Ep, Ap)     bf16 fc1
    b1_ref,         # (1, Ap)      f32
    w2_ref,         # (Ap, Ap)     bf16 fc2
    b2_ref,         # (1, Ap)      f32
    # ---- output ----
    out_ref,        # (Bp, Ap)     f32  logits (padded)
    # ---- scratch ----
    gi_f_ref,       # (S, Bp, 3*Hp) f32 hoisted forward-GRU input gates
    out_f_ref,      # (S, Bp, Hp)   f32 forward-GRU per-step outputs
    gi_b_ref,       # (S, Bp, 3*Ep) f32 hoisted backward-GRU input gates
):
    S, Bp, WEp = emb_ref.shape
    Hp = whh_f_ref.shape[0]
    Ep = whh_b_ref.shape[0]
    mxu = jnp.bfloat16

    def mm(x, w_ref):
        # bf16 MXU operands, f32 accumulation; gate math stays f32.
        return jnp.dot(x.astype(mxu), w_ref[...],
                       preferred_element_type=jnp.float32)

    # ---- phase 1: tanh(embedding) + hoisted forward-GRU input projection ----
    qv = jnp.tanh(emb_ref[...])                                   # (S, Bp, WEp)
    gi_f_ref[...] = (mm(qv.reshape(S * Bp, WEp), wih_f_ref)
                     + bih_f_ref[...]).reshape(S, Bp, 3 * Hp)

    # ---- phase 2: forward GRU recurrence (zero init state, nn.GRU default) --
    bhh_f = bhh_f_ref[...]

    def fwd_step(t, h):
        gi = gi_f_ref[t]                                          # (Bp, 3*Hp)
        gh = mm(h, whh_f_ref) + bhh_f
        r = jax.nn.sigmoid(gi[:, :Hp] + gh[:, :Hp])
        z = jax.nn.sigmoid(gi[:, Hp:2 * Hp] + gh[:, Hp:2 * Hp])
        n = jnp.tanh(gi[:, 2 * Hp:] + r * gh[:, 2 * Hp:])
        h_new = (1.0 - z) * n + z * h
        out_f_ref[t] = h_new
        return h_new

    jax.lax.fori_loop(0, S, fwd_step,
                      jnp.zeros((Bp, Hp), jnp.float32), unroll=True)

    # ---- phase 3: image projection (resnet stand-in) + its fc contribution --
    img_feat = mm(pooled_ref[...], img_w_ref) + img_b_ref[...]    # (Bp, Fp)
    enc_img = mm(img_feat, enc_wf_ref) + enc_b_ref[...]           # (Bp, Hp)

    # ---- phase 4: ImgEncoderForRnn.fc as a split matmul (no concat/bcast) ---
    enc = (mm(out_f_ref[...].reshape(S * Bp, Hp), enc_wh_ref)
           .reshape(S, Bp, Hp) + enc_img[None, :, :])
    tanh_enc = jnp.tanh(enc)
    # qst half of the backward input is tanh applied twice (tanh(cat(...,qv)))
    tanh_qv = jnp.tanh(jnp.tanh(emb_ref[...]))

    # ---- phase 5: hoisted backward-GRU input projection (forward order) -----
    gi_b_ref[...] = (mm(tanh_enc.reshape(S * Bp, Hp), wih_b_enc_ref)
                     + mm(tanh_qv.reshape(S * Bp, WEp), wih_b_q_ref)
                     + bih_b_ref[...]).reshape(S, Bp, 3 * Ep)

    # ---- phase 6: backward GRU over the flipped sequence; keep final h only -
    bhh_b = bhh_b_ref[...]

    def bwd_step(t, h):
        gi = gi_b_ref[S - 1 - t]                                  # fused flip
        gh = mm(h, whh_b_ref) + bhh_b
        r = jax.nn.sigmoid(gi[:, :Ep] + gh[:, :Ep])
        z = jax.nn.sigmoid(gi[:, Ep:2 * Ep] + gh[:, Ep:2 * Ep])
        n = jnp.tanh(gi[:, 2 * Ep:] + r * gh[:, 2 * Ep:])
        return (1.0 - z) * n + z * h

    hb = jax.lax.fori_loop(0, S, bwd_step,
                           jnp.zeros((Bp, Ep), jnp.float32), unroll=True)

    # ---- phase 7: head: tanh -> (drop=id) -> fc1 -> tanh -> (drop=id) -> fc2
    x = jnp.tanh(hb)
    h1 = jnp.tanh(mm(x, w1_ref) + b1_ref[...])
    out_ref[...] = (mm(h1, w2_ref) + b2_ref[...]).astype(out_ref.dtype)


def vqa_fused(emb, pooled, prep):
    """emb: (S, Bp, WEp) f32; pooled: (Bp, Cp) f32. Returns (Bp, Ap) f32."""
    S, Bp, _ = emb.shape
    Hp = prep["whh_f"].shape[0]
    Ep = prep["whh_b"].shape[0]
    Ap = prep["w2"].shape[0]
    return pl.pallas_call(
        _vqa_fused_kernel,
        out_shape=jax.ShapeDtypeStruct((Bp, Ap), jnp.float32),
        scratch_shapes=[
            pltpu.VMEM((S, Bp, 3 * Hp), jnp.float32),
            pltpu.VMEM((S, Bp, Hp), jnp.float32),
            pltpu.VMEM((S, Bp, 3 * Ep), jnp.float32),
        ],
        compiler_params=pltpu.CompilerParams(
            vmem_limit_bytes=32 * 1024 * 1024),
    )(emb, pooled,
      prep["wih_f"], prep["whh_f"], prep["bih_f"], prep["bhh_f"],
      prep["img_w"], prep["img_b"],
      prep["enc_wh"], prep["enc_wf"], prep["enc_b"],
      prep["wih_b_enc"], prep["wih_b_q"], prep["whh_b"],
      prep["bih_b"], prep["bhh_b"],
      prep["w1"], prep["b1"], prep["w2"], prep["b2"])


# ----------------------------------------------------------------------------
# Model wrapper (forward pass)
# ----------------------------------------------------------------------------
@functools.partial(jax.jit, static_argnames=("ans_vocab",))
def vqa_forward(img, qst, prep, *, ans_vocab):
    """img: (B, C, H, W) f32 NCHW; qst: (B, S) int32 -> (B, ans_vocab) f32."""
    B, S = qst.shape
    Bp = -(-B // 8) * 8                              # pad batch to sublane mult

    # embedding gather (glue) -> seq-major, batch-padded, lane-padded columns
    emb = prep["embed"][jnp.transpose(qst)]          # (S, B, WEp)
    emb = jnp.pad(emb, ((0, 0), (0, Bp - B), (0, 0)))

    # resnet152 stand-in: global average pool (glue); projection is in-kernel
    pooled = jnp.mean(img, axis=(2, 3))              # (B, C)
    Cp = prep["img_w"].shape[0]
    pooled = jnp.pad(pooled, ((0, Bp - B), (0, Cp - pooled.shape[1])))

    logits_p = vqa_fused(emb, pooled, prep)          # (Bp, Ap)
    return logits_p[:B, :ans_vocab]


# ----------------------------------------------------------------------------
# Parameters: raw (PyTorch layout) + one-time prep (pad/transpose/split/bf16)
# ----------------------------------------------------------------------------
def make_params(key, *, qst_vocab, word_embed, hidden, embed, ans_vocab,
                img_channels, img_feat):
    ks = jax.random.split(key, 16)
    s = 0.1

    def nrm(k, shape):
        return s * jax.random.normal(k, shape, dtype=jnp.float32)

    return {
        "embed": nrm(ks[0], (qst_vocab, word_embed)),
        # forward GRU: word_embed -> hidden
        "gru_f_wih": nrm(ks[1], (3 * hidden, word_embed)),
        "gru_f_whh": nrm(ks[2], (3 * hidden, hidden)),
        "gru_f_bih": nrm(ks[3], (3 * hidden,)),
        "gru_f_bhh": nrm(ks[4], (3 * hidden,)),
        # resnet152 stand-in projection: channels -> img_feat
        "img_w": nrm(ks[5], (img_feat, img_channels)),
        "img_b": nrm(ks[6], (img_feat,)),
        # ImgEncoderForRnn.fc: (img_feat + hidden) -> hidden
        "imgenc_fc_w": nrm(ks[7], (hidden, img_feat + hidden)),
        "imgenc_fc_b": nrm(ks[8], (hidden,)),
        # backward GRU: (hidden + word_embed) -> embed
        "gru_b_wih": nrm(ks[9], (3 * embed, hidden + word_embed)),
        "gru_b_whh": nrm(ks[10], (3 * embed, embed)),
        "gru_b_bih": nrm(ks[11], (3 * embed,)),
        "gru_b_bhh": nrm(ks[12], (3 * embed,)),
        # head
        "fc1_w": nrm(ks[13], (ans_vocab, embed)),
        "fc1_b": nrm(ks[14], (ans_vocab,)),
        "fc2_w": nrm(ks[15], (ans_vocab, ans_vocab)),
        "fc2_b": jnp.zeros((ans_vocab,), jnp.float32),
    }


def prepare_params(params, *, word_embed, hidden, embed, ans_vocab,
                   img_channels, img_feat, lane=128):
    """One-time weight prep: transpose, split, zero-pad to lane width, bf16."""
    ceil = lambda x, m: ((x + m - 1) // m) * m
    WEp, Hp, Ep = ceil(word_embed, lane), ceil(hidden, lane), ceil(embed, lane)
    Ap, Fp, Cp = ceil(ans_vocab, lane), ceil(img_feat, lane), ceil(img_channels, lane)
    wdt = jnp.bfloat16   # MXU operand dtype (f32 accumulation inside kernel)

    def pad2(a, r, c, dtype=jnp.float32):
        a = jnp.asarray(a, jnp.float32)
        out = jnp.zeros((r, c), jnp.float32).at[:a.shape[0], :a.shape[1]].set(a)
        return out.astype(dtype)

    def gru_w(w, in_p, h, h_p):
        # PyTorch (3h, in) gates [r;z;n] -> transposed, per-gate padded (in_p, 3*h_p)
        w = jnp.asarray(w, jnp.float32)
        cols = []
        for g in range(3):
            blk = w[g * h:(g + 1) * h, :].T                     # (in, h)
            cols.append(jnp.zeros((in_p, h_p), jnp.float32)
                        .at[:blk.shape[0], :blk.shape[1]].set(blk))
        return jnp.concatenate(cols, axis=1).astype(wdt)

    def gru_b(b, h, h_p):
        b = jnp.asarray(b, jnp.float32)
        cols = [jnp.zeros((1, h_p), jnp.float32).at[0, :h].set(b[g * h:(g + 1) * h])
                for g in range(3)]
        return jnp.concatenate(cols, axis=1)                    # f32

    fc_w = jnp.asarray(params["imgenc_fc_w"], jnp.float32)      # (H, F+H)
    wb = jnp.asarray(params["gru_b_wih"], jnp.float32)          # (3E, H+WE)

    return {
        "embed": pad2(params["embed"], params["embed"].shape[0], WEp),
        # forward GRU
        "wih_f": gru_w(params["gru_f_wih"], WEp, hidden, Hp),
        "whh_f": gru_w(params["gru_f_whh"], Hp, hidden, Hp),
        "bih_f": gru_b(params["gru_f_bih"], hidden, Hp),
        "bhh_f": gru_b(params["gru_f_bhh"], hidden, Hp),
        # resnet stand-in projection
        "img_w": pad2(jnp.asarray(params["img_w"]).T, Cp, Fp, wdt),
        "img_b": pad2(params["img_b"].reshape(1, -1), 1, Fp),
        # imgenc fc split: [image half | hidden half]
        "enc_wf": pad2(fc_w[:, :img_feat].T, Fp, Hp, wdt),
        "enc_wh": pad2(fc_w[:, img_feat:].T, Hp, Hp, wdt),
        "enc_b": pad2(params["imgenc_fc_b"].reshape(1, -1), 1, Hp),
        # backward GRU: input = [enc(hidden) | qst(word_embed)]
        "wih_b_enc": gru_w(wb[:, :hidden], Hp, embed, Ep),
        "wih_b_q": gru_w(wb[:, hidden:], WEp, embed, Ep),
        "whh_b": gru_w(params["gru_b_whh"], Ep, embed, Ep),
        "bih_b": gru_b(params["gru_b_bih"], embed, Ep),
        "bhh_b": gru_b(params["gru_b_bhh"], embed, Ep),
        # head
        "w1": pad2(jnp.asarray(params["fc1_w"]).T, Ep, Ap, wdt),
        "b1": pad2(params["fc1_b"].reshape(1, -1), 1, Ap),
        "w2": pad2(jnp.asarray(params["fc2_w"]).T, Ap, Ap, wdt),
        "b2": pad2(params["fc2_b"].reshape(1, -1), 1, Ap),
    }


# ----------------------------------------------------------------------------
# Main
# ----------------------------------------------------------------------------
if __name__ == "__main__":
    B, S = 2, 8
    C, IH, IW = 3, 16, 16
    QST_VOCAB = 100
    WORD_EMBED = 16
    HIDDEN = 32
    EMBED = 32
    ANS_VOCAB = 24
    IMG_FEAT = 64   # stand-in for resnet152's pooled feature width

    key = jax.random.PRNGKey(0)
    k_img, k_qst, k_par = jax.random.split(key, 3)

    img = jax.random.normal(k_img, (B, C, IH, IW), dtype=jnp.float32)   # NCHW
    qst = jax.random.randint(k_qst, (B, S), 0, QST_VOCAB, dtype=jnp.int32)

    raw_params = make_params(k_par,
                             qst_vocab=QST_VOCAB, word_embed=WORD_EMBED,
                             hidden=HIDDEN, embed=EMBED, ans_vocab=ANS_VOCAB,
                             img_channels=C, img_feat=IMG_FEAT)
    prep = prepare_params(raw_params,
                          word_embed=WORD_EMBED, hidden=HIDDEN, embed=EMBED,
                          ans_vocab=ANS_VOCAB, img_channels=C,
                          img_feat=IMG_FEAT)

    out = vqa_forward(img, qst, prep, ans_vocab=ANS_VOCAB)
    out = jax.block_until_ready(out)
    assert out.shape == (B, ANS_VOCAB), out.shape
    assert jnp.all(jnp.isfinite(out))
    print("KERNEL_OK")
</pallas_src>

<mosaic_0001>
module attributes {stable_mosaic.version = 11 : i64} {
  func.func @_vqa_fused_kernel(%arg0: memref<8x8x128xf32, #tpu.memory_space<vmem>>, %arg1: memref<8x128xf32, #tpu.memory_space<vmem>>, %arg2: memref<128x384xbf16, #tpu.memory_space<vmem>>, %arg3: memref<128x384xbf16, #tpu.memory_space<vmem>>, %arg4: memref<1x384xf32, #tpu.memory_space<vmem>>, %arg5: memref<1x384xf32, #tpu.memory_space<vmem>>, %arg6: memref<128x128xbf16, #tpu.memory_space<vmem>>, %arg7: memref<1x128xf32, #tpu.memory_space<vmem>>, %arg8: memref<128x128xbf16, #tpu.memory_space<vmem>>, %arg9: memref<128x128xbf16, #tpu.memory_space<vmem>>, %arg10: memref<1x128xf32, #tpu.memory_space<vmem>>, %arg11: memref<128x384xbf16, #tpu.memory_space<vmem>>, %arg12: memref<128x384xbf16, #tpu.memory_space<vmem>>, %arg13: memref<128x384xbf16, #tpu.memory_space<vmem>>, %arg14: memref<1x384xf32, #tpu.memory_space<vmem>>, %arg15: memref<1x384xf32, #tpu.memory_space<vmem>>, %arg16: memref<128x128xbf16, #tpu.memory_space<vmem>>, %arg17: memref<1x128xf32, #tpu.memory_space<vmem>>, %arg18: memref<128x128xbf16, #tpu.memory_space<vmem>>, %arg19: memref<1x128xf32, #tpu.memory_space<vmem>>, %arg20: memref<8x128xf32, #tpu.memory_space<vmem>>, %arg21: memref<8x8x384xf32, #tpu.memory_space<vmem>>, %arg22: memref<8x8x128xf32, #tpu.memory_space<vmem>>, %arg23: memref<8x8x384xf32, #tpu.memory_space<vmem>>) attributes {dimension_semantics = [], scalar_prefetch = 0 : i64, scratch_operands = 3 : i64, tpu.core_type = #tpu.core_type<tc>} {
    %c0 = arith.constant 0 : index
    %c0_0 = arith.constant 0 : index
    %c0_1 = arith.constant 0 : index
    %0 = vector.load %arg0[%c0, %c0_0, %c0_1] : memref<8x8x128xf32, #tpu.memory_space<vmem>>, vector<8x8x128xf32>
    %1 = math.tanh %0 : vector<8x8x128xf32>
    %2 = vector.shape_cast %1 : vector<8x8x128xf32> to vector<64x128xf32>
    %3 = arith.truncf %2 : vector<64x128xf32> to vector<64x128xbf16>
    %c0_2 = arith.constant 0 : index
    %c0_3 = arith.constant 0 : index
    %4 = vector.load %arg2[%c0_2, %c0_3] : memref<128x384xbf16, #tpu.memory_space<vmem>>, vector<128x384xbf16>
    %cst = arith.constant dense<0.000000e+00> : vector<64x384xf32>
    %5 = tpu.matmul %3, %4, %cst {dimension_numbers = #tpu.dot_dimension_numbers<[1], [0], [0], [1], [0, 0, 1, 1], [], []>} : vector<64x128xbf16>, vector<128x384xbf16>, vector<64x384xf32> -> vector<64x384xf32>
    %c0_4 = arith.constant 0 : index
    %c0_5 = arith.constant 0 : index
    %6 = vector.load %arg4[%c0_4, %c0_5] : memref<1x384xf32, #tpu.memory_space<vmem>>, vector<1x384xf32>
    %7 = vector.broadcast %6 : vector<1x384xf32> to vector<64x384xf32>
    %8 = arith.addf %5, %7 : vector<64x384xf32>
    %9 = vector.shape_cast %8 : vector<64x384xf32> to vector<8x8x384xf32>
    %c0_6 = arith.constant 0 : index
    %c0_7 = arith.constant 0 : index
    %c0_8 = arith.constant 0 : index
    %10 = vector.load %arg21[%c0_6, %c0_7, %c0_8] : memref<8x8x384xf32, #tpu.memory_space<vmem>>, vector<8x8x384xf32>
    tpu.vector_store %arg21[%c0_6, %c0_7, %c0_8], %9 {strides = array<i32>} : memref<8x8x384xf32, #tpu.memory_space<vmem>>, vector<8x8x384xf32>,
    %c0_9 = arith.constant 0 : index
    %c0_10 = arith.constant 0 : index
    %11 = vector.load %arg5[%c0_9, %c0_10] : memref<1x384xf32, #tpu.memory_space<vmem>>, vector<1x384xf32>
    %cst_11 = arith.constant 0.000000e+00 : f32
    %12 = vector.broadcast %cst_11 : f32 to vector<8x128xf32>
    %c0_i32 = arith.constant 0 : i32
    %13 = arith.index_cast %c0_i32 : i32 to index
    %c0_12 = arith.constant 0 : index
    %c0_13 = arith.constant 0 : index
    %14 = vector.load %arg21[%13, %c0_12, %c0_13] : memref<8x8x384xf32, #tpu.memory_space<vmem>>, vector<1x8x384xf32>
    %15 = vector.shape_cast %14 : vector<1x8x384xf32> to vector<8x384xf32>
    %16 = arith.truncf %12 : vector<8x128xf32> to vector<8x128xbf16>
    %c0_14 = arith.constant 0 : index
    %c0_15 = arith.constant 0 : index
    %17 = vector.load %arg3[%c0_14, %c0_15] : memref<128x384xbf16, #tpu.memory_space<vmem>>, vector<128x384xbf16>
    %cst_16 = arith.constant dense<0.000000e+00> : vector<8x384xf32>
    %18 = tpu.matmul %16, %17, %cst_16 {dimension_numbers = #tpu.dot_dimension_numbers<[1], [0], [0], [1], [0, 0, 1, 1], [], []>} : vector<8x128xbf16>, vector<128x384xbf16>, vector<8x384xf32> -> vector<8x384xf32>
    %19 = vector.broadcast %11 : vector<1x384xf32> to vector<8x384xf32>
    %20 = arith.addf %18, %19 : vector<8x384xf32>
    %21 = vector.extract_strided_slice %15 {offsets = [0, 0], sizes = [8, 128], strides = [1, 1]} : vector<8x384xf32> to vector<8x128xf32>
    %22 = vector.extract_strided_slice %20 {offsets = [0, 0], sizes = [8, 128], strides = [1, 1]} : vector<8x384xf32> to vector<8x128xf32>
    %23 = arith.addf %21, %22 : vector<8x128xf32>
    %24 = arith.negf %23 : vector<8x128xf32>
    %25 = math.exp %24 : vector<8x128xf32>
    %cst_17 = arith.constant 1.000000e+00 : f32
    %26 = vector.broadcast %cst_17 : f32 to vector<8x128xf32>
    %27 = arith.addf %26, %25 : vector<8x128xf32>
    %28 = arith.divf %26, %27 : vector<8x128xf32>
    %29 = vector.extract_strided_slice %15 {offsets = [0, 128], sizes = [8, 128], strides = [1, 1]} : vector<8x384xf32> to vector<8x128xf32>
    %30 = vector.extract_strided_slice %20 {offsets = [0, 128], sizes = [8, 128], strides = [1, 1]} : vector<8x384xf32> to vector<8x128xf32>
    %31 = arith.addf %29, %30 : vector<8x128xf32>
    %32 = arith.negf %31 : vector<8x128xf32>
    %33 = math.exp %32 : vector<8x128xf32>
    %cst_18 = arith.constant 1.000000e+00 : f32
    %34 = vector.broadcast %cst_18 : f32 to vector<8x128xf32>
    %35 = arith.addf %34, %33 : vector<8x128xf32>
    %36 = arith.divf %34, %35 : vector<8x128xf32>
    %37 = vector.extract_strided_slice %15 {offsets = [0, 256], sizes = [8, 128], strides = [1, 1]} : vector<8x384xf32> to vector<8x128xf32>
    %38 = vector.extract_strided_slice %20 {offsets = [0, 256], sizes = [8, 128], strides = [1, 1]} : vector<8x384xf32> to vector<8x128xf32>
    %39 = arith.mulf %28, %38 : vector<8x128xf32>
    %40 = arith.addf %37, %39 : vector<8x128xf32>
    %41 = math.tanh %40 : vector<8x128xf32>
    %cst_19 = arith.constant 1.000000e+00 : f32
    %42 = vector.broadcast %cst_19 : f32 to vector<8x128xf32>
    %43 = arith.subf %42, %36 : vector<8x128xf32>
    %44 = arith.mulf %43, %41 : vector<8x128xf32>
    %45 = arith.mulf %36, %12 : vector<8x128xf32>
    %46 = arith.addf %44, %45 : vector<8x128xf32>
    %47 = arith.index_cast %c0_i32 : i32 to index
    %c0_20 = arith.constant 0 : index
    %c0_21 = arith.constant 0 : index
    %48 = vector.load %arg22[%47, %c0_20, %c0_21] : memref<8x8x128xf32, #tpu.memory_space<vmem>>, vector<1x8x128xf32>
    %49 = vector.shape_cast %48 : vector<1x8x128xf32> to vector<8x128xf32>
    %50 = vector.shape_cast %46 : vector<8x128xf32> to vector<1x8x128xf32>
    tpu.vector_store %arg22[%47, %c0_20, %c0_21], %50 {strides = array<i32>} : memref<8x8x128xf32, #tpu.memory_space<vmem>>, vector<1x8x128xf32>,
    %c1_i32 = arith.constant 1 : i32
    %51 = arith.index_cast %c1_i32 : i32 to index
    %c0_22 = arith.constant 0 : index
    %c0_23 = arith.constant 0 : index
    %52 = vector.load %arg21[%51, %c0_22, %c0_23] : memref<8x8x384xf32, #tpu.memory_space<vmem>>, vector<1x8x384xf32>
    %53 = vector.shape_cast %52 : vector<1x8x384xf32> to vector<8x384xf32>
    %54 = arith.truncf %46 : vector<8x128xf32> to vector<8x128xbf16>
    %c0_24 = arith.constant 0 : index
    %c0_25 = arith.constant 0 : index
    %55 = vector.load %arg3[%c0_24, %c0_25] : memref<128x384xbf16, #tpu.memory_space<vmem>>, vector<128x384xbf16>
    %cst_26 = arith.constant dense<0.000000e+00> : vector<8x384xf32>
    %56 = tpu.matmul %54, %55, %cst_26 {dimension_numbers = #tpu.dot_dimension_numbers<[1], [0], [0], [1], [0, 0, 1, 1], [], []>} : vector<8x128xbf16>, vector<128x384xbf16>, vector<8x384xf32> -> vector<8x384xf32>
    %57 = vector.broadcast %11 : vector<1x384xf32> to vector<8x384xf32>
    %58 = arith.addf %56, %57 : vector<8x384xf32>
    %59 = vector.extract_strided_slice %53 {offsets = [0, 0], sizes = [8, 128], strides = [1, 1]} : vector<8x384xf32> to vector<8x128xf32>
    %60 = vector.extract_strided_slice %58 {offsets = [0, 0], sizes = [8, 128], strides = [1, 1]} : vector<8x384xf32> to vector<8x128xf32>
    %61 = arith.addf %59, %60 : vector<8x128xf32>
    %62 = arith.negf %61 : vector<8x128xf32>
    %63 = math.exp %62 : vector<8x128xf32>
    %cst_27 = arith.constant 1.000000e+00 : f32
    %64 = vector.broadcast %cst_27 : f32 to vector<8x128xf32>
    %65 = arith.addf %64, %63 : vector<8x128xf32>
    %66 = arith.divf %64, %65 : vector<8x128xf32>
    %67 = vector.extract_strided_slice %53 {offsets = [0, 128], sizes = [8, 128], strides = [1, 1]} : vector<8x384xf32> to vector<8x128xf32>
    %68 = vector.extract_strided_slice %58 {offsets = [0, 128], sizes = [8, 128], strides = [1, 1]} : vector<8x384xf32> to vector<8x128xf32>
    %69 = arith.addf %67, %68 : vector<8x128xf32>
    %70 = arith.negf %69 : vector<8x128xf32>
    %71 = math.exp %70 : vector<8x128xf32>
    %cst_28 = arith.constant 1.000000e+00 : f32
    %72 = vector.broadcast %cst_28 : f32 to vector<8x128xf32>
    %73 = arith.addf %72, %71 : vector<8x128xf32>
    %74 = arith.divf %72, %73 : vector<8x128xf32>
    %75 = vector.extract_strided_slice %53 {offsets = [0, 256], sizes = [8, 128], strides = [1, 1]} : vector<8x384xf32> to vector<8x128xf32>
    %76 = vector.extract_strided_slice %58 {offsets = [0, 256], sizes = [8, 128], strides = [1, 1]} : vector<8x384xf32> to vector<8x128xf32>
    %77 = arith.mulf %66, %76 : vector<8x128xf32>
    %78 = arith.addf %75, %77 : vector<8x128xf32>
    %79 = math.tanh %78 : vector<8x128xf32>
    %cst_29 = arith.constant 1.000000e+00 : f32
    %80 = vector.broadcast %cst_29 : f32 to vector<8x128xf32>
    %81 = arith.subf %80, %74 : vector<8x128xf32>
    %82 = arith.mulf %81, %79 : vector<8x128xf32>
    %83 = arith.mulf %74, %46 : vector<8x128xf32>
    %84 = arith.addf %82, %83 : vector<8x128xf32>
    %85 = arith.index_cast %c1_i32 : i32 to index
    %c0_30 = arith.constant 0 : index
    %c0_31 = arith.constant 0 : index
    %86 = vector.load %arg22[%85, %c0_30, %c0_31] : memref<8x8x128xf32, #tpu.memory_space<vmem>>, vector<1x8x128xf32>
    %87 = vector.shape_cast %86 : vector<1x8x128xf32> to vector<8x128xf32>
    %88 = vector.shape_cast %84 : vector<8x128xf32> to vector<1x8x128xf32>
    tpu.vector_store %arg22[%85, %c0_30, %c0_31], %88 {strides = array<i32>} : memref<8x8x128xf32, #tpu.memory_space<vmem>>, vector<1x8x128xf32>,
    %c2_i32 = arith.constant 2 : i32
    %89 = arith.index_cast %c2_i32 : i32 to index
    %c0_32 = arith.constant 0 : index
    %c0_33 = arith.constant 0 : index
    %90 = vector.load %arg21[%89, %c0_32, %c0_33] : memref<8x8x384xf32, #tpu.memory_space<vmem>>, vector<1x8x384xf32>
    %91 = vector.shape_cast %90 : vector<1x8x384xf32> to vector<8x384xf32>
    %92 = arith.truncf %84 : vector<8x128xf32> to vector<8x128xbf16>
    %c0_34 = arith.constant 0 : index
    %c0_35 = arith.constant 0 : index
    %93 = vector.load %arg3[%c0_34, %c0_35] : memref<128x384xbf16, #tpu.memory_space<vmem>>, vector<128x384xbf16>
    %cst_36 = arith.constant dense<0.000000e+00> : vector<8x384xf32>
    %94 = tpu.matmul %92, %93, %cst_36 {dimension_numbers = #tpu.dot_dimension_numbers<[1], [0], [0], [1], [0, 0, 1, 1], [], []>} : vector<8x128xbf16>, vector<128x384xbf16>, vector<8x384xf32> -> vector<8x384xf32>
    %95 = vector.broadcast %11 : vector<1x384xf32> to vector<8x384xf32>
    %96 = arith.addf %94, %95 : vector<8x384xf32>
    %97 = vector.extract_strided_slice %91 {offsets = [0, 0], sizes = [8, 128], strides = [1, 1]} : vector<8x384xf32> to vector<8x128xf32>
    %98 = vector.extract_strided_slice %96 {offsets = [0, 0], sizes = [8, 128], strides = [1, 1]} : vector<8x384xf32> to vector<8x128xf32>
    %99 = arith.addf %97, %98 : vector<8x128xf32>
    %100 = arith.negf %99 : vector<8x128xf32>
    %101 = math.exp %100 : vector<8x128xf32>
    %cst_37 = arith.constant 1.000000e+00 : f32
    %102 = vector.broadcast %cst_37 : f32 to vector<8x128xf32>
    %103 = arith.addf %102, %101 : vector<8x128xf32>
    %104 = arith.divf %102, %103 : vector<8x128xf32>
    %105 = vector.extract_strided_slice %91 {offsets = [0, 128], sizes = [8, 128], strides = [1, 1]} : vector<8x384xf32> to vector<8x128xf32>
    %106 = vector.extract_strided_slice %96 {offsets = [0, 128], sizes = [8, 128], strides = [1, 1]} : vector<8x384xf32> to vector<8x128xf32>
    %107 = arith.addf %105, %106 : vector<8x128xf32>
    %108 = arith.negf %107 : vector<8x128xf32>
    %109 = math.exp %108 : vector<8x128xf32>
    %cst_38 = arith.constant 1.000000e+00 : f32
    %110 = vector.broadcast %cst_38 : f32 to vector<8x128xf32>
    %111 = arith.addf %110, %109 : vector<8x128xf32>
    %112 = arith.divf %110, %111 : vector<8x128xf32>
    %113 = vector.extract_strided_slice %91 {offsets = [0, 256], sizes = [8, 128], strides = [1, 1]} : vector<8x384xf32> to vector<8x128xf32>
    %114 = vector.extract_strided_slice %96 {offsets = [0, 256], sizes = [8, 128], strides = [1, 1]} : vector<8x384xf32> to vector<8x128xf32>
    %115 = arith.mulf %104, %114 : vector<8x128xf32>
    %116 = arith.addf %113, %115 : vector<8x128xf32>
    %117 = math.tanh %116 : vector<8x128xf32>
    %cst_39 = arith.constant 1.000000e+00 : f32
    %118 = vector.broadcast %cst_39 : f32 to vector<8x128xf32>
    %119 = arith.subf %118, %112 : vector<8x128xf32>
    %120 = arith.mulf %119, %117 : vector<8x128xf32>
    %121 = arith.mulf %112, %84 : vector<8x128xf32>
    %122 = arith.addf %120, %121 : vector<8x128xf32>
    %123 = arith.index_cast %c2_i32 : i32 to index
    %c0_40 = arith.constant 0 : index
    %c0_41 = arith.constant 0 : index
    %124 = vector.load %arg22[%123, %c0_40, %c0_41] : memref<8x8x128xf32, #tpu.memory_space<vmem>>, vector<1x8x128xf32>
    %125 = vector.shape_cast %124 : vector<1x8x128xf32> to vector<8x128xf32>
    %126 = vector.shape_cast %122 : vector<8x128xf32> to vector<1x8x128xf32>
    tpu.vector_store %arg22[%123, %c0_40, %c0_41], %126 {strides = array<i32>} : memref<8x8x128xf32, #tpu.memory_space<vmem>>, vector<1x8x128xf32>,
    %c3_i32 = arith.constant 3 : i32
    %127 = arith.index_cast %c3_i32 : i32 to index
    %c0_42 = arith.constant 0 : index
    %c0_43 = arith.constant 0 : index
    %128 = vector.load %arg21[%127, %c0_42, %c0_43] : memref<8x8x384xf32, #tpu.memory_space<vmem>>, vector<1x8x384xf32>
    %129 = vector.shape_cast %128 : vector<1x8x384xf32> to vector<8x384xf32>
    %130 = arith.truncf %122 : vector<8x128xf32> to vector<8x128xbf16>
    %c0_44 = arith.constant 0 : index
    %c0_45 = arith.constant 0 : index
    %131 = vector.load %arg3[%c0_44, %c0_45] : memref<128x384xbf16, #tpu.memory_space<vmem>>, vector<128x384xbf16>
    %cst_46 = arith.constant dense<0.000000e+00> : vector<8x384xf32>
    %132 = tpu.matmul %130, %131, %cst_46 {dimension_numbers = #tpu.dot_dimension_numbers<[1], [0], [0], [1], [0, 0, 1, 1], [], []>} : vector<8x128xbf16>, vector<128x384xbf16>, vector<8x384xf32> -> vector<8x384xf32>
    %133 = vector.broadcast %11 : vector<1x384xf32> to vector<8x384xf32>
    %134 = arith.addf %132, %133 : vector<8x384xf32>
    %135 = vector.extract_strided_slice %129 {offsets = [0, 0], sizes = [8, 128], strides = [1, 1]} : vector<8x384xf32> to vector<8x128xf32>
    %136 = vector.extract_strided_slice %134 {offsets = [0, 0], sizes = [8, 128], strides = [1, 1]} : vector<8x384xf32> to vector<8x128xf32>
    %137 = arith.addf %135, %136 : vector<8x128xf32>
    %138 = arith.negf %137 : vector<8x128xf32>
    %139 = math.exp %138 : vector<8x128xf32>
    %cst_47 = arith.constant 1.000000e+00 : f32
    %140 = vector.broadcast %cst_47 : f32 to vector<8x128xf32>
    %141 = arith.addf %140, %139 : vector<8x128xf32>
    %142 = arith.divf %140, %141 : vector<8x128xf32>
    %143 = vector.extract_strided_slice %129 {offsets = [0, 128], sizes = [8, 128], strides = [1, 1]} : vector<8x384xf32> to vector<8x128xf32>
    %144 = vector.extract_strided_slice %134 {offsets = [0, 128], sizes = [8, 128], strides = [1, 1]} : vector<8x384xf32> to vector<8x128xf32>
    %145 = arith.addf %143, %144 : vector<8x128xf32>
    %146 = arith.negf %145 : vector<8x128xf32>
    %147 = math.exp %146 : vector<8x128xf32>
    %cst_48 = arith.constant 1.000000e+00 : f32
    %148 = vector.broadcast %cst_48 : f32 to vector<8x128xf32>
    %149 = arith.addf %148, %147 : vector<8x128xf32>
    %150 = arith.divf %148, %149 : vector<8x128xf32>
    %151 = vector.extract_strided_slice %129 {offsets = [0, 256], sizes = [8, 128], strides = [1, 1]} : vector<8x384xf32> to vector<8x128xf32>
    %152 = vector.extract_strided_slice %134 {offsets = [0, 256], sizes = [8, 128], strides = [1, 1]} : vector<8x384xf32> to vector<8x128xf32>
    %153 = arith.mulf %142, %152 : vector<8x128xf32>
    %154 = arith.addf %151, %153 : vector<8x128xf32>
    %155 = math.tanh %154 : vector<8x128xf32>
    %cst_49 = arith.constant 1.000000e+00 : f32
    %156 = vector.broadcast %cst_49 : f32 to vector<8x128xf32>
    %157 = arith.subf %156, %150 : vector<8x128xf32>
    %158 = arith.mulf %157, %155 : vector<8x128xf32>
    %159 = arith.mulf %150, %122 : vector<8x128xf32>
    %160 = arith.addf %158, %159 : vector<8x128xf32>
    %161 = arith.index_cast %c3_i32 : i32 to index
    %c0_50 = arith.constant 0 : index
    %c0_51 = arith.constant 0 : index
    %162 = vector.load %arg22[%161, %c0_50, %c0_51] : memref<8x8x128xf32, #tpu.memory_space<vmem>>, vector<1x8x128xf32>
    %163 = vector.shape_cast %162 : vector<1x8x128xf32> to vector<8x128xf32>
    %164 = vector.shape_cast %160 : vector<8x128xf32> to vector<1x8x128xf32>
    tpu.vector_store %arg22[%161, %c0_50, %c0_51], %164 {strides = array<i32>} : memref<8x8x128xf32, #tpu.memory_space<vmem>>, vector<1x8x128xf32>,
    %c4_i32 = arith.constant 4 : i32
    %165 = arith.index_cast %c4_i32 : i32 to index
    %c0_52 = arith.constant 0 : index
    %c0_53 = arith.constant 0 : index
    %166 = vector.load %arg21[%165, %c0_52, %c0_53] : memref<8x8x384xf32, #tpu.memory_space<vmem>>, vector<1x8x384xf32>
    %167 = vector.shape_cast %166 : vector<1x8x384xf32> to vector<8x384xf32>
    %168 = arith.truncf %160 : vector<8x128xf32> to vector<8x128xbf16>
    %c0_54 = arith.constant 0 : index
    %c0_55 = arith.constant 0 : index
    %169 = vector.load %arg3[%c0_54, %c0_55] : memref<128x384xbf16, #tpu.memory_space<vmem>>, vector<128x384xbf16>
    %cst_56 = arith.constant dense<0.000000e+00> : vector<8x384xf32>
    %170 = tpu.matmul %168, %169, %cst_56 {dimension_numbers = #tpu.dot_dimension_numbers<[1], [0], [0], [1], [0, 0, 1, 1], [], []>} : vector<8x128xbf16>, vector<128x384xbf16>, vector<8x384xf32> -> vector<8x384xf32>
    %171 = vector.broadcast %11 : vector<1x384xf32> to vector<8x384xf32>
    %172 = arith.addf %170, %171 : vector<8x384xf32>
    %173 = vector.extract_strided_slice %167 {offsets = [0, 0], sizes = [8, 128], strides = [1, 1]} : vector<8x384xf32> to vector<8x128xf32>
    %174 = vector.extract_strided_slice %172 {offsets = [0, 0], sizes = [8, 128], strides = [1, 1]} : vector<8x384xf32> to vector<8x128xf32>
    %175 = arith.addf %173, %174 : vector<8x128xf32>
    %176 = arith.negf %175 : vector<8x128xf32>
    %177 = math.exp %176 : vector<8x128xf32>
    %cst_57 = arith.constant 1.000000e+00 : f32
    %178 = vector.broadcast %cst_57 : f32 to vector<8x128xf32>
    %179 = arith.addf %178, %177 : vector<8x128xf32>
    %180 = arith.divf %178, %179 : vector<8x128xf32>
    %181 = vector.extract_strided_slice %167 {offsets = [0, 128], sizes = [8, 128], strides = [1, 1]} : vector<8x384xf32> to vector<8x128xf32>
    %182 = vector.extract_strided_slice %172 {offsets = [0, 128], sizes = [8, 128], strides = [1, 1]} : vector<8x384xf32> to vector<8x128xf32>
    %183 = arith.addf %181, %182 : vector<8x128xf32>
    %184 = arith.negf %183 : vector<8x128xf32>
    %185 = math.exp %184 : vector<8x128xf32>
    %cst_58 = arith.constant 1.000000e+00 : f32
    %186 = vector.broadcast %cst_58 : f32 to vector<8x128xf32>
    %187 = arith.addf %186, %185 : vector<8x128xf32>
    %188 = arith.divf %186, %187 : vector<8x128xf32>
    %189 = vector.extract_strided_slice %167 {offsets = [0, 256], sizes = [8, 128], strides = [1, 1]} : vector<8x384xf32> to vector<8x128xf32>
    %190 = vector.extract_strided_slice %172 {offsets = [0, 256], sizes = [8, 128], strides = [1, 1]} : vector<8x384xf32> to vector<8x128xf32>
    %191 = arith.mulf %180, %190 : vector<8x128xf32>
    %192 = arith.addf %189, %191 : vector<8x128xf32>
    %193 = math.tanh %192 : vector<8x128xf32>
    %cst_59 = arith.constant 1.000000e+00 : f32
    %194 = vector.broadcast %cst_59 : f32 to vector<8x128xf32>
    %195 = arith.subf %194, %188 : vector<8x128xf32>
    %196 = arith.mulf %195, %193 : vector<8x128xf32>
    %197 = arith.mulf %188, %160 : vector<8x128xf32>
    %198 = arith.addf %196, %197 : vector<8x128xf32>
    %199 = arith.index_cast %c4_i32 : i32 to index
    %c0_60 = arith.constant 0 : index
    %c0_61 = arith.constant 0 : index
    %200 = vector.load %arg22[%199, %c0_60, %c0_61] : memref<8x8x128xf32, #tpu.memory_space<vmem>>, vector<1x8x128xf32>
    %201 = vector.shape_cast %200 : vector<1x8x128xf32> to vector<8x128xf32>
    %202 = vector.shape_cast %198 : vector<8x128xf32> to vector<1x8x128xf32>
    tpu.vector_store %arg22[%199, %c0_60, %c0_61], %202 {strides = array<i32>} : memref<8x8x128xf32, #tpu.memory_space<vmem>>, vector<1x8x128xf32>,
    %c5_i32 = arith.constant 5 : i32
    %203 = arith.index_cast %c5_i32 : i32 to index
    %c0_62 = arith.constant 0 : index
    %c0_63 = arith.constant 0 : index
    %204 = vector.load %arg21[%203, %c0_62, %c0_63] : memref<8x8x384xf32, #tpu.memory_space<vmem>>, vector<1x8x384xf32>
    %205 = vector.shape_cast %204 : vector<1x8x384xf32> to vector<8x384xf32>
    %206 = arith.truncf %198 : vector<8x128xf32> to vector<8x128xbf16>
    %c0_64 = arith.constant 0 : index
    %c0_65 = arith.constant 0 : index
    %207 = vector.load %arg3[%c0_64, %c0_65] : memref<128x384xbf16, #tpu.memory_space<vmem>>, vector<128x384xbf16>
    %cst_66 = arith.constant dense<0.000000e+00> : vector<8x384xf32>
    %208 = tpu.matmul %206, %207, %cst_66 {dimension_numbers = #tpu.dot_dimension_numbers<[1], [0], [0], [1], [0, 0, 1, 1], [], []>} : vector<8x128xbf16>, vector<128x384xbf16>, vector<8x384xf32> -> vector<8x384xf32>
    %209 = vector.broadcast %11 : vector<1x384xf32> to vector<8x384xf32>
    %210 = arith.addf %208, %209 : vector<8x384xf32>
    %211 = vector.extract_strided_slice %205 {offsets = [0, 0], sizes = [8, 128], strides = [1, 1]} : vector<8x384xf32> to vector<8x128xf32>
    %212 = vector.extract_strided_slice %210 {offsets = [0, 0], sizes = [8, 128], strides = [1, 1]} : vector<8x384xf32> to vector<8x128xf32>
    %213 = arith.addf %211, %212 : vector<8x128xf32>
    %214 = arith.negf %213 : vector<8x128xf32>
    %215 = math.exp %214 : vector<8x128xf32>
    %cst_67 = arith.constant 1.000000e+00 : f32
    %216 = vector.broadcast %cst_67 : f32 to vector<8x128xf32>
    %217 = arith.addf %216, %215 : vector<8x128xf32>
    %218 = arith.divf %216, %217 : vector<8x128xf32>
    %219 = vector.extract_strided_slice %205 {offsets = [0, 128], sizes = [8, 128], strides = [1, 1]} : vector<8x384xf32> to vector<8x128xf32>
    %220 = vector.extract_strided_slice %210 {offsets = [0, 128], sizes = [8, 128], strides = [1, 1]} : vector<8x384xf32> to vector<8x128xf32>
    %221 = arith.addf %219, %220 : vector<8x128xf32>
    %222 = arith.negf %221 : vector<8x128xf32>
    %223 = math.exp %222 : vector<8x128xf32>
    %cst_68 = arith.constant 1.000000e+00 : f32
    %224 = vector.broadcast %cst_68 : f32 to vector<8x128xf32>
    %225 = arith.addf %224, %223 : vector<8x128xf32>
    %226 = arith.divf %224, %225 : vector<8x128xf32>
    %227 = vector.extract_strided_slice %205 {offsets = [0, 256], sizes = [8, 128], strides = [1, 1]} : vector<8x384xf32> to vector<8x128xf32>
    %228 = vector.extract_strided_slice %210 {offsets = [0, 256], sizes = [8, 128], strides = [1, 1]} : vector<8x384xf32> to vector<8x128xf32>
    %229 = arith.mulf %218, %228 : vector<8x128xf32>
    %230 = arith.addf %227, %229 : vector<8x128xf32>
    %231 = math.tanh %230 : vector<8x128xf32>
    %cst_69 = arith.constant 1.000000e+00 : f32
    %232 = vector.broadcast %cst_69 : f32 to vector<8x128xf32>
    %233 = arith.subf %232, %226 : vector<8x128xf32>
    %234 = arith.mulf %233, %231 : vector<8x128xf32>
    %235 = arith.mulf %226, %198 : vector<8x128xf32>
    %236 = arith.addf %234, %235 : vector<8x128xf32>
    %237 = arith.index_cast %c5_i32 : i32 to index
    %c0_70 = arith.constant 0 : index
    %c0_71 = arith.constant 0 : index
    %238 = vector.load %arg22[%237, %c0_70, %c0_71] : memref<8x8x128xf32, #tpu.memory_space<vmem>>, vector<1x8x128xf32>
    %239 = vector.shape_cast %238 : vector<1x8x128xf32> to vector<8x128xf32>
    %240 = vector.shape_cast %236 : vector<8x128xf32> to vector<1x8x128xf32>
    tpu.vector_store %arg22[%237, %c0_70, %c0_71], %240 {strides = array<i32>} : memref<8x8x128xf32, #tpu.memory_space<vmem>>, vector<1x8x128xf32>,
    %c6_i32 = arith.constant 6 : i32
    %241 = arith.index_cast %c6_i32 : i32 to index
    %c0_72 = arith.constant 0 : index
    %c0_73 = arith.constant 0 : index
    %242 = vector.load %arg21[%241, %c0_72, %c0_73] : memref<8x8x384xf32, #tpu.memory_space<vmem>>, vector<1x8x384xf32>
    %243 = vector.shape_cast %242 : vector<1x8x384xf32> to vector<8x384xf32>
    %244 = arith.truncf %236 : vector<8x128xf32> to vector<8x128xbf16>
    %c0_74 = arith.constant 0 : index
    %c0_75 = arith.constant 0 : index
    %245 = vector.load %arg3[%c0_74, %c0_75] : memref<128x384xbf16, #tpu.memory_space<vmem>>, vector<128x384xbf16>
    %cst_76 = arith.constant dense<0.000000e+00> : vector<8x384xf32>
    %246 = tpu.matmul %244, %245, %cst_76 {dimension_numbers = #tpu.dot_dimension_numbers<[1], [0], [0], [1], [0, 0, 1, 1], [], []>} : vector<8x128xbf16>, vector<128x384xbf16>, vector<8x384xf32> -> vector<8x384xf32>
    %247 = vector.broadcast %11 : vector<1x384xf32> to vector<8x384xf32>
    %248 = arith.addf %246, %247 : vector<8x384xf32>
    %249 = vector.extract_strided_slice %243 {offsets = [0, 0], sizes = [8, 128], strides = [1, 1]} : vector<8x384xf32> to vector<8x128xf32>
    %250 = vector.extract_strided_slice %248 {offsets = [0, 0], sizes = [8, 128], strides = [1, 1]} : vector<8x384xf32> to vector<8x128xf32>
    %251 = arith.addf %249, %250 : vector<8x128xf32>
    %252 = arith.negf %251 : vector<8x128xf32>
    %253 = math.exp %252 : vector<8x128xf32>
    %cst_77 = arith.constant 1.000000e+00 : f32
    %254 = vector.broadcast %cst_77 : f32 to vector<8x128xf32>
    %255 = arith.addf %254, %253 : vector<8x128xf32>
    %256 = arith.divf %254, %255 : vector<8x128xf32>
    %257 = vector.extract_strided_slice %243 {offsets = [0, 128], sizes = [8, 128], strides = [1, 1]} : vector<8x384xf32> to vector<8x128xf32>
    %258 = vector.extract_strided_slice %248 {offsets = [0, 128], sizes = [8, 128], strides = [1, 1]} : vector<8x384xf32> to vector<8x128xf32>
    %259 = arith.addf %257, %258 : vector<8x128xf32>
    %260 = arith.negf %259 : vector<8x128xf32>
    %261 = math.exp %260 : vector<8x128xf32>
    %cst_78 = arith.constant 1.000000e+00 : f32
    %262 = vector.broadcast %cst_78 : f32 to vector<8x128xf32>
    %263 = arith.addf %262, %261 : vector<8x128xf32>
    %264 = arith.divf %262, %263 : vector<8x128xf32>
    %265 = vector.extract_strided_slice %243 {offsets = [0, 256], sizes = [8, 128], strides = [1, 1]} : vector<8x384xf32> to vector<8x128xf32>
    %266 = vector.extract_strided_slice %248 {offsets = [0, 256], sizes = [8, 128], strides = [1, 1]} : vector<8x384xf32> to vector<8x128xf32>
    %267 = arith.mulf %256, %266 : vector<8x128xf32>
    %268 = arith.addf %265, %267 : vector<8x128xf32>
    %269 = math.tanh %268 : vector<8x128xf32>
    %cst_79 = arith.constant 1.000000e+00 : f32
    %270 = vector.broadcast %cst_79 : f32 to vector<8x128xf32>
    %271 = arith.subf %270, %264 : vector<8x128xf32>
    %272 = arith.mulf %271, %269 : vector<8x128xf32>
    %273 = arith.mulf %264, %236 : vector<8x128xf32>
    %274 = arith.addf %272, %273 : vector<8x128xf32>
    %275 = arith.index_cast %c6_i32 : i32 to index
    %c0_80 = arith.constant 0 : index
    %c0_81 = arith.constant 0 : index
    %276 = vector.load %arg22[%275, %c0_80, %c0_81] : memref<8x8x128xf32, #tpu.memory_space<vmem>>, vector<1x8x128xf32>
    %277 = vector.shape_cast %276 : vector<1x8x128xf32> to vector<8x128xf32>
    %278 = vector.shape_cast %274 : vector<8x128xf32> to vector<1x8x128xf32>
    tpu.vector_store %arg22[%275, %c0_80, %c0_81], %278 {strides = array<i32>} : memref<8x8x128xf32, #tpu.memory_space<vmem>>, vector<1x8x128xf32>,
    %c7_i32 = arith.constant 7 : i32
    %279 = arith.index_cast %c7_i32 : i32 to index
    %c0_82 = arith.constant 0 : index
    %c0_83 = arith.constant 0 : index
    %280 = vector.load %arg21[%279, %c0_82, %c0_83] : memref<8x8x384xf32, #tpu.memory_space<vmem>>, vector<1x8x384xf32>
    %281 = vector.shape_cast %280 : vector<1x8x384xf32> to vector<8x384xf32>
    %282 = arith.truncf %274 : vector<8x128xf32> to vector<8x128xbf16>
    %c0_84 = arith.constant 0 : index
    %c0_85 = arith.constant 0 : index
    %283 = vector.load %arg3[%c0_84, %c0_85] : memref<128x384xbf16, #tpu.memory_space<vmem>>, vector<128x384xbf16>
    %cst_86 = arith.constant dense<0.000000e+00> : vector<8x384xf32>
    %284 = tpu.matmul %282, %283, %cst_86 {dimension_numbers = #tpu.dot_dimension_numbers<[1], [0], [0], [1], [0, 0, 1, 1], [], []>} : vector<8x128xbf16>, vector<128x384xbf16>, vector<8x384xf32> -> vector<8x384xf32>
    %285 = vector.broadcast %11 : vector<1x384xf32> to vector<8x384xf32>
    %286 = arith.addf %284, %285 : vector<8x384xf32>
    %287 = vector.extract_strided_slice %281 {offsets = [0, 0], sizes = [8, 128], strides = [1, 1]} : vector<8x384xf32> to vector<8x128xf32>
    %288 = vector.extract_strided_slice %286 {offsets = [0, 0], sizes = [8, 128], strides = [1, 1]} : vector<8x384xf32> to vector<8x128xf32>
    %289 = arith.addf %287, %288 : vector<8x128xf32>
    %290 = arith.negf %289 : vector<8x128xf32>
    %291 = math.exp %290 : vector<8x128xf32>
    %cst_87 = arith.constant 1.000000e+00 : f32
    %292 = vector.broadcast %cst_87 : f32 to vector<8x128xf32>
    %293 = arith.addf %292, %291 : vector<8x128xf32>
    %294 = arith.divf %292, %293 : vector<8x128xf32>
    %295 = vector.extract_strided_slice %281 {offsets = [0, 128], sizes = [8, 128], strides = [1, 1]} : vector<8x384xf32> to vector<8x128xf32>
    %296 = vector.extract_strided_slice %286 {offsets = [0, 128], sizes = [8, 128], strides = [1, 1]} : vector<8x384xf32> to vector<8x128xf32>
    %297 = arith.addf %295, %296 : vector<8x128xf32>
    %298 = arith.negf %297 : vector<8x128xf32>
    %299 = math.exp %298 : vector<8x128xf32>
    %cst_88 = arith.constant 1.000000e+00 : f32
    %300 = vector.broadcast %cst_88 : f32 to vector<8x128xf32>
    %301 = arith.addf %300, %299 : vector<8x128xf32>
    %302 = arith.divf %300, %301 : vector<8x128xf32>
    %303 = vector.extract_strided_slice %281 {offsets = [0, 256], sizes = [8, 128], strides = [1, 1]} : vector<8x384xf32> to vector<8x128xf32>
    %304 = vector.extract_strided_slice %286 {offsets = [0, 256], sizes = [8, 128], strides = [1, 1]} : vector<8x384xf32> to vector<8x128xf32>
    %305 = arith.mulf %294, %304 : vector<8x128xf32>
    %306 = arith.addf %303, %305 : vector<8x128xf32>
    %307 = math.tanh %306 : vector<8x128xf32>
    %cst_89 = arith.constant 1.000000e+00 : f32
    %308 = vector.broadcast %cst_89 : f32 to vector<8x128xf32>
    %309 = arith.subf %308, %302 : vector<8x128xf32>
    %310 = arith.mulf %309, %307 : vector<8x128xf32>
    %311 = arith.mulf %302, %274 : vector<8x128xf32>
    %312 = arith.addf %310, %311 : vector<8x128xf32>
    %313 = arith.index_cast %c7_i32 : i32 to index
    %c0_90 = arith.constant 0 : index
    %c0_91 = arith.constant 0 : index
    %314 = vector.load %arg22[%313, %c0_90, %c0_91] : memref<8x8x128xf32, #tpu.memory_space<vmem>>, vector<1x8x128xf32>
    %315 = vector.shape_cast %314 : vector<1x8x128xf32> to vector<8x128xf32>
    %316 = vector.shape_cast %312 : vector<8x128xf32> to vector<1x8x128xf32>
    tpu.vector_store %arg22[%313, %c0_90, %c0_91], %316 {strides = array<i32>} : memref<8x8x128xf32, #tpu.memory_space<vmem>>, vector<1x8x128xf32>,
    %c8_i32 = arith.constant 8 : i32
    %c0_92 = arith.constant 0 : index
    %c0_93 = arith.constant 0 : index
    %317 = vector.load %arg1[%c0_92, %c0_93] : memref<8x128xf32, #tpu.memory_space<vmem>>, vector<8x128xf32>
    %318 = arith.truncf %317 : vector<8x128xf32> to vector<8x128xbf16>
    %c0_94 = arith.constant 0 : index
    %c0_95 = arith.constant 0 : index
    %319 = vector.load %arg6[%c0_94, %c0_95] : memref<128x128xbf16, #tpu.memory_space<vmem>>, vector<128x128xbf16>
    %cst_96 = arith.constant dense<0.000000e+00> : vector<8x128xf32>
    %320 = tpu.matmul %318, %319, %cst_96 {dimension_numbers = #tpu.dot_dimension_numbers<[1], [0], [0], [1], [0, 0, 1, 1], [], []>} : vector<8x128xbf16>, vector<128x128xbf16>, vector<8x128xf32> -> vector<8x128xf32>
    %c0_97 = arith.constant 0 : index
    %c0_98 = arith.constant 0 : index
    %321 = vector.load %arg7[%c0_97, %c0_98] : memref<1x128xf32, #tpu.memory_space<vmem>>, vector<1x128xf32>
    %322 = vector.broadcast %321 : vector<1x128xf32> to vector<8x128xf32>
    %323 = arith.addf %320, %322 : vector<8x128xf32>
    %324 = arith.truncf %323 : vector<8x128xf32> to vector<8x128xbf16>
    %c0_99 = arith.constant 0 : index
    %c0_100 = arith.constant 0 : index
    %325 = vector.load %arg9[%c0_99, %c0_100] : memref<128x128xbf16, #tpu.memory_space<vmem>>, vector<128x128xbf16>
    %cst_101 = arith.constant dense<0.000000e+00> : vector<8x128xf32>
    %326 = tpu.matmul %324, %325, %cst_101 {dimension_numbers = #tpu.dot_dimension_numbers<[1], [0], [0], [1], [0, 0, 1, 1], [], []>} : vector<8x128xbf16>, vector<128x128xbf16>, vector<8x128xf32> -> vector<8x128xf32>
    %c0_102 = arith.constant 0 : index
    %c0_103 = arith.constant 0 : index
    %327 = vector.load %arg10[%c0_102, %c0_103] : memref<1x128xf32, #tpu.memory_space<vmem>>, vector<1x128xf32>
    %328 = vector.broadcast %327 : vector<1x128xf32> to vector<8x128xf32>
    %329 = arith.addf %326, %328 : vector<8x128xf32>
    %c0_104 = arith.constant 0 : index
    %c0_105 = arith.constant 0 : index
    %c0_106 = arith.constant 0 : index
    %330 = vector.load %arg22[%c0_104, %c0_105, %c0_106] : memref<8x8x128xf32, #tpu.memory_space<vmem>>, vector<8x8x128xf32>
    %331 = vector.shape_cast %330 : vector<8x8x128xf32> to vector<64x128xf32>
    %332 = arith.truncf %331 : vector<64x128xf32> to vector<64x128xbf16>
    %c0_107 = arith.constant 0 : index
    %c0_108 = arith.constant 0 : index
    %333 = vector.load %arg8[%c0_107, %c0_108] : memref<128x128xbf16, #tpu.memory_space<vmem>>, vector<128x128xbf16>
    %cst_109 = arith.constant dense<0.000000e+00> : vector<64x128xf32>
    %334 = tpu.matmul %332, %333, %cst_109 {dimension_numbers = #tpu.dot_dimension_numbers<[1], [0], [0], [1], [0, 0, 1, 1], [], []>} : vector<64x128xbf16>, vector<128x128xbf16>, vector<64x128xf32> -> vector<64x128xf32>
    %335 = vector.shape_cast %334 : vector<64x128xf32> to vector<8x8x128xf32>
    %336 = vector.shape_cast %329 : vector<8x128xf32> to vector<1x8x128xf32>
    %337 = vector.broadcast %336 : vector<1x8x128xf32> to vector<8x8x128xf32>
    %338 = arith.addf %335, %337 : vector<8x8x128xf32>
    %339 = math.tanh %338 : vector<8x8x128xf32>
    %c0_110 = arith.constant 0 : index
    %c0_111 = arith.constant 0 : index
    %c0_112 = arith.constant 0 : index
    %340 = vector.load %arg0[%c0_110, %c0_111, %c0_112] : memref<8x8x128xf32, #tpu.memory_space<vmem>>, vector<8x8x128xf32>
    %341 = math.tanh %340 : vector<8x8x128xf32>
    %342 = math.tanh %341 : vector<8x8x128xf32>
    %343 = vector.shape_cast %339 : vector<8x8x128xf32> to vector<64x128xf32>
    %344 = arith.truncf %343 : vector<64x128xf32> to vector<64x128xbf16>
    %c0_113 = arith.constant 0 : index
    %c0_114 = arith.constant 0 : index
    %345 = vector.load %arg11[%c0_113, %c0_114] : memref<128x384xbf16, #tpu.memory_space<vmem>>, vector<128x384xbf16>
    %cst_115 = arith.constant dense<0.000000e+00> : vector<64x384xf32>
    %346 = tpu.matmul %344, %345, %cst_115 {dimension_numbers = #tpu.dot_dimension_numbers<[1], [0], [0], [1], [0, 0, 1, 1], [], []>} : vector<64x128xbf16>, vector<128x384xbf16>, vector<64x384xf32> -> vector<64x384xf32>
    %347 = vector.shape_cast %342 : vector<8x8x128xf32> to vector<64x128xf32>
    %348 = arith.truncf %347 : vector<64x128xf32> to vector<64x128xbf16>
    %c0_116 = arith.constant 0 : index
    %c0_117 = arith.constant 0 : index
    %349 = vector.load %arg12[%c0_116, %c0_117] : memref<128x384xbf16, #tpu.memory_space<vmem>>, vector<128x384xbf16>
    %cst_118 = arith.constant dense<0.000000e+00> : vector<64x384xf32>
    %350 = tpu.matmul %348, %349, %cst_118 {dimension_numbers = #tpu.dot_dimension_numbers<[1], [0], [0], [1], [0, 0, 1, 1], [], []>} : vector<64x128xbf16>, vector<128x384xbf16>, vector<64x384xf32> -> vector<64x384xf32>
    %351 = arith.addf %346, %350 : vector<64x384xf32>
    %c0_119 = arith.constant 0 : index
    %c0_120 = arith.constant 0 : index
    %352 = vector.load %arg14[%c0_119, %c0_120] : memref<1x384xf32, #tpu.memory_space<vmem>>, vector<1x384xf32>
    %353 = vector.broadcast %352 : vector<1x384xf32> to vector<64x384xf32>
    %354 = arith.addf %351, %353 : vector<64x384xf32>
    %355 = vector.shape_cast %354 : vector<64x384xf32> to vector<8x8x384xf32>
    %c0_121 = arith.constant 0 : index
    %c0_122 = arith.constant 0 : index
    %c0_123 = arith.constant 0 : index
    %356 = vector.load %arg23[%c0_121, %c0_122, %c0_123] : memref<8x8x384xf32, #tpu.memory_space<vmem>>, vector<8x8x384xf32>
    tpu.vector_store %arg23[%c0_121, %c0_122, %c0_123], %355 {strides = array<i32>} : memref<8x8x384xf32, #tpu.memory_space<vmem>>, vector<8x8x384xf32>,
    %c0_124 = arith.constant 0 : index
    %c0_125 = arith.constant 0 : index
    %357 = vector.load %arg15[%c0_124, %c0_125] : memref<1x384xf32, #tpu.memory_space<vmem>>, vector<1x384xf32>
    %cst_126 = arith.constant 0.000000e+00 : f32
    %358 = vector.broadcast %cst_126 : f32 to vector<8x128xf32>
    %c0_i32_127 = arith.constant 0 : i32
    %c7_i32_128 = arith.constant 7 : i32
    %359 = arith.subi %c7_i32_128, %c0_i32_127 : i32
    %360 = arith.index_cast %359 : i32 to index
    %c0_129 = arith.constant 0 : index
    %c0_130 = arith.constant 0 : index
    %361 = vector.load %arg23[%360, %c0_129, %c0_130] : memref<8x8x384xf32, #tpu.memory_space<vmem>>, vector<1x8x384xf32>
    %362 = vector.shape_cast %361 : vector<1x8x384xf32> to vector<8x384xf32>
    %363 = arith.truncf %358 : vector<8x128xf32> to vector<8x128xbf16>
    %c0_131 = arith.constant 0 : index
    %c0_132 = arith.constant 0 : index
    %364 = vector.load %arg13[%c0_131, %c0_132] : memref<128x384xbf16, #tpu.memory_space<vmem>>, vector<128x384xbf16>
    %cst_133 = arith.constant dense<0.000000e+00> : vector<8x384xf32>
    %365 = tpu.matmul %363, %364, %cst_133 {dimension_numbers = #tpu.dot_dimension_numbers<[1], [0], [0], [1], [0, 0, 1, 1], [], []>} : vector<8x128xbf16>, vector<128x384xbf16>, vector<8x384xf32> -> vector<8x384xf32>
    %366 = vector.broadcast %357 : vector<1x384xf32> to vector<8x384xf32>
    %367 = arith.addf %365, %366 : vector<8x384xf32>
    %368 = vector.extract_strided_slice %362 {offsets = [0, 0], sizes = [8, 128], strides = [1, 1]} : vector<8x384xf32> to vector<8x128xf32>
    %369 = vector.extract_strided_slice %367 {offsets = [0, 0], sizes = [8, 128], strides = [1, 1]} : vector<8x384xf32> to vector<8x128xf32>
    %370 = arith.addf %368, %369 : vector<8x128xf32>
    %371 = arith.negf %370 : vector<8x128xf32>
    %372 = math.exp %371 : vector<8x128xf32>
    %cst_134 = arith.constant 1.000000e+00 : f32
    %373 = vector.broadcast %cst_134 : f32 to vector<8x128xf32>
    %374 = arith.addf %373, %372 : vector<8x128xf32>
    %375 = arith.divf %373, %374 : vector<8x128xf32>
    %376 = vector.extract_strided_slice %362 {offsets = [0, 128], sizes = [8, 128], strides = [1, 1]} : vector<8x384xf32> to vector<8x128xf32>
    %377 = vector.extract_strided_slice %367 {offsets = [0, 128], sizes = [8, 128], strides = [1, 1]} : vector<8x384xf32> to vector<8x128xf32>
    %378 = arith.addf %376, %377 : vector<8x128xf32>
    %379 = arith.negf %378 : vector<8x128xf32>
    %380 = math.exp %379 : vector<8x128xf32>
    %cst_135 = arith.constant 1.000000e+00 : f32
    %381 = vector.broadcast %cst_135 : f32 to vector<8x128xf32>
    %382 = arith.addf %381, %380 : vector<8x128xf32>
    %383 = arith.divf %381, %382 : vector<8x128xf32>
    %384 = vector.extract_strided_slice %362 {offsets = [0, 256], sizes = [8, 128], strides = [1, 1]} : vector<8x384xf32> to vector<8x128xf32>
    %385 = vector.extract_strided_slice %367 {offsets = [0, 256], sizes = [8, 128], strides = [1, 1]} : vector<8x384xf32> to vector<8x128xf32>
    %386 = arith.mulf %375, %385 : vector<8x128xf32>
    %387 = arith.addf %384, %386 : vector<8x128xf32>
    %388 = math.tanh %387 : vector<8x128xf32>
    %cst_136 = arith.constant 1.000000e+00 : f32
    %389 = vector.broadcast %cst_136 : f32 to vector<8x128xf32>
    %390 = arith.subf %389, %383 : vector<8x128xf32>
    %391 = arith.mulf %390, %388 : vector<8x128xf32>
    %392 = arith.mulf %383, %358 : vector<8x128xf32>
    %393 = arith.addf %391, %392 : vector<8x128xf32>
    %c1_i32_137 = arith.constant 1 : i32
    %c7_i32_138 = arith.constant 7 : i32
    %394 = arith.subi %c7_i32_138, %c1_i32_137 : i32
    %395 = arith.index_cast %394 : i32 to index
    %c0_139 = arith.constant 0 : index
    %c0_140 = arith.constant 0 : index
    %396 = vector.load %arg23[%395, %c0_139, %c0_140] : memref<8x8x384xf32, #tpu.memory_space<vmem>>, vector<1x8x384xf32>
    %397 = vector.shape_cast %396 : vector<1x8x384xf32> to vector<8x384xf32>
    %398 = arith.truncf %393 : vector<8x128xf32> to vector<8x128xbf16>
    %c0_141 = arith.constant 0 : index
    %c0_142 = arith.constant 0 : index
    %399 = vector.load %arg13[%c0_141, %c0_142] : memref<128x384xbf16, #tpu.memory_space<vmem>>, vector<128x384xbf16>
    %cst_143 = arith.constant dense<0.000000e+00> : vector<8x384xf32>
    %400 = tpu.matmul %398, %399, %cst_143 {dimension_numbers = #tpu.dot_dimension_numbers<[1], [0], [0], [1], [0, 0, 1, 1], [], []>} : vector<8x128xbf16>, vector<128x384xbf16>, vector<8x384xf32> -> vector<8x384xf32>
    %401 = vector.broadcast %357 : vector<1x384xf32> to vector<8x384xf32>
    %402 = arith.addf %400, %401 : vector<8x384xf32>
    %403 = vector.extract_strided_slice %397 {offsets = [0, 0], sizes = [8, 128], strides = [1, 1]} : vector<8x384xf32> to vector<8x128xf32>
    %404 = vector.extract_strided_slice %402 {offsets = [0, 0], sizes = [8, 128], strides = [1, 1]} : vector<8x384xf32> to vector<8x128xf32>
    %405 = arith.addf %403, %404 : vector<8x128xf32>
    %406 = arith.negf %405 : vector<8x128xf32>
    %407 = math.exp %406 : vector<8x128xf32>
    %cst_144 = arith.constant 1.000000e+00 : f32
    %408 = vector.broadcast %cst_144 : f32 to vector<8x128xf32>
    %409 = arith.addf %408, %407 : vector<8x128xf32>
    %410 = arith.divf %408, %409 : vector<8x128xf32>
    %411 = vector.extract_strided_slice %397 {offsets = [0, 128], sizes = [8, 128], strides = [1, 1]} : vector<8x384xf32> to vector<8x128xf32>
    %412 = vector.extract_strided_slice %402 {offsets = [0, 128], sizes = [8, 128], strides = [1, 1]} : vector<8x384xf32> to vector<8x128xf32>
    %413 = arith.addf %411, %412 : vector<8x128xf32>
    %414 = arith.negf %413 : vector<8x128xf32>
    %415 = math.exp %414 : vector<8x128xf32>
    %cst_145 = arith.constant 1.000000e+00 : f32
    %416 = vector.broadcast %cst_145 : f32 to vector<8x128xf32>
    %417 = arith.addf %416, %415 : vector<8x128xf32>
    %418 = arith.divf %416, %417 : vector<8x128xf32>
    %419 = vector.extract_strided_slice %397 {offsets = [0, 256], sizes = [8, 128], strides = [1, 1]} : vector<8x384xf32> to vector<8x128xf32>
    %420 = vector.extract_strided_slice %402 {offsets = [0, 256], sizes = [8, 128], strides = [1, 1]} : vector<8x384xf32> to vector<8x128xf32>
    %421 = arith.mulf %410, %420 : vector<8x128xf32>
    %422 = arith.addf %419, %421 : vector<8x128xf32>
    %423 = math.tanh %422 : vector<8x128xf32>
    %cst_146 = arith.constant 1.000000e+00 : f32
    %424 = vector.broadcast %cst_146 : f32 to vector<8x128xf32>
    %425 = arith.subf %424, %418 : vector<8x128xf32>
    %426 = arith.mulf %425, %423 : vector<8x128xf32>
    %427 = arith.mulf %418, %393 : vector<8x128xf32>
    %428 = arith.addf %426, %427 : vector<8x128xf32>
    %c2_i32_147 = arith.constant 2 : i32
    %c7_i32_148 = arith.constant 7 : i32
    %429 = arith.subi %c7_i32_148, %c2_i32_147 : i32
    %430 = arith.index_cast %429 : i32 to index
    %c0_149 = arith.constant 0 : index
    %c0_150 = arith.constant 0 : index
    %431 = vector.load %arg23[%430, %c0_149, %c0_150] : memref<8x8x384xf32, #tpu.memory_space<vmem>>, vector<1x8x384xf32>
    %432 = vector.shape_cast %431 : vector<1x8x384xf32> to vector<8x384xf32>
    %433 = arith.truncf %428 : vector<8x128xf32> to vector<8x128xbf16>
    %c0_151 = arith.constant 0 : index
    %c0_152 = arith.constant 0 : index
    %434 = vector.load %arg13[%c0_151, %c0_152] : memref<128x384xbf16, #tpu.memory_space<vmem>>, vector<128x384xbf16>
    %cst_153 = arith.constant dense<0.000000e+00> : vector<8x384xf32>
    %435 = tpu.matmul %433, %434, %cst_153 {dimension_numbers = #tpu.dot_dimension_numbers<[1], [0], [0], [1], [0, 0, 1, 1], [], []>} : vector<8x128xbf16>, vector<128x384xbf16>, vector<8x384xf32> -> vector<8x384xf32>
    %436 = vector.broadcast %357 : vector<1x384xf32> to vector<8x384xf32>
    %437 = arith.addf %435, %436 : vector<8x384xf32>
    %438 = vector.extract_strided_slice %432 {offsets = [0, 0], sizes = [8, 128], strides = [1, 1]} : vector<8x384xf32> to vector<8x128xf32>
    %439 = vector.extract_strided_slice %437 {offsets = [0, 0], sizes = [8, 128], strides = [1, 1]} : vector<8x384xf32> to vector<8x128xf32>
    %440 = arith.addf %438, %439 : vector<8x128xf32>
    %441 = arith.negf %440 : vector<8x128xf32>
    %442 = math.exp %441 : vector<8x128xf32>
    %cst_154 = arith.constant 1.000000e+00 : f32
    %443 = vector.broadcast %cst_154 : f32 to vector<8x128xf32>
    %444 = arith.addf %443, %442 : vector<8x128xf32>
    %445 = arith.divf %443, %444 : vector<8x128xf32>
    %446 = vector.extract_strided_slice %432 {offsets = [0, 128], sizes = [8, 128], strides = [1, 1]} : vector<8x384xf32> to vector<8x128xf32>
    %447 = vector.extract_strided_slice %437 {offsets = [0, 128], sizes = [8, 128], strides = [1, 1]} : vector<8x384xf32> to vector<8x128xf32>
    %448 = arith.addf %446, %447 : vector<8x128xf32>
    %449 = arith.negf %448 : vector<8x128xf32>
    %450 = math.exp %449 : vector<8x128xf32>
    %cst_155 = arith.constant 1.000000e+00 : f32
    %451 = vector.broadcast %cst_155 : f32 to vector<8x128xf32>
    %452 = arith.addf %451, %450 : vector<8x128xf32>
    %453 = arith.divf %451, %452 : vector<8x128xf32>
    %454 = vector.extract_strided_slice %432 {offsets = [0, 256], sizes = [8, 128], strides = [1, 1]} : vector<8x384xf32> to vector<8x128xf32>
    %455 = vector.extract_strided_slice %437 {offsets = [0, 256], sizes = [8, 128], strides = [1, 1]} : vector<8x384xf32> to vector<8x128xf32>
    %456 = arith.mulf %445, %455 : vector<8x128xf32>
    %457 = arith.addf %454, %456 : vector<8x128xf32>
    %458 = math.tanh %457 : vector<8x128xf32>
    %cst_156 = arith.constant 1.000000e+00 : f32
    %459 = vector.broadcast %cst_156 : f32 to vector<8x128xf32>
    %460 = arith.subf %459, %453 : vector<8x128xf32>
    %461 = arith.mulf %460, %458 : vector<8x128xf32>
    %462 = arith.mulf %453, %428 : vector<8x128xf32>
    %463 = arith.addf %461, %462 : vector<8x128xf32>
    %c3_i32_157 = arith.constant 3 : i32
    %c7_i32_158 = arith.constant 7 : i32
    %464 = arith.subi %c7_i32_158, %c3_i32_157 : i32
    %465 = arith.index_cast %464 : i32 to index
    %c0_159 = arith.constant 0 : index
    %c0_160 = arith.constant 0 : index
    %466 = vector.load %arg23[%465, %c0_159, %c0_160] : memref<8x8x384xf32, #tpu.memory_space<vmem>>, vector<1x8x384xf32>
    %467 = vector.shape_cast %466 : vector<1x8x384xf32> to vector<8x384xf32>
    %468 = arith.truncf %463 : vector<8x128xf32> to vector<8x128xbf16>
    %c0_161 = arith.constant 0 : index
    %c0_162 = arith.constant 0 : index
    %469 = vector.load %arg13[%c0_161, %c0_162] : memref<128x384xbf16, #tpu.memory_space<vmem>>, vector<128x384xbf16>
    %cst_163 = arith.constant dense<0.000000e+00> : vector<8x384xf32>
    %470 = tpu.matmul %468, %469, %cst_163 {dimension_numbers = #tpu.dot_dimension_numbers<[1], [0], [0], [1], [0, 0, 1, 1], [], []>} : vector<8x128xbf16>, vector<128x384xbf16>, vector<8x384xf32> -> vector<8x384xf32>
    %471 = vector.broadcast %357 : vector<1x384xf32> to vector<8x384xf32>
    %472 = arith.addf %470, %471 : vector<8x384xf32>
    %473 = vector.extract_strided_slice %467 {offsets = [0, 0], sizes = [8, 128], strides = [1, 1]} : vector<8x384xf32> to vector<8x128xf32>
    %474 = vector.extract_strided_slice %472 {offsets = [0, 0], sizes = [8, 128], strides = [1, 1]} : vector<8x384xf32> to vector<8x128xf32>
    %475 = arith.addf %473, %474 : vector<8x128xf32>
    %476 = arith.negf %475 : vector<8x128xf32>
    %477 = math.exp %476 : vector<8x128xf32>
    %cst_164 = arith.constant 1.000000e+00 : f32
    %478 = vector.broadcast %cst_164 : f32 to vector<8x128xf32>
    %479 = arith.addf %478, %477 : vector<8x128xf32>
    %480 = arith.divf %478, %479 : vector<8x128xf32>
    %481 = vector.extract_strided_slice %467 {offsets = [0, 128], sizes = [8, 128], strides = [1, 1]} : vector<8x384xf32> to vector<8x128xf32>
    %482 = vector.extract_strided_slice %472 {offsets = [0, 128], sizes = [8, 128], strides = [1, 1]} : vector<8x384xf32> to vector<8x128xf32>
    %483 = arith.addf %481, %482 : vector<8x128xf32>
    %484 = arith.negf %483 : vector<8x128xf32>
    %485 = math.exp %484 : vector<8x128xf32>
    %cst_165 = arith.constant 1.000000e+00 : f32
    %486 = vector.broadcast %cst_165 : f32 to vector<8x128xf32>
    %487 = arith.addf %486, %485 : vector<8x128xf32>
    %488 = arith.divf %486, %487 : vector<8x128xf32>
    %489 = vector.extract_strided_slice %467 {offsets = [0, 256], sizes = [8, 128], strides = [1, 1]} : vector<8x384xf32> to vector<8x128xf32>
    %490 = vector.extract_strided_slice %472 {offsets = [0, 256], sizes = [8, 128], strides = [1, 1]} : vector<8x384xf32> to vector<8x128xf32>
    %491 = arith.mulf %480, %490 : vector<8x128xf32>
    %492 = arith.addf %489, %491 : vector<8x128xf32>
    %493 = math.tanh %492 : vector<8x128xf32>
    %cst_166 = arith.constant 1.000000e+00 : f32
    %494 = vector.broadcast %cst_166 : f32 to vector<8x128xf32>
    %495 = arith.subf %494, %488 : vector<8x128xf32>
    %496 = arith.mulf %495, %493 : vector<8x128xf32>
    %497 = arith.mulf %488, %463 : vector<8x128xf32>
    %498 = arith.addf %496, %497 : vector<8x128xf32>
    %c4_i32_167 = arith.constant 4 : i32
    %c7_i32_168 = arith.constant 7 : i32
    %499 = arith.subi %c7_i32_168, %c4_i32_167 : i32
    %500 = arith.index_cast %499 : i32 to index
    %c0_169 = arith.constant 0 : index
    %c0_170 = arith.constant 0 : index
    %501 = vector.load %arg23[%500, %c0_169, %c0_170] : memref<8x8x384xf32, #tpu.memory_space<vmem>>, vector<1x8x384xf32>
    %502 = vector.shape_cast %501 : vector<1x8x384xf32> to vector<8x384xf32>
    %503 = arith.truncf %498 : vector<8x128xf32> to vector<8x128xbf16>
    %c0_171 = arith.constant 0 : index
    %c0_172 = arith.constant 0 : index
    %504 = vector.load %arg13[%c0_171, %c0_172] : memref<128x384xbf16, #tpu.memory_space<vmem>>, vector<128x384xbf16>
    %cst_173 = arith.constant dense<0.000000e+00> : vector<8x384xf32>
    %505 = tpu.matmul %503, %504, %cst_173 {dimension_numbers = #tpu.dot_dimension_numbers<[1], [0], [0], [1], [0, 0, 1, 1], [], []>} : vector<8x128xbf16>, vector<128x384xbf16>, vector<8x384xf32> -> vector<8x384xf32>
    %506 = vector.broadcast %357 : vector<1x384xf32> to vector<8x384xf32>
    %507 = arith.addf %505, %506 : vector<8x384xf32>
    %508 = vector.extract_strided_slice %502 {offsets = [0, 0], sizes = [8, 128], strides = [1, 1]} : vector<8x384xf32> to vector<8x128xf32>
    %509 = vector.extract_strided_slice %507 {offsets = [0, 0], sizes = [8, 128], strides = [1, 1]} : vector<8x384xf32> to vector<8x128xf32>
    %510 = arith.addf %508, %509 : vector<8x128xf32>
    %511 = arith.negf %510 : vector<8x128xf32>
    %512 = math.exp %511 : vector<8x128xf32>
    %cst_174 = arith.constant 1.000000e+00 : f32
    %513 = vector.broadcast %cst_174 : f32 to vector<8x128xf32>
    %514 = arith.addf %513, %512 : vector<8x128xf32>
    %515 = arith.divf %513, %514 : vector<8x128xf32>
    %516 = vector.extract_strided_slice %502 {offsets = [0, 128], sizes = [8, 128], strides = [1, 1]} : vector<8x384xf32> to vector<8x128xf32>
    %517 = vector.extract_strided_slice %507 {offsets = [0, 128], sizes = [8, 128], strides = [1, 1]} : vector<8x384xf32> to vector<8x128xf32>
    %518 = arith.addf %516, %517 : vector<8x128xf32>
    %519 = arith.negf %518 : vector<8x128xf32>
    %520 = math.exp %519 : vector<8x128xf32>
    %cst_175 = arith.constant 1.000000e+00 : f32
    %521 = vector.broadcast %cst_175 : f32 to vector<8x128xf32>
    %522 = arith.addf %521, %520 : vector<8x128xf32>
    %523 = arith.divf %521, %522 : vector<8x128xf32>
    %524 = vector.extract_strided_slice %502 {offsets = [0, 256], sizes = [8, 128], strides = [1, 1]} : vector<8x384xf32> to vector<8x128xf32>
    %525 = vector.extract_strided_slice %507 {offsets = [0, 256], sizes = [8, 128], strides = [1, 1]} : vector<8x384xf32> to vector<8x128xf32>
    %526 = arith.mulf %515, %525 : vector<8x128xf32>
    %527 = arith.addf %524, %526 : vector<8x128xf32>
    %528 = math.tanh %527 : vector<8x128xf32>
    %cst_176 = arith.constant 1.000000e+00 : f32
    %529 = vector.broadcast %cst_176 : f32 to vector<8x128xf32>
    %530 = arith.subf %529, %523 : vector<8x128xf32>
    %531 = arith.mulf %530, %528 : vector<8x128xf32>
    %532 = arith.mulf %523, %498 : vector<8x128xf32>
    %533 = arith.addf %531, %532 : vector<8x128xf32>
    %c5_i32_177 = arith.constant 5 : i32
    %c7_i32_178 = arith.constant 7 : i32
    %534 = arith.subi %c7_i32_178, %c5_i32_177 : i32
    %535 = arith.index_cast %534 : i32 to index
    %c0_179 = arith.constant 0 : index
    %c0_180 = arith.constant 0 : index
    %536 = vector.load %arg23[%535, %c0_179, %c0_180] : memref<8x8x384xf32, #tpu.memory_space<vmem>>, vector<1x8x384xf32>
    %537 = vector.shape_cast %536 : vector<1x8x384xf32> to vector<8x384xf32>
    %538 = arith.truncf %533 : vector<8x128xf32> to vector<8x128xbf16>
    %c0_181 = arith.constant 0 : index
    %c0_182 = arith.constant 0 : index
    %539 = vector.load %arg13[%c0_181, %c0_182] : memref<128x384xbf16, #tpu.memory_space<vmem>>, vector<128x384xbf16>
    %cst_183 = arith.constant dense<0.000000e+00> : vector<8x384xf32>
    %540 = tpu.matmul %538, %539, %cst_183 {dimension_numbers = #tpu.dot_dimension_numbers<[1], [0], [0], [1], [0, 0, 1, 1], [], []>} : vector<8x128xbf16>, vector<128x384xbf16>, vector<8x384xf32> -> vector<8x384xf32>
    %541 = vector.broadcast %357 : vector<1x384xf32> to vector<8x384xf32>
    %542 = arith.addf %540, %541 : vector<8x384xf32>
    %543 = vector.extract_strided_slice %537 {offsets = [0, 0], sizes = [8, 128], strides = [1, 1]} : vector<8x384xf32> to vector<8x128xf32>
    %544 = vector.extract_strided_slice %542 {offsets = [0, 0], sizes = [8, 128], strides = [1, 1]} : vector<8x384xf32> to vector<8x128xf32>
    %545 = arith.addf %543, %544 : vector<8x128xf32>
    %546 = arith.negf %545 : vector<8x128xf32>
    %547 = math.exp %546 : vector<8x128xf32>
    %cst_184 = arith.constant 1.000000e+00 : f32
    %548 = vector.broadcast %cst_184 : f32 to vector<8x128xf32>
    %549 = arith.addf %548, %547 : vector<8x128xf32>
    %550 = arith.divf %548, %549 : vector<8x128xf32>
    %551 = vector.extract_strided_slice %537 {offsets = [0, 128], sizes = [8, 128], strides = [1, 1]} : vector<8x384xf32> to vector<8x128xf32>
    %552 = vector.extract_strided_slice %542 {offsets = [0, 128], sizes = [8, 128], strides = [1, 1]} : vector<8x384xf32> to vector<8x128xf32>
    %553 = arith.addf %551, %552 : vector<8x128xf32>
    %554 = arith.negf %553 : vector<8x128xf32>
    %555 = math.exp %554 : vector<8x128xf32>
    %cst_185 = arith.constant 1.000000e+00 : f32
    %556 = vector.broadcast %cst_185 : f32 to vector<8x128xf32>
    %557 = arith.addf %556, %555 : vector<8x128xf32>
    %558 = arith.divf %556, %557 : vector<8x128xf32>
    %559 = vector.extract_strided_slice %537 {offsets = [0, 256], sizes = [8, 128], strides = [1, 1]} : vector<8x384xf32> to vector<8x128xf32>
    %560 = vector.extract_strided_slice %542 {offsets = [0, 256], sizes = [8, 128], strides = [1, 1]} : vector<8x384xf32> to vector<8x128xf32>
    %561 = arith.mulf %550, %560 : vector<8x128xf32>
    %562 = arith.addf %559, %561 : vector<8x128xf32>
    %563 = math.tanh %562 : vector<8x128xf32>
    %cst_186 = arith.constant 1.000000e+00 : f32
    %564 = vector.broadcast %cst_186 : f32 to vector<8x128xf32>
    %565 = arith.subf %564, %558 : vector<8x128xf32>
    %566 = arith.mulf %565, %563 : vector<8x128xf32>
    %567 = arith.mulf %558, %533 : vector<8x128xf32>
    %568 = arith.addf %566, %567 : vector<8x128xf32>
    %c6_i32_187 = arith.constant 6 : i32
    %c7_i32_188 = arith.constant 7 : i32
    %569 = arith.subi %c7_i32_188, %c6_i32_187 : i32
    %570 = arith.index_cast %569 : i32 to index
    %c0_189 = arith.constant 0 : index
    %c0_190 = arith.constant 0 : index
    %571 = vector.load %arg23[%570, %c0_189, %c0_190] : memref<8x8x384xf32, #tpu.memory_space<vmem>>, vector<1x8x384xf32>
    %572 = vector.shape_cast %571 : vector<1x8x384xf32> to vector<8x384xf32>
    %573 = arith.truncf %568 : vector<8x128xf32> to vector<8x128xbf16>
    %c0_191 = arith.constant 0 : index
    %c0_192 = arith.constant 0 : index
    %574 = vector.load %arg13[%c0_191, %c0_192] : memref<128x384xbf16, #tpu.memory_space<vmem>>, vector<128x384xbf16>
    %cst_193 = arith.constant dense<0.000000e+00> : vector<8x384xf32>
    %575 = tpu.matmul %573, %574, %cst_193 {dimension_numbers = #tpu.dot_dimension_numbers<[1], [0], [0], [1], [0, 0, 1, 1], [], []>} : vector<8x128xbf16>, vector<128x384xbf16>, vector<8x384xf32> -> vector<8x384xf32>
    %576 = vector.broadcast %357 : vector<1x384xf32> to vector<8x384xf32>
    %577 = arith.addf %575, %576 : vector<8x384xf32>
    %578 = vector.extract_strided_slice %572 {offsets = [0, 0], sizes = [8, 128], strides = [1, 1]} : vector<8x384xf32> to vector<8x128xf32>
    %579 = vector.extract_strided_slice %577 {offsets = [0, 0], sizes = [8, 128], strides = [1, 1]} : vector<8x384xf32> to vector<8x128xf32>
    %580 = arith.addf %578, %579 : vector<8x128xf32>
    %581 = arith.negf %580 : vector<8x128xf32>
    %582 = math.exp %581 : vector<8x128xf32>
    %cst_194 = arith.constant 1.000000e+00 : f32
    %583 = vector.broadcast %cst_194 : f32 to vector<8x128xf32>
    %584 = arith.addf %583, %582 : vector<8x128xf32>
    %585 = arith.divf %583, %584 : vector<8x128xf32>
    %586 = vector.extract_strided_slice %572 {offsets = [0, 128], sizes = [8, 128], strides = [1, 1]} : vector<8x384xf32> to vector<8x128xf32>
    %587 = vector.extract_strided_slice %577 {offsets = [0, 128], sizes = [8, 128], strides = [1, 1]} : vector<8x384xf32> to vector<8x128xf32>
    %588 = arith.addf %586, %587 : vector<8x128xf32>
    %589 = arith.negf %588 : vector<8x128xf32>
    %590 = math.exp %589 : vector<8x128xf32>
    %cst_195 = arith.constant 1.000000e+00 : f32
    %591 = vector.broadcast %cst_195 : f32 to vector<8x128xf32>
    %592 = arith.addf %591, %590 : vector<8x128xf32>
    %593 = arith.divf %591, %592 : vector<8x128xf32>
    %594 = vector.extract_strided_slice %572 {offsets = [0, 256], sizes = [8, 128], strides = [1, 1]} : vector<8x384xf32> to vector<8x128xf32>
    %595 = vector.extract_strided_slice %577 {offsets = [0, 256], sizes = [8, 128], strides = [1, 1]} : vector<8x384xf32> to vector<8x128xf32>
    %596 = arith.mulf %585, %595 : vector<8x128xf32>
    %597 = arith.addf %594, %596 : vector<8x128xf32>
    %598 = math.tanh %597 : vector<8x128xf32>
    %cst_196 = arith.constant 1.000000e+00 : f32
    %599 = vector.broadcast %cst_196 : f32 to vector<8x128xf32>
    %600 = arith.subf %599, %593 : vector<8x128xf32>
    %601 = arith.mulf %600, %598 : vector<8x128xf32>
    %602 = arith.mulf %593, %568 : vector<8x128xf32>
    %603 = arith.addf %601, %602 : vector<8x128xf32>
    %c7_i32_197 = arith.constant 7 : i32
    %c7_i32_198 = arith.constant 7 : i32
    %604 = arith.subi %c7_i32_198, %c7_i32_197 : i32
    %605 = arith.index_cast %604 : i32 to index
    %c0_199 = arith.constant 0 : index
    %c0_200 = arith.constant 0 : index
    %606 = vector.load %arg23[%605, %c0_199, %c0_200] : memref<8x8x384xf32, #tpu.memory_space<vmem>>, vector<1x8x384xf32>
    %607 = vector.shape_cast %606 : vector<1x8x384xf32> to vector<8x384xf32>
    %608 = arith.truncf %603 : vector<8x128xf32> to vector<8x128xbf16>
    %c0_201 = arith.constant 0 : index
    %c0_202 = arith.constant 0 : index
    %609 = vector.load %arg13[%c0_201, %c0_202] : memref<128x384xbf16, #tpu.memory_space<vmem>>, vector<128x384xbf16>
    %cst_203 = arith.constant dense<0.000000e+00> : vector<8x384xf32>
    %610 = tpu.matmul %608, %609, %cst_203 {dimension_numbers = #tpu.dot_dimension_numbers<[1], [0], [0], [1], [0, 0, 1, 1], [], []>} : vector<8x128xbf16>, vector<128x384xbf16>, vector<8x384xf32> -> vector<8x384xf32>
    %611 = vector.broadcast %357 : vector<1x384xf32> to vector<8x384xf32>
    %612 = arith.addf %610, %611 : vector<8x384xf32>
    %613 = vector.extract_strided_slice %607 {offsets = [0, 0], sizes = [8, 128], strides = [1, 1]} : vector<8x384xf32> to vector<8x128xf32>
    %614 = vector.extract_strided_slice %612 {offsets = [0, 0], sizes = [8, 128], strides = [1, 1]} : vector<8x384xf32> to vector<8x128xf32>
    %615 = arith.addf %613, %614 : vector<8x128xf32>
    %616 = arith.negf %615 : vector<8x128xf32>
    %617 = math.exp %616 : vector<8x128xf32>
    %cst_204 = arith.constant 1.000000e+00 : f32
    %618 = vector.broadcast %cst_204 : f32 to vector<8x128xf32>
    %619 = arith.addf %618, %617 : vector<8x128xf32>
    %620 = arith.divf %618, %619 : vector<8x128xf32>
    %621 = vector.extract_strided_slice %607 {offsets = [0, 128], sizes = [8, 128], strides = [1, 1]} : vector<8x384xf32> to vector<8x128xf32>
    %622 = vector.extract_strided_slice %612 {offsets = [0, 128], sizes = [8, 128], strides = [1, 1]} : vector<8x384xf32> to vector<8x128xf32>
    %623 = arith.addf %621, %622 : vector<8x128xf32>
    %624 = arith.negf %623 : vector<8x128xf32>
    %625 = math.exp %624 : vector<8x128xf32>
    %cst_205 = arith.constant 1.000000e+00 : f32
    %626 = vector.broadcast %cst_205 : f32 to vector<8x128xf32>
    %627 = arith.addf %626, %625 : vector<8x128xf32>
    %628 = arith.divf %626, %627 : vector<8x128xf32>
    %629 = vector.extract_strided_slice %607 {offsets = [0, 256], sizes = [8, 128], strides = [1, 1]} : vector<8x384xf32> to vector<8x128xf32>
    %630 = vector.extract_strided_slice %612 {offsets = [0, 256], sizes = [8, 128], strides = [1, 1]} : vector<8x384xf32> to vector<8x128xf32>
    %631 = arith.mulf %620, %630 : vector<8x128xf32>
    %632 = arith.addf %629, %631 : vector<8x128xf32>
    %633 = math.tanh %632 : vector<8x128xf32>
    %cst_206 = arith.constant 1.000000e+00 : f32
    %634 = vector.broadcast %cst_206 : f32 to vector<8x128xf32>
    %635 = arith.subf %634, %628 : vector<8x128xf32>
    %636 = arith.mulf %635, %633 : vector<8x128xf32>
    %637 = arith.mulf %628, %603 : vector<8x128xf32>
    %638 = arith.addf %636, %637 : vector<8x128xf32>
    %c8_i32_207 = arith.constant 8 : i32
    %639 = math.tanh %638 : vector<8x128xf32>
    %640 = arith.truncf %639 : vector<8x128xf32> to vector<8x128xbf16>
    %c0_208 = arith.constant 0 : index
    %c0_209 = arith.constant 0 : index
    %641 = vector.load %arg16[%c0_208, %c0_209] : memref<128x128xbf16, #tpu.memory_space<vmem>>, vector<128x128xbf16>
    %cst_210 = arith.constant dense<0.000000e+00> : vector<8x128xf32>
    %642 = tpu.matmul %640, %641, %cst_210 {dimension_numbers = #tpu.dot_dimension_numbers<[1], [0], [0], [1], [0, 0, 1, 1], [], []>} : vector<8x128xbf16>, vector<128x128xbf16>, vector<8x128xf32> -> vector<8x128xf32>
    %c0_211 = arith.constant 0 : index
    %c0_212 = arith.constant 0 : index
    %643 = vector.load %arg17[%c0_211, %c0_212] : memref<1x128xf32, #tpu.memory_space<vmem>>, vector<1x128xf32>
    %644 = vector.broadcast %643 : vector<1x128xf32> to vector<8x128xf32>
    %645 = arith.addf %642, %644 : vector<8x128xf32>
    %646 = math.tanh %645 : vector<8x128xf32>
    %647 = arith.truncf %646 : vector<8x128xf32> to vector<8x128xbf16>
    %c0_213 = arith.constant 0 : index
    %c0_214 = arith.constant 0 : index
    %648 = vector.load %arg18[%c0_213, %c0_214] : memref<128x128xbf16, #tpu.memory_space<vmem>>, vector<128x128xbf16>
    %cst_215 = arith.constant dense<0.000000e+00> : vector<8x128xf32>
    %649 = tpu.matmul %647, %648, %cst_215 {dimension_numbers = #tpu.dot_dimension_numbers<[1], [0], [0], [1], [0, 0, 1, 1], [], []>} : vector<8x128xbf16>, vector<128x128xbf16>, vector<8x128xf32> -> vector<8x128xf32>
    %c0_216 = arith.constant 0 : index
    %c0_217 = arith.constant 0 : index
    %650 = vector.load %arg19[%c0_216, %c0_217] : memref<1x128xf32, #tpu.memory_space<vmem>>, vector<1x128xf32>
    %651 = vector.broadcast %650 : vector<1x128xf32> to vector<8x128xf32>
    %652 = arith.addf %649, %651 : vector<8x128xf32>
    %c0_218 = arith.constant 0 : index
    %c0_219 = arith.constant 0 : index
    %653 = vector.load %arg20[%c0_218, %c0_219] : memref<8x128xf32, #tpu.memory_space<vmem>>, vector<8x128xf32>
    tpu.vector_store %arg20[%c0_218, %c0_219], %652 {strides = array<i32>} : memref<8x128xf32, #tpu.memory_space<vmem>>, vector<8x128xf32>,
    return
  }
}

</mosaic_0001>

<llo_original>
// kernel: vqa_forward.1
$region0: #{vqa_forward.1}
  #allocation0 [shape = 'u32[]', space=smem, size = 0x4, offset = 0x4, fixed_abs, tag = 'smem constant byte address 0x4 - core index']
  #allocation1 [shape = 'u32[144,128]{1,0:T(1,128)}', space=vmem, size = 0x12000, scoped, tag = 'internal scratch']
  #allocation2 [shape = 'f32[8,8,384]{2,1,0:T(8,128)}', space=vmem, size = 0x18000, scoped, tag = 'scratch operand']
  #allocation3 [shape = 'f32[8,8,128]{2,1,0:T(8,128)}', space=vmem, size = 0x8000, scoped, tag = 'scratch operand']
  #allocation4 [shape = 'f32[8,8,384]{2,1,0:T(8,128)}', space=vmem, size = 0x18000, scoped, tag = 'scratch operand']
  %s0 = inlined_call_operand.vmem [shape: f32[8,8,128], index: 0, kind: input, shape index: {}]
  %s1 = inlined_call_operand.vmem [shape: f32[8,128], index: 1, kind: input, shape index: {}]
  %s2 = inlined_call_operand.vmem [shape: bf16[128,384], index: 2, kind: input, shape index: {}]
  %s3 = inlined_call_operand.vmem [shape: bf16[128,384], index: 3, kind: input, shape index: {}]
  %s4 = inlined_call_operand.vmem [shape: f32[1,384], index: 4, kind: input, shape index: {}]
  %s5 = inlined_call_operand.vmem [shape: f32[1,384], index: 5, kind: input, shape index: {}]
  %s6 = inlined_call_operand.hbm [shape: bf16[128,128], index: 6, kind: input, shape index: {}]
  %s7 = inlined_call_operand.vmem [shape: f32[1,128], index: 7, kind: input, shape index: {}]
  %s8 = inlined_call_operand.hbm [shape: bf16[128,128], index: 8, kind: input, shape index: {}]
  %s9 = inlined_call_operand.hbm [shape: bf16[128,128], index: 9, kind: input, shape index: {}]
  %s10 = inlined_call_operand.vmem [shape: f32[1,128], index: 10, kind: input, shape index: {}]
  %s11 = inlined_call_operand.hbm [shape: bf16[128,384], index: 11, kind: input, shape index: {}]
  %s12 = inlined_call_operand.hbm [shape: bf16[128,384], index: 12, kind: input, shape index: {}]
  %s13 = inlined_call_operand.hbm [shape: bf16[128,384], index: 13, kind: input, shape index: {}]
  %s14 = inlined_call_operand.vmem [shape: f32[1,384], index: 14, kind: input, shape index: {}]
  %s15 = inlined_call_operand.vmem [shape: f32[1,384], index: 15, kind: input, shape index: {}]
  %s16 = inlined_call_operand.hbm [shape: bf16[128,128], index: 16, kind: input, shape index: {}]
  %s17 = inlined_call_operand.vmem [shape: f32[1,128], index: 17, kind: input, shape index: {}]
  %s18 = inlined_call_operand.hbm [shape: bf16[128,128], index: 18, kind: input, shape index: {}]
  %s19 = inlined_call_operand.vmem [shape: f32[1,128], index: 19, kind: input, shape index: {}]
  %s20 = inlined_call_operand.vmem [shape: f32[8,128], index: 20, kind: output, shape index: {}]
  %s21 = sld [smem:[#allocation0]]
  $region122: #{vqa_forward.1} parent=0
    _
  %s23 = ssub.s32 1, %s21
  %s24 = scalar_select 0, %s23, %s21
  $region1: #{vqa_forward.1} parent=0
    #allocation5 [shape = 'u8[32768]{0}', space=vmem, size = 0x8000, scoped, tag = 'input window, operand 6, single buffered']
    #allocation6 [shape = 's32[1]{0}', space=sflag, size = 0x4, scoped, tag = 'scoped memory for vqa_forward.1']
    #allocation7 [shape = 'u8[32768]{0}', space=vmem, size = 0x8000, scoped, tag = 'input window, operand 8, single buffered']
    #allocation8 [shape = 's32[1]{0}', space=sflag, size = 0x4, scoped, tag = 'scoped memory for vqa_forward.1']
    #allocation9 [shape = 'u8[32768]{0}', space=vmem, size = 0x8000, scoped, tag = 'input window, operand 9, single buffered']
    #allocation10 [shape = 'u8[98304]{0}', space=vmem, size = 0x18000, scoped, tag = 'input window, operand 11, single buffered']
    #allocation11 [shape = 's32[1]{0}', space=sflag, size = 0x4, scoped, tag = 'scoped memory for vqa_forward.1']
    #allocation12 [shape = 'u8[98304]{0}', space=vmem, size = 0x18000, scoped, tag = 'input window, operand 12, single buffered']
    #allocation13 [shape = 'u8[98304]{0}', space=vmem, size = 0x18000, scoped, tag = 'input window, operand 13, single buffered']
    #allocation14 [shape = 's32[1]{0}', space=sflag, size = 0x4, scoped, tag = 'scoped memory for vqa_forward.1']
    #allocation15 [shape = 'u8[32768]{0}', space=vmem, size = 0x8000, scoped, tag = 'input window, operand 16, single buffered']
    #allocation16 [shape = 'u8[32768]{0}', space=vmem, size = 0x8000, scoped, tag = 'input window, operand 18, single buffered']
    #allocation17 [shape = 's32[1]{0}', space=sflag, size = 0x4, scoped, tag = 'scoped memory for vqa_forward.1']
    %25 = vsyncpa [#allocation6], 0
    %26 = vsyncpa [#allocation8], 0
    %27 = vsyncpa [#allocation11], 0
    %28 = vsyncpa [#allocation14], 0
    %29 = vsyncpa [#allocation17], 0
    // Predicated region
    $region2: #{vqa_forward.1} parent=1 // pred_check
      _
    $region3: #{vqa_forward.1} parent=1 // pred_check_branch
      %31 = sbr.rel (0) target = $region5
    $region4: #{vqa_forward.1} parent=1 // pred_region
      _
    $region5: #{vqa_forward.1} parent=1 // pred_fallthru
      _
    // Predicated region
    $region6: #{vqa_forward.1} parent=1 // pred_check
      _
    $region7: #{vqa_forward.1} parent=1 // pred_check_branch
      %33 = sbr.rel (0) target = $region9
    $region8: #{vqa_forward.1} parent=1 // pred_region
      _
    $region9: #{vqa_forward.1} parent=1 // pred_fallthru
      _
    // Predicated region
    $region10: #{vqa_forward.1} parent=1 // pred_check
      _
    $region11: #{vqa_forward.1} parent=1 // pred_check_branch
      %35 = sbr.rel (0) target = $region13
    $region12: #{vqa_forward.1} parent=1 // pred_region
      _
    $region13: #{vqa_forward.1} parent=1 // pred_fallthru
      _
    // Predicated region
    $region14: #{vqa_forward.1} parent=1 // pred_check
      _
    $region15: #{vqa_forward.1} parent=1 // pred_check_branch
      %37 = sbr.rel (0) target = $region17
    $region16: #{vqa_forward.1} parent=1 // pred_region
      _
    $region17: #{vqa_forward.1} parent=1 // pred_fallthru
      _
    // Predicated region
    $region18: #{vqa_forward.1} parent=1 // pred_check
      _
    $region19: #{vqa_forward.1} parent=1 // pred_check_branch
      %39 = sbr.rel (0) target = $region21
    $region20: #{vqa_forward.1} parent=1 // pred_region
      _
    $region21: #{vqa_forward.1} parent=1 // pred_fallthru
      _
    // Predicated region
    $region22: #{vqa_forward.1} parent=1 // pred_check
      _
    $region23: #{vqa_forward.1} parent=1 // pred_check_branch
      %41 = sbr.rel (0) target = $region25
    $region24: #{vqa_forward.1} parent=1 // pred_region
      _
    $region25: #{vqa_forward.1} parent=1 // pred_fallthru
      _
    // Predicated region
    $region26: #{vqa_forward.1} parent=1 // pred_check
      _
    $region27: #{vqa_forward.1} parent=1 // pred_check_branch
      %43 = sbr.rel (0) target = $region29
    $region28: #{vqa_forward.1} parent=1 // pred_region
      %s45 = ssub.s32 1024, 1024
      %46 = vsyncadd [#allocation6], %s45
      %s47 = sshll.u32 [#allocation5], 4
      %s48 = int_to_ptr.vmem [resolvable:$true] %s47
      %53 = dma.hbm_to_vmem [thread:$0]  %s6, 1024, %s48, [#allocation6], 64, 64, 4
    $region29: #{vqa_forward.1} parent=1 // pred_fallthru
      _
    // Predicated region
    $region30: #{vqa_forward.1} parent=1 // pred_check
      _
    $region31: #{vqa_forward.1} parent=1 // pred_check_branch
      %55 = sbr.rel (0) target = $region33
    $region32: #{vqa_forward.1} parent=1 // pred_region
      _
    $region33: #{vqa_forward.1} parent=1 // pred_fallthru
      _
    // Predicated region
    $region34: #{vqa_forward.1} parent=1 // pred_check
      _
    $region35: #{vqa_forward.1} parent=1 // pred_check_branch
      %57 = sbr.rel (0) target = $region37
    $region36: #{vqa_forward.1} parent=1 // pred_region
      %s59 = ssub.s32 1024, 1024
      %60 = vsyncadd [#allocation8], %s59
      %s61 = sshll.u32 [#allocation7], 4
      %s62 = int_to_ptr.vmem [resolvable:$true] %s61
      %67 = dma.hbm_to_vmem [thread:$0]  %s8, 1024, %s62, [#allocation8], 64, 64, 4
    $region37: #{vqa_forward.1} parent=1 // pred_fallthru
      _
    // Predicated region
    $region38: #{vqa_forward.1} parent=1 // pred_check
      _
    $region39: #{vqa_forward.1} parent=1 // pred_check_branch
      %69 = sbr.rel (0) target = $region41
    $region40: #{vqa_forward.1} parent=1 // pred_region
      %s71 = ssub.s32 1024, 1024
      %72 = vsyncadd [#allocation8], %s71
      %s73 = sshll.u32 [#allocation9], 4
      %s74 = int_to_ptr.vmem [resolvable:$true] %s73
      %79 = dma.hbm_to_vmem [thread:$0]  %s9, 1024, %s74, [#allocation8], 64, 64, 4
    $region41: #{vqa_forward.1} parent=1 // pred_fallthru
      _
    // Predicated region
    $region42: #{vqa_forward.1} parent=1 // pred_check
      _
    $region43: #{vqa_forward.1} parent=1 // pred_check_branch
      %81 = sbr.rel (0) target = $region45
    $region44: #{vqa_forward.1} parent=1 // pred_region
      _
    $region45: #{vqa_forward.1} parent=1 // pred_fallthru
      _
    // Predicated region
    $region46: #{vqa_forward.1} parent=1 // pred_check
      _
    $region47: #{vqa_forward.1} parent=1 // pred_check_branch
      %83 = sbr.rel (0) target = $region49
    $region48: #{vqa_forward.1} parent=1 // pred_region
      %s85 = ssub.s32 3072, 3072
      %86 = vsyncadd [#allocation11], %s85
      %s87 = sshll.u32 [#allocation10], 4
      %s88 = int_to_ptr.vmem [resolvable:$true] %s87
      %93 = dma.hbm_to_vmem [thread:$0]  %s11, 3072, %s88, [#allocation11], 192, 192, 12
    $region49: #{vqa_forward.1} parent=1 // pred_fallthru
      _
    // Predicated region
    $region50: #{vqa_forward.1} parent=1 // pred_check
      _
    $region51: #{vqa_forward.1} parent=1 // pred_check_branch
      %95 = sbr.rel (0) target = $region53
    $region52: #{vqa_forward.1} parent=1 // pred_region
      %s97 = ssub.s32 3072, 3072
      %98 = vsyncadd [#allocation11], %s97
      %s99 = sshll.u32 [#allocation12], 4
      %s100 = int_to_ptr.vmem [resolvable:$true] %s99
      %105 = dma.hbm_to_vmem [thread:$0]  %s12, 3072, %s100, [#allocation11], 192, 192, 12
    $region53: #{vqa_forward.1} parent=1 // pred_fallthru
      _
    // Predicated region
    $region54: #{vqa_forward.1} parent=1 // pred_check
      _
    $region55: #{vqa_forward.1} parent=1 // pred_check_branch
      %107 = sbr.rel (0) target = $region57
    $region56: #{vqa_forward.1} parent=1 // pred_region
      %s109 = ssub.s32 3072, 3072
      %110 = vsyncadd [#allocation14], %s109
      %s111 = sshll.u32 [#allocation13], 4
      %s112 = int_to_ptr.vmem [resolvable:$true] %s111
      %117 = dma.hbm_to_vmem [thread:$0]  %s13, 3072, %s112, [#allocation14], 192, 192, 12
    $region57: #{vqa_forward.1} parent=1 // pred_fallthru
      _
    // Predicated region
    $region58: #{vqa_forward.1} parent=1 // pred_check
      _
    $region59: #{vqa_forward.1} parent=1 // pred_check_branch
      %119 = sbr.rel (0) target = $region61
    $region60: #{vqa_forward.1} parent=1 // pred_region
      _
    $region61: #{vqa_forward.1} parent=1 // pred_fallthru
      _
    // Predicated region
    $region62: #{vqa_forward.1} parent=1 // pred_check
      _
    $region63: #{vqa_forward.1} parent=1 // pred_check_branch
      %121 = sbr.rel (0) target = $region65
    $region64: #{vqa_forward.1} parent=1 // pred_region
      _
    $region65: #{vqa_forward.1} parent=1 // pred_fallthru
      _
    // Predicated region
    $region66: #{vqa_forward.1} parent=1 // pred_check
      _
    $region67: #{vqa_forward.1} parent=1 // pred_check_branch
      %123 = sbr.rel (0) target = $region69
    $region68: #{vqa_forward.1} parent=1 // pred_region
      %s125 = ssub.s32 1024, 1024
      %126 = vsyncadd [#allocation14], %s125
      %s127 = sshll.u32 [#allocation15], 4
      %s128 = int_to_ptr.vmem [resolvable:$true] %s127
      %133 = dma.hbm_to_vmem [thread:$0]  %s16, 1024, %s128, [#allocation14], 64, 64, 4
    $region69: #{vqa_forward.1} parent=1 // pred_fallthru
      _
    // Predicated region
    $region70: #{vqa_forward.1} parent=1 // pred_check
      _
    $region71: #{vqa_forward.1} parent=1 // pred_check_branch
      %135 = sbr.rel (0) target = $region73
    $region72: #{vqa_forward.1} parent=1 // pred_region
      _
    $region73: #{vqa_forward.1} parent=1 // pred_fallthru
      _
    // Predicated region
    $region74: #{vqa_forward.1} parent=1 // pred_check
      _
    $region75: #{vqa_forward.1} parent=1 // pred_check_branch
      %137 = sbr.rel (0) target = $region77
    $region76: #{vqa_forward.1} parent=1 // pred_region
      %s139 = ssub.s32 1024, 1024
      %140 = vsyncadd [#allocation17], %s139
      %s141 = sshll.u32 [#allocation16], 4
      %s142 = int_to_ptr.vmem [resolvable:$true] %s141
      %147 = dma.hbm_to_vmem [thread:$0]  %s18, 1024, %s142, [#allocation17], 64, 64, 4
    $region77: #{vqa_forward.1} parent=1 // pred_fallthru
      _
    // Predicated region
    $region78: #{vqa_forward.1} parent=1 // pred_check
      _
    $region79: #{vqa_forward.1} parent=1 // pred_check_branch
      %149 = sbr.rel (0) target = $region81
    $region80: #{vqa_forward.1} parent=1 // pred_region
      _
    $region81: #{vqa_forward.1} parent=1 // pred_fallthru
      _
    // Predicated region
    $region82: #{vqa_forward.1} parent=1 // pred_check
      _
    $region83: #{vqa_forward.1} parent=1 // pred_check_branch
      %151 = sbr.rel (0) target = $region85
    $region84: #{vqa_forward.1} parent=1 // pred_region
      %152 = dma.done [#allocation6], 1024
    $region85: #{vqa_forward.1} parent=1 // pred_fallthru
      _
    // Predicated region
    $region86: #{vqa_forward.1} parent=1 // pred_check
      _
    $region87: #{vqa_forward.1} parent=1 // pred_check_branch
      %154 = sbr.rel (0) target = $region89
    $region88: #{vqa_forward.1} parent=1 // pred_region
      %155 = dma.done [#allocation8], 1024
    $region89: #{vqa_forward.1} parent=1 // pred_fallthru
      _
    // Predicated region
    $region90: #{vqa_forward.1} parent=1 // pred_check
      _
    $region91: #{vqa_forward.1} parent=1 // pred_check_branch
      %157 = sbr.rel (0) target = $region93
    $region92: #{vqa_forward.1} parent=1 // pred_region
      %158 = dma.done [#allocation8], 1024
    $region93: #{vqa_forward.1} parent=1 // pred_fallthru
      _
    // Predicated region
    $region94: #{vqa_forward.1} parent=1 // pred_check
      _
    $region95: #{vqa_forward.1} parent=1 // pred_check_branch
      %160 = sbr.rel (0) target = $region97
    $region96: #{vqa_forward.1} parent=1 // pred_region
      %161 = dma.done [#allocation11], 3072
    $region97: #{vqa_forward.1} parent=1 // pred_fallthru
      _
    // Predicated region
    $region98: #{vqa_forward.1} parent=1 // pred_check
      _
    $region99: #{vqa_forward.1} parent=1 // pred_check_branch
      %163 = sbr.rel (0) target = $region101
    $region100: #{vqa_forward.1} parent=1 // pred_region
      %164 = dma.done [#allocation11], 3072
    $region101: #{vqa_forward.1} parent=1 // pred_fallthru
      _
    // Predicated region
    $region102: #{vqa_forward.1} parent=1 // pred_check
      _
    $region103: #{vqa_forward.1} parent=1 // pred_check_branch
      %166 = sbr.rel (0) target = $region105
    $region104: #{vqa_forward.1} parent=1 // pred_region
      %167 = dma.done [#allocation14], 3072
    $region105: #{vqa_forward.1} parent=1 // pred_fallthru
      _
    // Predicated region
    $region106: #{vqa_forward.1} parent=1 // pred_check
      _
    $region107: #{vqa_forward.1} parent=1 // pred_check_branch
      %169 = sbr.rel (0) target = $region109
    $region108: #{vqa_forward.1} parent=1 // pred_region
      %170 = dma.done [#allocation14], 1024
    $region109: #{vqa_forward.1} parent=1 // pred_fallthru
      _
    // Predicated region
    $region110: #{vqa_forward.1} parent=1 // pred_check
      _
    $region111: #{vqa_forward.1} parent=1 // pred_check_branch
      %172 = sbr.rel (0) target = $region113
    $region112: #{vqa_forward.1} parent=1 // pred_region
      %173 = dma.done [#allocation17], 1024
    $region113: #{vqa_forward.1} parent=1 // pred_fallthru
      _
    %v175 = vld [vmem:[%s0] sm:$0xff]
    %v176 = vld [vmem:[%s0 + $0x8] sm:$0xff]
    %v177 = vld [vmem:[%s0 + $0x10] sm:$0xff]
    %v178 = vld [vmem:[%s0 + $0x18] sm:$0xff]
    %v179 = vld [vmem:[%s0 + $0x20] sm:$0xff]
    %v180 = vld [vmem:[%s0 + $0x28] sm:$0xff]
    %v181 = vld [vmem:[%s0 + $0x30] sm:$0xff]
    %v182 = vld [vmem:[%s0 + $0x38] sm:$0xff]
    %v183 = vtanh.pop %v175
    %v184 = vtanh.pop %v176
    %v185 = vtanh.pop %v177
    %v186 = vtanh.pop %v178
    %v187 = vtanh.pop %v179
    %v188 = vtanh.pop %v180
    %v189 = vtanh.pop %v181
    %v190 = vtanh.pop %v182
    %v191 = vpack.c.bf16 %v184, %v183
    %v192 = vpack.c.bf16 %v186, %v185
    %v193 = vpack.c.bf16 %v188, %v187
    %v194 = vpack.c.bf16 %v190, %v189
    %v195 = vld [vmem:[%s2] sm:$0xff]
    %v196 = vld [vmem:[%s2 + $0x8] sm:$0xf]
    %v197 = vld [vmem:[%s2 + $0xc] sm:$0xff]
    %v198 = vld [vmem:[%s2 + $0x14] sm:$0xf]
    %v199 = vld [vmem:[%s2 + $0x18] sm:$0xff]
    %v200 = vld [vmem:[%s2 + $0x20] sm:$0xf]
    %v201 = vld [vmem:[%s2 + $0x24] sm:$0xff]
    %v202 = vld [vmem:[%s2 + $0x2c] sm:$0xf]
    %v203 = vld [vmem:[%s2 + $0x30] sm:$0xff]
    %v204 = vld [vmem:[%s2 + $0x38] sm:$0xf]
    %v205 = vld [vmem:[%s2 + $0x3c] sm:$0xff]
    %v206 = vld [vmem:[%s2 + $0x44] sm:$0xf]
    %v207 = vld [vmem:[%s2 + $0x48] sm:$0xff]
    %v208 = vld [vmem:[%s2 + $0x50] sm:$0xf]
    %v209 = vld [vmem:[%s2 + $0x54] sm:$0xff]
    %v210 = vld [vmem:[%s2 + $0x5c] sm:$0xf]
    %v211 = vld [vmem:[%s2 + $0x60] sm:$0xff]
    %v212 = vld [vmem:[%s2 + $0x68] sm:$0xf]
    %v213 = vld [vmem:[%s2 + $0x6c] sm:$0xff]
    %v214 = vld [vmem:[%s2 + $0x74] sm:$0xf]
    %v215 = vld [vmem:[%s2 + $0x78] sm:$0xff]
    %v216 = vld [vmem:[%s2 + $0x80] sm:$0xf]
    %v217 = vld [vmem:[%s2 + $0x84] sm:$0xff]
    %v218 = vld [vmem:[%s2 + $0x8c] sm:$0xf]
    %v219 = vld [vmem:[%s2 + $0x90] sm:$0xff]
    %v220 = vld [vmem:[%s2 + $0x98] sm:$0xf]
    %v221 = vld [vmem:[%s2 + $0x9c] sm:$0xff]
    %v222 = vld [vmem:[%s2 + $0xa4] sm:$0xf]
    %v223 = vld [vmem:[%s2 + $0xa8] sm:$0xff]
    %v224 = vld [vmem:[%s2 + $0xb0] sm:$0xf]
    %v225 = vld [vmem:[%s2 + $0xb4] sm:$0xff]
    %v226 = vld [vmem:[%s2 + $0xbc] sm:$0xf]
    %v227 = vld [vmem:[%s4] sm:$0x7]
    %v229 = vlaneseq
    %v230 = vshrl.u32 %v229, 7
    %v231 = vsub.s32 0, %v230
    %v232 = vrot.slane %v227, %v231
    %v233 = vlaneseq
    %v234 = vshrl.u32 %v233, 7
    %v235 = vsub.s32 1, %v234
    %v236 = vrot.slane %v227, %v235
    %v237 = vlaneseq
    %v238 = vshrl.u32 %v237, 7
    %v239 = vsub.s32 2, %v238
    %v240 = vrot.slane %v227, %v239
    %v276 = vunpack.c.l.b16 %v195
    %v277 = vunpack.c.h.b16 %v195
    %v278 = vunpack.c.l.b16 %v196
    %v279 = vunpack.c.l.b16 %v197
    %v280 = vunpack.c.h.b16 %v197
    %v281 = vunpack.c.l.b16 %v198
    %v282 = vunpack.c.l.b16 %v199
    %v283 = vunpack.c.h.b16 %v199
    %v284 = vunpack.c.l.b16 %v200
    %v285 = vunpack.c.l.b16 %v201
    %v286 = vunpack.c.h.b16 %v201
    %v287 = vunpack.c.l.b16 %v202
    %v288 = vunpack.c.l.b16 %v203
    %v289 = vunpack.c.h.b16 %v203
    %v290 = vunpack.c.l.b16 %v204
    %v291 = vunpack.c.l.b16 %v205
    %v292 = vunpack.c.h.b16 %v205
    %v293 = vunpack.c.l.b16 %v206
    %v294 = vunpack.c.l.b16 %v207
    %v295 = vunpack.c.h.b16 %v207
    %v296 = vunpack.c.l.b16 %v208
    %v297 = vunpack.c.l.b16 %v209
    %v298 = vunpack.c.h.b16 %v209
    %v299 = vunpack.c.l.b16 %v210
    %v300 = vunpack.c.l.b16 %v211
    %v301 = vunpack.c.h.b16 %v211
    %v302 = vunpack.c.l.b16 %v212
    %v303 = vunpack.c.l.b16 %v213
    %v304 = vunpack.c.h.b16 %v213
    %v305 = vunpack.c.l.b16 %v214
    %v306 = vunpack.c.l.b16 %v215
    %v307 = vunpack.c.h.b16 %v215
    %v308 = vunpack.c.l.b16 %v216
    %v309 = vunpack.c.l.b16 %v217
    %v310 = vunpack.c.h.b16 %v217
    %v311 = vunpack.c.l.b16 %v218
    %v312 = vunpack.c.l.b16 %v219
    %v313 = vunpack.c.h.b16 %v219
    %v314 = vunpack.c.l.b16 %v220
    %v315 = vunpack.c.l.b16 %v221
    %v316 = vunpack.c.h.b16 %v221
    %v317 = vunpack.c.l.b16 %v222
    %v318 = vunpack.c.l.b16 %v223
    %v319 = vunpack.c.h.b16 %v223
    %v320 = vunpack.c.l.b16 %v224
    %v321 = vunpack.c.l.b16 %v225
    %v322 = vunpack.c.h.b16 %v225
    %v323 = vunpack.c.l.b16 %v226
    %v324 = vpack.c.b16 %v279, %v276
    %v325 = vpack.c.b16 %v280, %v277
    %v326 = vpack.c.b16 %v281, %v278
    %v327 = vpack.c.b16 %v285, %v282
    %v328 = vpack.c.b16 %v286, %v283
    %v329 = vpack.c.b16 %v287, %v284
    %v330 = vpack.c.b16 %v291, %v288
    %v331 = vpack.c.b16 %v292, %v289
    %v332 = vpack.c.b16 %v293, %v290
    %v333 = vpack.c.b16 %v297, %v294
    %v334 = vpack.c.b16 %v298, %v295
    %v335 = vpack.c.b16 %v299, %v296
    %v336 = vpack.c.b16 %v303, %v300
    %v337 = vpack.c.b16 %v304, %v301
    %v338 = vpack.c.b16 %v305, %v302
    %v339 = vpack.c.b16 %v309, %v306
    %v340 = vpack.c.b16 %v310, %v307
    %v341 = vpack.c.b16 %v311, %v308
    %v342 = vpack.c.b16 %v315, %v312
    %v343 = vpack.c.b16 %v316, %v313
    %v344 = vpack.c.b16 %v317, %v314
    %v345 = vpack.c.b16 %v321, %v318
    %v346 = vpack.c.b16 %v322, %v319
    %v347 = vpack.c.b16 %v323, %v320
    %372 = vmatprep.subr.bf16.mxu0 %v325
    %373 = vmatpush1.bf16.msra.mxu0 %v324
    %374 = vmatprep.subr.bf16.mxu0 %v328
    %375 = vmatpush1.bf16.msra.mxu0 %v327
    %376 = vmatprep.subr.bf16.mxu0 %v331
    %377 = vmatpush1.bf16.msra.mxu0 %v330
    %378 = vmatprep.subr.bf16.mxu0 %v334
    %379 = vmatpush1.bf16.msra.mxu0 %v333
    %380 = vmatprep.subr.bf16.mxu0 %v337
    %381 = vmatpush1.bf16.msra.mxu0 %v336
    %382 = vmatprep.subr.bf16.mxu0 %v340
    %383 = vmatpush1.bf16.msra.mxu0 %v339
    %384 = vmatprep.subr.bf16.mxu0 %v343
    %385 = vmatpush1.bf16.msra.mxu0 %v342
    %386 = vmatprep.subr.bf16.mxu0 %v346
    %387 = vmatpush1.bf16.msra.mxu0 %v345
    %388 = vmatprep.subr.bf16.mxu0 0
    %389 = vmatpush1.bf16.msra.mxu0 0
    %390 = vmatprep.subr.bf16.mxu0 0
    %391 = vmatpush1.bf16.msra.mxu0 0
    %392 = vmatprep.subr.bf16.mxu0 0
    %393 = vmatpush1.bf16.msra.mxu0 0
    %394 = vmatprep.subr.bf16.mxu0 0
    %395 = vmatpush1.bf16.msra.mxu0 0
    %396 = vmatprep.subr.bf16.mxu0 0
    %397 = vmatpush1.bf16.msra.mxu0 0
    %398 = vmatprep.subr.bf16.mxu0 0
    %399 = vmatpush1.bf16.msra.mxu0 0
    %400 = vmatprep.subr.bf16.mxu0 0
    %401 = vmatpush1.bf16.msra.mxu0 0
    %402 = vmatprep.subr.bf16.mxu0 0
    %403 = vmatpush1.bf16.msra.mxu0 0
    %404 = vmatprep.mubr.bf16.mxu0 0
    %405 = vmatmul.mubr.bf16.gmra.mrb[0].mxu0 %v191
    %v406 = vpop.f32.mrb[0].mxu0
    %v407 = vadd.f32 %v232, %v406
    %v408 = vpop.f32.mrb[0].mxu0
    %v409 = vadd.f32 %v236, %v408
    %v410 = vpop.f32.mrb[0].mxu0
    %v411 = vadd.f32 %v232, %v410
    %v412 = vpop.f32.mrb[0].mxu0
    %v413 = vadd.f32 %v236, %v412
    %414 = vmatprep.mubr.bf16.mxu0 0
    %415 = vmatmul.mubr.bf16.gmra.mrb[0].mxu0 %v192
    %v416 = vpop.f32.mrb[0].mxu0
    %v417 = vadd.f32 %v232, %v416
    %v418 = vpop.f32.mrb[0].mxu0
    %v419 = vadd.f32 %v236, %v418
    %v420 = vpop.f32.mrb[0].mxu0
    %v421 = vadd.f32 %v232, %v420
    %v422 = vpop.f32.mrb[0].mxu0
    %v423 = vadd.f32 %v236, %v422
    %424 = vmatprep.mubr.bf16.mxu0 0
    %425 = vmatmul.mubr.bf16.gmra.mrb[0].mxu0 %v193
    %v426 = vpop.f32.mrb[0].mxu0
    %v427 = vadd.f32 %v232, %v426
    %v428 = vpop.f32.mrb[0].mxu0
    %v429 = vadd.f32 %v236, %v428
    %v430 = vpop.f32.mrb[0].mxu0
    %v431 = vadd.f32 %v232, %v430
    %v432 = vpop.f32.mrb[0].mxu0
    %v433 = vadd.f32 %v236, %v432
    %434 = vmatprep.mubr.bf16.mxu0 0
    %435 = vmatmul.mubr.bf16.gmra.mrb[0].mxu0 %v194
    %v436 = vpop.f32.mrb[0].mxu0
    %v437 = vadd.f32 %v232, %v436
    %v438 = vpop.f32.mrb[0].mxu0
    %v439 = vadd.f32 %v236, %v438
    %v440 = vpop.f32.mrb[0].mxu0
    %v441 = vadd.f32 %v232, %v440
    %v442 = vpop.f32.mrb[0].mxu0
    %v443 = vadd.f32 %v236, %v442
    %444 = vdwg.mxu0
    %445 = vmatprep.subr.bf16.mxu0 0
    %446 = vmatpush1.bf16.msra.mxu0 %v326
    %447 = vmatprep.subr.bf16.mxu0 0
    %448 = vmatpush1.bf16.msra.mxu0 %v329
    %449 = vmatprep.subr.bf16.mxu0 0
    %450 = vmatpush1.bf16.msra.mxu0 %v332
    %451 = vmatprep.subr.bf16.mxu0 0
    %452 = vmatpush1.bf16.msra.mxu0 %v335
    %453 = vmatprep.subr.bf16.mxu0 0
    %454 = vmatpush1.bf16.msra.mxu0 %v338
    %455 = vmatprep.subr.bf16.mxu0 0
    %456 = vmatpush1.bf16.msra.mxu0 %v341
    %457 = vmatprep.subr.bf16.mxu0 0
    %458 = vmatpush1.bf16.msra.mxu0 %v344
    %459 = vmatprep.subr.bf16.mxu0 0
    %460 = vmatpush1.bf16.msra.mxu0 %v347
    %461 = vmatprep.subr.bf16.mxu0 0
    %462 = vmatpush1.bf16.msra.mxu0 0
    %463 = vmatprep.subr.bf16.mxu0 0
    %464 = vmatpush1.bf16.msra.mxu0 0
    %465 = vmatprep.subr.bf16.mxu0 0
    %466 = vmatpush1.bf16.msra.mxu0 0
    %467 = vmatprep.subr.bf16.mxu0 0
    %468 = vmatpush1.bf16.msra.mxu0 0
    %469 = vmatprep.subr.bf16.mxu0 0
    %470 = vmatpush1.bf16.msra.mxu0 0
    %471 = vmatprep.subr.bf16.mxu0 0
    %472 = vmatpush1.bf16.msra.mxu0 0
    %473 = vmatprep.subr.bf16.mxu0 0
    %474 = vmatpush1.bf16.msra.mxu0 0
    %475 = vmatprep.subr.bf16.mxu0 0
    %476 = vmatpush1.bf16.msra.mxu0 0
    %477 = vmatprep.mubr.bf16.mxu0 0
    %478 = vmatmul.mubr.bf16.gmra.mrb[0].mxu0 %v191
    %v479 = vpop.f32.mrb[0].mxu0
    %v480 = vadd.f32 %v240, %v479
    %v481 = vpop.f32.mrb[0].mxu0
    %v482 = vpop.f32.mrb[0].mxu0
    %v483 = vadd.f32 %v240, %v482
    %v484 = vpop.f32.mrb[0].mxu0
    %485 = vmatprep.mubr.bf16.mxu0 0
    %486 = vmatmul.mubr.bf16.gmra.mrb[0].mxu0 %v192
    %v487 = vpop.f32.mrb[0].mxu0
    %v488 = vadd.f32 %v240, %v487
    %v489 = vpop.f32.mrb[0].mxu0
    %v490 = vpop.f32.mrb[0].mxu0
    %v491 = vadd.f32 %v240, %v490
    %v492 = vpop.f32.mrb[0].mxu0
    %493 = vmatprep.mubr.bf16.mxu0 0
    %494 = vmatmul.mubr.bf16.gmra.mrb[0].mxu0 %v193
    %v495 = vpop.f32.mrb[0].mxu0
    %v496 = vadd.f32 %v240, %v495
    %v497 = vpop.f32.mrb[0].mxu0
    %v498 = vpop.f32.mrb[0].mxu0
    %v499 = vadd.f32 %v240, %v498
    %v500 = vpop.f32.mrb[0].mxu0
    %501 = vmatprep.mubr.bf16.mxu0 0
    %502 = vmatmul.mubr.bf16.gmra.mrb[0].mxu0 %v194
    %v503 = vpop.f32.mrb[0].mxu0
    %v504 = vadd.f32 %v240, %v503
    %v505 = vpop.f32.mrb[0].mxu0
    %v506 = vpop.f32.mrb[0].mxu0
    %v507 = vadd.f32 %v240, %v506
    %v508 = vpop.f32.mrb[0].mxu0
    %509 = vdwg.mxu0
    %510 = vst [vmem:[#allocation2] sm:$0xff] %v407
    %511 = vst [vmem:[#allocation2 + $0x8] sm:$0xff] %v409
    %512 = vst [vmem:[#allocation2 + $0x10] sm:$0xff] %v480
    %513 = vst [vmem:[#allocation2 + $0x18] sm:$0xff] %v411
    %514 = vst [vmem:[#allocation2 + $0x20] sm:$0xff] %v413
    %515 = vst [vmem:[#allocation2 + $0x28] sm:$0xff] %v483
    %516 = vst [vmem:[#allocation2 + $0x30] sm:$0xff] %v417
    %517 = vst [vmem:[#allocation2 + $0x38] sm:$0xff] %v419
    %518 = vst [vmem:[#allocation2 + $0x40] sm:$0xff] %v488
    %519 = vst [vmem:[#allocation2 + $0x48] sm:$0xff] %v421
    %520 = vst [vmem:[#allocation2 + $0x50] sm:$0xff] %v423
    %521 = vst [vmem:[#allocation2 + $0x58] sm:$0xff] %v491
    %522 = vst [vmem:[#allocation2 + $0x60] sm:$0xff] %v427
    %523 = vst [vmem:[#allocation2 + $0x68] sm:$0xff] %v429
    %524 = vst [vmem:[#allocation2 + $0x70] sm:$0xff] %v496
    %525 = vst [vmem:[#allocation2 + $0x78] sm:$0xff] %v431
    %526 = vst [vmem:[#allocation2 + $0x80] sm:$0xff] %v433
    %527 = vst [vmem:[#allocation2 + $0x88] sm:$0xff] %v499
    %528 = vst [vmem:[#allocation2 + $0x90] sm:$0xff] %v437
    %529 = vst [vmem:[#allocation2 + $0x98] sm:$0xff] %v439
    %530 = vst [vmem:[#allocation2 + $0xa0] sm:$0xff] %v504
    %531 = vst [vmem:[#allocation2 + $0xa8] sm:$0xff] %v441
    %532 = vst [vmem:[#allocation2 + $0xb0] sm:$0xff] %v443
    %533 = vst [vmem:[#allocation2 + $0xb8] sm:$0xff] %v507
    %v534 = vld [vmem:[%s5] sm:$0x7]
    %v535 = vld [vmem:[#allocation2] sm:$0xff]
    %v536 = vld [vmem:[#allocation2 + $0x8] sm:$0xff]
    %v537 = vld [vmem:[#allocation2 + $0x10] sm:$0xff]
    %v538 = vld [vmem:[%s3] sm:$0xff]
    %v539 = vld [vmem:[%s3 + $0x8] sm:$0xf]
    %v540 = vld [vmem:[%s3 + $0xc] sm:$0xff]
    %v541 = vld [vmem:[%s3 + $0x14] sm:$0xf]
    %v542 = vld [vmem:[%s3 + $0x18] sm:$0xff]
    %v543 = vld [vmem:[%s3 + $0x20] sm:$0xf]
    %v544 = vld [vmem:[%s3 + $0x24] sm:$0xff]
    %v545 = vld [vmem:[%s3 + $0x2c] sm:$0xf]
    %v546 = vld [vmem:[%s3 + $0x30] sm:$0xff]
    %v547 = vld [vmem:[%s3 + $0x38] sm:$0xf]
    %v548 = vld [vmem:[%s3 + $0x3c] sm:$0xff]
    %v549 = vld [vmem:[%s3 + $0x44] sm:$0xf]
    %v550 = vld [vmem:[%s3 + $0x48] sm:$0xff]
    %v551 = vld [vmem:[%s3 + $0x50] sm:$0xf]
    %v552 = vld [vmem:[%s3 + $0x54] sm:$0xff]
    %v553 = vld [vmem:[%s3 + $0x5c] sm:$0xf]
    %v554 = vld [vmem:[%s3 + $0x60] sm:$0xff]
    %v555 = vld [vmem:[%s3 + $0x68] sm:$0xf]
    %v556 = vld [vmem:[%s3 + $0x6c] sm:$0xff]
    %v557 = vld [vmem:[%s3 + $0x74] sm:$0xf]
    %v558 = vld [vmem:[%s3 + $0x78] sm:$0xff]
    %v559 = vld [vmem:[%s3 + $0x80] sm:$0xf]
    %v560 = vld [vmem:[%s3 + $0x84] sm:$0xff]
    %v561 = vld [vmem:[%s3 + $0x8c] sm:$0xf]
    %v562 = vld [vmem:[%s3 + $0x90] sm:$0xff]
    %v563 = vld [vmem:[%s3 + $0x98] sm:$0xf]
    %v564 = vld [vmem:[%s3 + $0x9c] sm:$0xff]
    %v565 = vld [vmem:[%s3 + $0xa4] sm:$0xf]
    %v566 = vld [vmem:[%s3 + $0xa8] sm:$0xff]
    %v567 = vld [vmem:[%s3 + $0xb0] sm:$0xf]
    %v568 = vld [vmem:[%s3 + $0xb4] sm:$0xff]
    %v569 = vld [vmem:[%s3 + $0xbc] sm:$0xf]
    %v571 = vlaneseq
    %v572 = vshrl.u32 %v571, 7
    %v573 = vsub.s32 0, %v572
    %v574 = vrot.slane %v534, %v573
    %v575 = vlaneseq
    %v576 = vshrl.u32 %v575, 7
    %v577 = vsub.s32 1, %v576
    %v578 = vrot.slane %v534, %v577
    %v579 = vlaneseq
    %v580 = vshrl.u32 %v579, 7
    %v581 = vsub.s32 2, %v580
    %v582 = vrot.slane %v534, %v581
    %v618 = vunpack.c.l.b16 %v538
    %v619 = vunpack.c.h.b16 %v538
    %v620 = vunpack.c.l.b16 %v539
    %v621 = vunpack.c.l.b16 %v540
    %v622 = vunpack.c.h.b16 %v540
    %v623 = vunpack.c.l.b16 %v541
    %v624 = vunpack.c.l.b16 %v542
    %v625 = vunpack.c.h.b16 %v542
    %v626 = vunpack.c.l.b16 %v543
    %v627 = vunpack.c.l.b16 %v544
    %v628 = vunpack.c.h.b16 %v544
    %v629 = vunpack.c.l.b16 %v545
    %v630 = vunpack.c.l.b16 %v546
    %v631 = vunpack.c.h.b16 %v546
    %v632 = vunpack.c.l.b16 %v547
    %v633 = vunpack.c.l.b16 %v548
    %v634 = vunpack.c.h.b16 %v548
    %v635 = vunpack.c.l.b16 %v549
    %v636 = vunpack.c.l.b16 %v550
    %v637 = vunpack.c.h.b16 %v550
    %v638 = vunpack.c.l.b16 %v551
    %v639 = vunpack.c.l.b16 %v552
    %v640 = vunpack.c.h.b16 %v552
    %v641 = vunpack.c.l.b16 %v553
    %v642 = vunpack.c.l.b16 %v554
    %v643 = vunpack.c.h.b16 %v554
    %v644 = vunpack.c.l.b16 %v555
    %v645 = vunpack.c.l.b16 %v556
    %v646 = vunpack.c.h.b16 %v556
    %v647 = vunpack.c.l.b16 %v557
    %v648 = vunpack.c.l.b16 %v558
    %v649 = vunpack.c.h.b16 %v558
    %v650 = vunpack.c.l.b16 %v559
    %v651 = vunpack.c.l.b16 %v560
    %v652 = vunpack.c.h.b16 %v560
    %v653 = vunpack.c.l.b16 %v561
    %v654 = vunpack.c.l.b16 %v562
    %v655 = vunpack.c.h.b16 %v562
    %v656 = vunpack.c.l.b16 %v563
    %v657 = vunpack.c.l.b16 %v564
    %v658 = vunpack.c.h.b16 %v564
    %v659 = vunpack.c.l.b16 %v565
    %v660 = vunpack.c.l.b16 %v566
    %v661 = vunpack.c.h.b16 %v566
    %v662 = vunpack.c.l.b16 %v567
    %v663 = vunpack.c.l.b16 %v568
    %v664 = vunpack.c.h.b16 %v568
    %v665 = vunpack.c.l.b16 %v569
    %v666 = vpack.c.b16 %v621, %v618
    %v667 = vpack.c.b16 %v622, %v619
    %v668 = vpack.c.b16 %v623, %v620
    %v669 = vpack.c.b16 %v627, %v624
    %v670 = vpack.c.b16 %v628, %v625
    %v671 = vpack.c.b16 %v629, %v626
    %v672 = vpack.c.b16 %v633, %v630
    %v673 = vpack.c.b16 %v634, %v631
    %v674 = vpack.c.b16 %v635, %v632
    %v675 = vpack.c.b16 %v639, %v636
    %v676 = vpack.c.b16 %v640, %v637
    %v677 = vpack.c.b16 %v641, %v638
    %v678 = vpack.c.b16 %v645, %v642
    %v679 = vpack.c.b16 %v646, %v643
    %v680 = vpack.c.b16 %v647, %v644
    %v681 = vpack.c.b16 %v651, %v648
    %v682 = vpack.c.b16 %v652, %v649
    %v683 = vpack.c.b16 %v653, %v650
    %v684 = vpack.c.b16 %v657, %v654
    %v685 = vpack.c.b16 %v658, %v655
    %v686 = vpack.c.b16 %v659, %v656
    %v687 = vpack.c.b16 %v663, %v660
    %v688 = vpack.c.b16 %v664, %v661
    %v689 = vpack.c.b16 %v665, %v662
    %714 = vmatprep.subr.bf16.mxu0 %v667
    %715 = vmatpush1.bf16.msra.mxu0 %v666
    %716 = vmatprep.subr.bf16.mxu0 %v670
    %717 = vmatpush1.bf16.msra.mxu0 %v669
    %718 = vmatprep.subr.bf16.mxu0 %v673
    %719 = vmatpush1.bf16.msra.mxu0 %v672
    %720 = vmatprep.subr.bf16.mxu0 %v676
    %721 = vmatpush1.bf16.msra.mxu0 %v675
    %722 = vmatprep.subr.bf16.mxu0 %v679
    %723 = vmatpush1.bf16.msra.mxu0 %v678
    %724 = vmatprep.subr.bf16.mxu0 %v682
    %725 = vmatpush1.bf16.msra.mxu0 %v681
    %726 = vmatprep.subr.bf16.mxu0 %v685
    %727 = vmatpush1.bf16.msra.mxu0 %v684
    %728 = vmatprep.subr.bf16.mxu0 %v688
    %729 = vmatpush1.bf16.msra.mxu0 %v687
    %730 = vmatprep.subr.bf16.mxu0 0
    %731 = vmatpush1.bf16.msra.mxu0 0
    %732 = vmatprep.subr.bf16.mxu0 0
    %733 = vmatpush1.bf16.msra.mxu0 0
    %734 = vmatprep.subr.bf16.mxu0 0
    %735 = vmatpush1.bf16.msra.mxu0 0
    %736 = vmatprep.subr.bf16.mxu0 0
    %737 = vmatpush1.bf16.msra.mxu0 0
    %738 = vmatprep.subr.bf16.mxu0 0
    %739 = vmatpush1.bf16.msra.mxu0 0
    %740 = vmatprep.subr.bf16.mxu0 0
    %741 = vmatpush1.bf16.msra.mxu0 0
    %742 = vmatprep.subr.bf16.mxu0 0
    %743 = vmatpush1.bf16.msra.mxu0 0
    %744 = vmatprep.subr.bf16.mxu0 0
    %745 = vmatpush1.bf16.msra.mxu0 0
    %746 = vmatprep.mubr.bf16.mxu0 0
    %747 = vmatmul.mubr.bf16.gmra.mrb[0].mxu0 0
    %v748 = vpop.f32.mrb[0].mxu0
    %v749 = vadd.f32 %v574, %v748
    %v750 = vpop.f32.mrb[0].mxu0
    %v751 = vadd.f32 %v578, %v750
    %v752 = vpop.f32.mrb[0].mxu0
    %v753 = vpop.f32.mrb[0].mxu0
    %754 = vdwg.mxu0
    %755 = vmatprep.subr.bf16.mxu0 0
    %756 = vmatpush1.bf16.msra.mxu0 %v668
    %757 = vmatprep.subr.bf16.mxu0 0
    %758 = vmatpush1.bf16.msra.mxu0 %v671
    %759 = vmatprep.subr.bf16.mxu0 0
    %760 = vmatpush1.bf16.msra.mxu0 %v674
    %761 = vmatprep.subr.bf16.mxu0 0
    %762 = vmatpush1.bf16.msra.mxu0 %v677
    %763 = vmatprep.subr.bf16.mxu0 0
    %764 = vmatpush1.bf16.msra.mxu0 %v680
    %765 = vmatprep.subr.bf16.mxu0 0
    %766 = vmatpush1.bf16.msra.mxu0 %v683
    %767 = vmatprep.subr.bf16.mxu0 0
    %768 = vmatpush1.bf16.msra.mxu0 %v686
    %769 = vmatprep.subr.bf16.mxu0 0
    %770 = vmatpush1.bf16.msra.mxu0 %v689
    %771 = vmatprep.subr.bf16.mxu0 0
    %772 = vmatpush1.bf16.msra.mxu0 0
    %773 = vmatprep.subr.bf16.mxu0 0
    %774 = vmatpush1.bf16.msra.mxu0 0
    %775 = vmatprep.subr.bf16.mxu0 0
    %776 = vmatpush1.bf16.msra.mxu0 0
    %777 = vmatprep.subr.bf16.mxu0 0
    %778 = vmatpush1.bf16.msra.mxu0 0
    %779 = vmatprep.subr.bf16.mxu0 0
    %780 = vmatpush1.bf16.msra.mxu0 0
    %781 = vmatprep.subr.bf16.mxu0 0
    %782 = vmatpush1.bf16.msra.mxu0 0
    %783 = vmatprep.subr.bf16.mxu0 0
    %784 = vmatpush1.bf16.msra.mxu0 0
    %785 = vmatprep.subr.bf16.mxu0 0
    %786 = vmatpush1.bf16.msra.mxu0 0
    %787 = vmatprep.mubr.bf16.mxu0 0
    %788 = vmatmul.mubr.bf16.gmra.mrb[0].mxu0 0
    %v789 = vpop.f32.mrb[0].mxu0
    %v790 = vadd.f32 %v582, %v789
    %v791 = vpop.f32.mrb[0].mxu0
    %v792 = vpop.f32.mrb[0].mxu0
    %v793 = vpop.f32.mrb[0].mxu0
    %794 = vdwg.mxu0
    %v795 = vadd.f32 %v535, %v749
    %v796 = vxor.u32 %v795, 2147483648
    %v797 = vmul.f32 %v796, 1.442695
    %v798 = vpow.pop %v797
    %v799 = vadd.f32 %v798, 1.0
    %v800 = vrcp.pop %v799
    %v801 = vmul.f32 1.0, %v800
    %v802 = vadd.f32 %v536, %v751
    %v803 = vxor.u32 %v802, 2147483648
    %v804 = vmul.f32 %v803, 1.442695
    %v805 = vpow.pop %v804
    %v806 = vadd.f32 %v805, 1.0
    %v807 = vrcp.pop %v806
    %v808 = vmul.f32 1.0, %v807
    %v809 = vmul.f32 %v801, %v790
    %v810 = vadd.f32 %v537, %v809
    %v811 = vtanh.pop %v810
    %v812 = vsub.f32 1.0, %v808
    %v813 = vmul.f32 %v812, %v811
    %v814 = vmul.f32 %v808, 0.0
    %v815 = vadd.f32 %v813, %v814
    %816 = vst [vmem:[#allocation3] sm:$0xff] %v815
    %s817 = scalar_lea.vmem [#allocation2], 24
    %v818 = vld [vmem:[%s817] sm:$0xff]
    %v819 = vld [vmem:[%s817 + $0x8] sm:$0xff]
    %v820 = vld [vmem:[%s817 + $0x10] sm:$0xff]
    %v821 = vpack.c.bf16 %v815, %v815
    %v822 = vld [vmem:[%s3] sm:$0xff]
    %v823 = vld [vmem:[%s3 + $0x8] sm:$0xf]
    %v824 = vld [vmem:[%s3 + $0xc] sm:$0xff]
    %v825 = vld [vmem:[%s3 + $0x14] sm:$0xf]
    %v826 = vld [vmem:[%s3 + $0x18] sm:$0xff]
    %v827 = vld [vmem:[%s3 + $0x20] sm:$0xf]
    %v828 = vld [vmem:[%s3 + $0x24] sm:$0xff]
    %v829 = vld [vmem:[%s3 + $0x2c] sm:$0xf]
    %v830 = vld [vmem:[%s3 + $0x30] sm:$0xff]
    %v831 = vld [vmem:[%s3 + $0x38] sm:$0xf]
    %v832 = vld [vmem:[%s3 + $0x3c] sm:$0xff]
    %v833 = vld [vmem:[%s3 + $0x44] sm:$0xf]
    %v834 = vld [vmem:[%s3 + $0x48] sm:$0xff]
    %v835 = vld [vmem:[%s3 + $0x50] sm:$0xf]
    %v836 = vld [vmem:[%s3 + $0x54] sm:$0xff]
    %v837 = vld [vmem:[%s3 + $0x5c] sm:$0xf]
    %v838 = vld [vmem:[%s3 + $0x60] sm:$0xff]
    %v839 = vld [vmem:[%s3 + $0x68] sm:$0xf]
    %v840 = vld [vmem:[%s3 + $0x6c] sm:$0xff]
    %v841 = vld [vmem:[%s3 + $0x74] sm:$0xf]
    %v842 = vld [vmem:[%s3 + $0x78] sm:$0xff]
    %v843 = vld [vmem:[%s3 + $0x80] sm:$0xf]
    %v844 = vld [vmem:[%s3 + $0x84] sm:$0xff]
    %v845 = vld [vmem:[%s3 + $0x8c] sm:$0xf]
    %v846 = vld [vmem:[%s3 + $0x90] sm:$0xff]
    %v847 = vld [vmem:[%s3 + $0x98] sm:$0xf]
    %v848 = vld [vmem:[%s3 + $0x9c] sm:$0xff]
    %v849 = vld [vmem:[%s3 + $0xa4] sm:$0xf]
    %v850 = vld [vmem:[%s3 + $0xa8] sm:$0xff]
    %v851 = vld [vmem:[%s3 + $0xb0] sm:$0xf]
    %v852 = vld [vmem:[%s3 + $0xb4] sm:$0xff]
    %v853 = vld [vmem:[%s3 + $0xbc] sm:$0xf]
    %v886 = vunpack.c.l.b16 %v822
    %v887 = vunpack.c.h.b16 %v822
    %v888 = vunpack.c.l.b16 %v823
    %v889 = vunpack.c.l.b16 %v824
    %v890 = vunpack.c.h.b16 %v824
    %v891 = vunpack.c.l.b16 %v825
    %v892 = vunpack.c.l.b16 %v826
    %v893 = vunpack.c.h.b16 %v826
    %v894 = vunpack.c.l.b16 %v827
    %v895 = vunpack.c.l.b16 %v828
    %v896 = vunpack.c.h.b16 %v828
    %v897 = vunpack.c.l.b16 %v829
    %v898 = vunpack.c.l.b16 %v830
    %v899 = vunpack.c.h.b16 %v830
    %v900 = vunpack.c.l.b16 %v831
    %v901 = vunpack.c.l.b16 %v832
    %v902 = vunpack.c.h.b16 %v832
    %v903 = vunpack.c.l.b16 %v833
    %v904 = vunpack.c.l.b16 %v834
    %v905 = vunpack.c.h.b16 %v834
    %v906 = vunpack.c.l.b16 %v835
    %v907 = vunpack.c.l.b16 %v836
    %v908 = vunpack.c.h.b16 %v836
    %v909 = vunpack.c.l.b16 %v837
    %v910 = vunpack.c.l.b16 %v838
    %v911 = vunpack.c.h.b16 %v838
    %v912 = vunpack.c.l.b16 %v839
    %v913 = vunpack.c.l.b16 %v840
    %v914 = vunpack.c.h.b16 %v840
    %v915 = vunpack.c.l.b16 %v841
    %v916 = vunpack.c.l.b16 %v842
    %v917 = vunpack.c.h.b16 %v842
    %v918 = vunpack.c.l.b16 %v843
    %v919 = vunpack.c.l.b16 %v844
    %v920 = vunpack.c.h.b16 %v844
    %v921 = vunpack.c.l.b16 %v845
    %v922 = vunpack.c.l.b16 %v846
    %v923 = vunpack.c.h.b16 %v846
    %v924 = vunpack.c.l.b16 %v847
    %v925 = vunpack.c.l.b16 %v848
    %v926 = vunpack.c.h.b16 %v848
    %v927 = vunpack.c.l.b16 %v849
    %v928 = vunpack.c.l.b16 %v850
    %v929 = vunpack.c.h.b16 %v850
    %v930 = vunpack.c.l.b16 %v851
    %v931 = vunpack.c.l.b16 %v852
    %v932 = vunpack.c.h.b16 %v852
    %v933 = vunpack.c.l.b16 %v853
    %v934 = vpack.c.b16 %v889, %v886
    %v935 = vpack.c.b16 %v890, %v887
    %v936 = vpack.c.b16 %v891, %v888
    %v937 = vpack.c.b16 %v895, %v892
    %v938 = vpack.c.b16 %v896, %v893
    %v939 = vpack.c.b16 %v897, %v894
    %v940 = vpack.c.b16 %v901, %v898
    %v941 = vpack.c.b16 %v902, %v899
    %v942 = vpack.c.b16 %v903, %v900
    %v943 = vpack.c.b16 %v907, %v904
    %v944 = vpack.c.b16 %v908, %v905
    %v945 = vpack.c.b16 %v909, %v906
    %v946 = vpack.c.b16 %v913, %v910
    %v947 = vpack.c.b16 %v914, %v911
    %v948 = vpack.c.b16 %v915, %v912
    %v949 = vpack.c.b16 %v919, %v916
    %v950 = vpack.c.b16 %v920, %v917
    %v951 = vpack.c.b16 %v921, %v918
    %v952 = vpack.c.b16 %v925, %v922
    %v953 = vpack.c.b16 %v926, %v923
    %v954 = vpack.c.b16 %v927, %v924
    %v955 = vpack.c.b16 %v931, %v928
    %v956 = vpack.c.b16 %v932, %v929
    %v957 = vpack.c.b16 %v933, %v930
    %982 = vmatprep.subr.bf16.mxu0 %v935
    %983 = vmatpush1.bf16.msra.mxu0 %v934
    %984 = vmatprep.subr.bf16.mxu0 %v938
    %985 = vmatpush1.bf16.msra.mxu0 %v937
    %986 = vmatprep.subr.bf16.mxu0 %v941
    %987 = vmatpush1.bf16.msra.mxu0 %v940
    %988 = vmatprep.subr.bf16.mxu0 %v944
    %989 = vmatpush1.bf16.msra.mxu0 %v943
    %990 = vmatprep.subr.bf16.mxu0 %v947
    %991 = vmatpush1.bf16.msra.mxu0 %v946
    %992 = vmatprep.subr.bf16.mxu0 %v950
    %993 = vmatpush1.bf16.msra.mxu0 %v949
    %994 = vmatprep.subr.bf16.mxu0 %v953
    %995 = vmatpush1.bf16.msra.mxu0 %v952
    %996 = vmatprep.subr.bf16.mxu0 %v956
    %997 = vmatpush1.bf16.msra.mxu0 %v955
    %998 = vmatprep.subr.bf16.mxu0 0
    %999 = vmatpush1.bf16.msra.mxu0 0
    %1000 = vmatprep.subr.bf16.mxu0 0
    %1001 = vmatpush1.bf16.msra.mxu0 0
    %1002 = vmatprep.subr.bf16.mxu0 0
    %1003 = vmatpush1.bf16.msra.mxu0 0
    %1004 = vmatprep.subr.bf16.mxu0 0
    %1005 = vmatpush1.bf16.msra.mxu0 0
    %1006 = vmatprep.subr.bf16.mxu0 0
    %1007 = vmatpush1.bf16.msra.mxu0 0
    %1008 = vmatprep.subr.bf16.mxu0 0
    %1009 = vmatpush1.bf16.msra.mxu0 0
    %1010 = vmatprep.subr.bf16.mxu0 0
    %1011 = vmatpush1.bf16.msra.mxu0 0
    %1012 = vmatprep.subr.bf16.mxu0 0
    %1013 = vmatpush1.bf16.msra.mxu0 0
    %1014 = vmatprep.mubr.bf16.mxu0 0
    %1015 = vmatmul.mubr.bf16.gmra.mrb[0].mxu0 %v821
    %v1016 = vpop.f32.mrb[0].mxu0
    %v1017 = vadd.f32 %v574, %v1016
    %v1018 = vpop.f32.mrb[0].mxu0
    %v1019 = vadd.f32 %v578, %v1018
    %v1020 = vpop.f32.mrb[0].mxu0
    %v1021 = vpop.f32.mrb[0].mxu0
    %1022 = vdwg.mxu0
    %1023 = vmatprep.subr.bf16.mxu0 0
    %1024 = vmatpush1.bf16.msra.mxu0 %v936
    %1025 = vmatprep.subr.bf16.mxu0 0
    %1026 = vmatpush1.bf16.msra.mxu0 %v939
    %1027 = vmatprep.subr.bf16.mxu0 0
    %1028 = vmatpush1.bf16.msra.mxu0 %v942
    %1029 = vmatprep.subr.bf16.mxu0 0
    %1030 = vmatpush1.bf16.msra.mxu0 %v945
    %1031 = vmatprep.subr.bf16.mxu0 0
    %1032 = vmatpush1.bf16.msra.mxu0 %v948
    %1033 = vmatprep.subr.bf16.mxu0 0
    %1034 = vmatpush1.bf16.msra.mxu0 %v951
    %1035 = vmatprep.subr.bf16.mxu0 0
    %1036 = vmatpush1.bf16.msra.mxu0 %v954
    %1037 = vmatprep.subr.bf16.mxu0 0
    %1038 = vmatpush1.bf16.msra.mxu0 %v957
    %1039 = vmatprep.subr.bf16.mxu0 0
    %1040 = vmatpush1.bf16.msra.mxu0 0
    %1041 = vmatprep.subr.bf16.mxu0 0
    %1042 = vmatpush1.bf16.msra.mxu0 0
    %1043 = vmatprep.subr.bf16.mxu0 0
    %1044 = vmatpush1.bf16.msra.mxu0 0
    %1045 = vmatprep.subr.bf16.mxu0 0
    %1046 = vmatpush1.bf16.msra.mxu0 0
    %1047 = vmatprep.subr.bf16.mxu0 0
    %1048 = vmatpush1.bf16.msra.mxu0 0
    %1049 = vmatprep.subr.bf16.mxu0 0
    %1050 = vmatpush1.bf16.msra.mxu0 0
    %1051 = vmatprep.subr.bf16.mxu0 0
    %1052 = vmatpush1.bf16.msra.mxu0 0
    %1053 = vmatprep.subr.bf16.mxu0 0
    %1054 = vmatpush1.bf16.msra.mxu0 0
    %1055 = vmatprep.mubr.bf16.mxu0 0
    %1056 = vmatmul.mubr.bf16.gmra.mrb[0].mxu0 %v821
    %v1057 = vpop.f32.mrb[0].mxu0
    %v1058 = vadd.f32 %v582, %v1057
    %v1059 = vpop.f32.mrb[0].mxu0
    %v1060 = vpop.f32.mrb[0].mxu0
    %v1061 = vpop.f32.mrb[0].mxu0
    %1062 = vdwg.mxu0
    %v1063 = vadd.f32 %v818, %v1017
    %v1064 = vxor.u32 %v1063, 2147483648
    %v1065 = vmul.f32 %v1064, 1.442695
    %v1066 = vpow.pop %v1065
    %v1067 = vadd.f32 %v1066, 1.0
    %v1068 = vrcp.pop %v1067
    %v1069 = vmul.f32 1.0, %v1068
    %v1070 = vadd.f32 %v819, %v1019
    %v1071 = vxor.u32 %v1070, 2147483648
    %v1072 = vmul.f32 %v1071, 1.442695
    %v1073 = vpow.pop %v1072
    %v1074 = vadd.f32 %v1073, 1.0
    %v1075 = vrcp.pop %v1074
    %v1076 = vmul.f32 1.0, %v1075
    %v1077 = vmul.f32 %v1069, %v1058
    %v1078 = vadd.f32 %v820, %v1077
    %v1079 = vtanh.pop %v1078
    %v1080 = vsub.f32 1.0, %v1076
    %v1081 = vmul.f32 %v1080, %v1079
    %v1082 = vmul.f32 %v1076, %v815
    %v1083 = vadd.f32 %v1081, %v1082
    %s1084 = scalar_lea.vmem [#allocation3], 8
    %1085 = vst [vmem:[%s1084] sm:$0xff] %v1083
    %s1086 = scalar_lea.vmem [#allocation2], 48
    %v1087 = vld [vmem:[%s1086] sm:$0xff]
    %v1088 = vld [vmem:[%s1086 + $0x8] sm:$0xff]
    %v1089 = vld [vmem:[%s1086 + $0x10] sm:$0xff]
    %v1090 = vpack.c.bf16 %v1083, %v1083
    %v1091 = vld [vmem:[%s3] sm:$0xff]
    %v1092 = vld [vmem:[%s3 + $0x8] sm:$0xf]
    %v1093 = vld [vmem:[%s3 + $0xc] sm:$0xff]
    %v1094 = vld [vmem:[%s3 + $0x14] sm:$0xf]
    %v1095 = vld [vmem:[%s3 + $0x18] sm:$0xff]
    %v1096 = vld [vmem:[%s3 + $0x20] sm:$0xf]
    %v1097 = vld [vmem:[%s3 + $0x24] sm:$0xff]
    %v1098 = vld [vmem:[%s3 + $0x2c] sm:$0xf]
    %v1099 = vld [vmem:[%s3 + $0x30] sm:$0xff]
    %v1100 = vld [vmem:[%s3 + $0x38] sm:$0xf]
    %v1101 = vld [vmem:[%s3 + $0x3c] sm:$0xff]
    %v1102 = vld [vmem:[%s3 + $0x44] sm:$0xf]
    %v1103 = vld [vmem:[%s3 + $0x48] sm:$0xff]
    %v1104 = vld [vmem:[%s3 + $0x50] sm:$0xf]
    %v1105 = vld [vmem:[%s3 + $0x54] sm:$0xff]
    %v1106 = vld [vmem:[%s3 + $0x5c] sm:$0xf]
    %v1107 = vld [vmem:[%s3 + $0x60] sm:$0xff]
    %v1108 = vld [vmem:[%s3 + $0x68] sm:$0xf]
    %v1109 = vld [vmem:[%s3 + $0x6c] sm:$0xff]
    %v1110 = vld [vmem:[%s3 + $0x74] sm:$0xf]
    %v1111 = vld [vmem:[%s3 + $0x78] sm:$0xff]
    %v1112 = vld [vmem:[%s3 + $0x80] sm:$0xf]
    %v1113 = vld [vmem:[%s3 + $0x84] sm:$0xff]
    %v1114 = vld [vmem:[%s3 + $0x8c] sm:$0xf]
    %v1115 = vld [vmem:[%s3 + $0x90] sm:$0xff]
    %v1116 = vld [vmem:[%s3 + $0x98] sm:$0xf]
    %v1117 = vld [vmem:[%s3 + $0x9c] sm:$0xff]
    %v1118 = vld [vmem:[%s3 + $0xa4] sm:$0xf]
    %v1119 = vld [vmem:[%s3 + $0xa8] sm:$0xff]
    %v1120 = vld [vmem:[%s3 + $0xb0] sm:$0xf]
    %v1121 = vld [vmem:[%s3 + $0xb4] sm:$0xff]
    %v1122 = vld [vmem:[%s3 + $0xbc] sm:$0xf]
    %v1155 = vunpack.c.l.b16 %v1091
    %v1156 = vunpack.c.h.b16 %v1091
    %v1157 = vunpack.c.l.b16 %v1092
    %v1158 = vunpack.c.l.b16 %v1093
    %v1159 = vunpack.c.h.b16 %v1093
    %v1160 = vunpack.c.l.b16 %v1094
    %v1161 = vunpack.c.l.b16 %v1095
    %v1162 = vunpack.c.h.b16 %v1095
    %v1163 = vunpack.c.l.b16 %v1096
    %v1164 = vunpack.c.l.b16 %v1097
    %v1165 = vunpack.c.h.b16 %v1097
    %v1166 = vunpack.c.l.b16 %v1098
    %v1167 = vunpack.c.l.b16 %v1099
    %v1168 = vunpack.c.h.b16 %v1099
    %v1169 = vunpack.c.l.b16 %v1100
    %v1170 = vunpack.c.l.b16 %v1101
    %v1171 = vunpack.c.h.b16 %v1101
    %v1172 = vunpack.c.l.b16 %v1102
    %v1173 = vunpack.c.l.b16 %v1103
    %v1174 = vunpack.c.h.b16 %v1103
    %v1175 = vunpack.c.l.b16 %v1104
    %v1176 = vunpack.c.l.b16 %v1105
    %v1177 = vunpack.c.h.b16 %v1105
    %v1178 = vunpack.c.l.b16 %v1106
    %v1179 = vunpack.c.l.b16 %v1107
    %v1180 = vunpack.c.h.b16 %v1107
    %v1181 = vunpack.c.l.b16 %v1108
    %v1182 = vunpack.c.l.b16 %v1109
    %v1183 = vunpack.c.h.b16 %v1109
    %v1184 = vunpack.c.l.b16 %v1110
    %v1185 = vunpack.c.l.b16 %v1111
    %v1186 = vunpack.c.h.b16 %v1111
    %v1187 = vunpack.c.l.b16 %v1112
    %v1188 = vunpack.c.l.b16 %v1113
    %v1189 = vunpack.c.h.b16 %v1113
    %v1190 = vunpack.c.l.b16 %v1114
    %v1191 = vunpack.c.l.b16 %v1115
    %v1192 = vunpack.c.h.b16 %v1115
    %v1193 = vunpack.c.l.b16 %v1116
    %v1194 = vunpack.c.l.b16 %v1117
    %v1195 = vunpack.c.h.b16 %v1117
    %v1196 = vunpack.c.l.b16 %v1118
    %v1197 = vunpack.c.l.b16 %v1119
    %v1198 = vunpack.c.h.b16 %v1119
    %v1199 = vunpack.c.l.b16 %v1120
    %v1200 = vunpack.c.l.b16 %v1121
    %v1201 = vunpack.c.h.b16 %v1121
    %v1202 = vunpack.c.l.b16 %v1122
    %v1203 = vpack.c.b16 %v1158, %v1155
    %v1204 = vpack.c.b16 %v1159, %v1156
    %v1205 = vpack.c.b16 %v1160, %v1157
    %v1206 = vpack.c.b16 %v1164, %v1161
    %v1207 = vpack.c.b16 %v1165, %v1162
    %v1208 = vpack.c.b16 %v1166, %v1163
    %v1209 = vpack.c.b16 %v1170, %v1167
    %v1210 = vpack.c.b16 %v1171, %v1168
    %v1211 = vpack.c.b16 %v1172, %v1169
    %v1212 = vpack.c.b16 %v1176, %v1173
    %v1213 = vpack.c.b16 %v1177, %v1174
    %v1214 = vpack.c.b16 %v1178, %v1175
    %v1215 = vpack.c.b16 %v1182, %v1179
    %v1216 = vpack.c.b16 %v1183, %v1180
    %v1217 = vpack.c.b16 %v1184, %v1181
    %v1218 = vpack.c.b16 %v1188, %v1185
    %v1219 = vpack.c.b16 %v1189, %v1186
    %v1220 = vpack.c.b16 %v1190, %v1187
    %v1221 = vpack.c.b16 %v1194, %v1191
    %v1222 = vpack.c.b16 %v1195, %v1192
    %v1223 = vpack.c.b16 %v1196, %v1193
    %v1224 = vpack.c.b16 %v1200, %v1197
    %v1225 = vpack.c.b16 %v1201, %v1198
    %v1226 = vpack.c.b16 %v1202, %v1199
    %1251 = vmatprep.subr.bf16.mxu0 %v1204
    %1252 = vmatpush1.bf16.msra.mxu0 %v1203
    %1253 = vmatprep.subr.bf16.mxu0 %v1207
    %1254 = vmatpush1.bf16.msra.mxu0 %v1206
    %1255 = vmatprep.subr.bf16.mxu0 %v1210
    %1256 = vmatpush1.bf16.msra.mxu0 %v1209
    %1257 = vmatprep.subr.bf16.mxu0 %v1213
    %1258 = vmatpush1.bf16.msra.mxu0 %v1212
    %1259 = vmatprep.subr.bf16.mxu0 %v1216
    %1260 = vmatpush1.bf16.msra.mxu0 %v1215
    %1261 = vmatprep.subr.bf16.mxu0 %v1219
    %1262 = vmatpush1.bf16.msra.mxu0 %v1218
    %1263 = vmatprep.subr.bf16.mxu0 %v1222
    %1264 = vmatpush1.bf16.msra.mxu0 %v1221
    %1265 = vmatprep.subr.bf16.mxu0 %v1225
    %1266 = vmatpush1.bf16.msra.mxu0 %v1224
    %1267 = vmatprep.subr.bf16.mxu0 0
    %1268 = vmatpush1.bf16.msra.mxu0 0
    %1269 = vmatprep.subr.bf16.mxu0 0
    %1270 = vmatpush1.bf16.msra.mxu0 0
    %1271 = vmatprep.subr.bf16.mxu0 0
    %1272 = vmatpush1.bf16.msra.mxu0 0
    %1273 = vmatprep.subr.bf16.mxu0 0
    %1274 = vmatpush1.bf16.msra.mxu0 0
    %1275 = vmatprep.subr.bf16.mxu0 0
    %1276 = vmatpush1.bf16.msra.mxu0 0
    %1277 = vmatprep.subr.bf16.mxu0 0
    %1278 = vmatpush1.bf16.msra.mxu0 0
    %1279 = vmatprep.subr.bf16.mxu0 0
    %1280 = vmatpush1.bf16.msra.mxu0 0
    %1281 = vmatprep.subr.bf16.mxu0 0
    %1282 = vmatpush1.bf16.msra.mxu0 0
    %1283 = vmatprep.mubr.bf16.mxu0 0
    %1284 = vmatmul.mubr.bf16.gmra.mrb[0].mxu0 %v1090
    %v1285 = vpop.f32.mrb[0].mxu0
    %v1286 = vadd.f32 %v574, %v1285
    %v1287 = vpop.f32.mrb[0].mxu0
    %v1288 = vadd.f32 %v578, %v1287
    %v1289 = vpop.f32.mrb[0].mxu0
    %v1290 = vpop.f32.mrb[0].mxu0
    %1291 = vdwg.mxu0
    %1292 = vmatprep.subr.bf16.mxu0 0
    %1293 = vmatpush1.bf16.msra.mxu0 %v1205
    %1294 = vmatprep.subr.bf16.mxu0 0
    %1295 = vmatpush1.bf16.msra.mxu0 %v1208
    %1296 = vmatprep.subr.bf16.mxu0 0
    %1297 = vmatpush1.bf16.msra.mxu0 %v1211
    %1298 = vmatprep.subr.bf16.mxu0 0
    %1299 = vmatpush1.bf16.msra.mxu0 %v1214
    %1300 = vmatprep.subr.bf16.mxu0 0
    %1301 = vmatpush1.bf16.msra.mxu0 %v1217
    %1302 = vmatprep.subr.bf16.mxu0 0
    %1303 = vmatpush1.bf16.msra.mxu0 %v1220
    %1304 = vmatprep.subr.bf16.mxu0 0
    %1305 = vmatpush1.bf16.msra.mxu0 %v1223
    %1306 = vmatprep.subr.bf16.mxu0 0
    %1307 = vmatpush1.bf16.msra.mxu0 %v1226
    %1308 = vmatprep.subr.bf16.mxu0 0
    %1309 = vmatpush1.bf16.msra.mxu0 0
    %1310 = vmatprep.subr.bf16.mxu0 0
    %1311 = vmatpush1.bf16.msra.mxu0 0
    %1312 = vmatprep.subr.bf16.mxu0 0
    %1313 = vmatpush1.bf16.msra.mxu0 0
    %1314 = vmatprep.subr.bf16.mxu0 0
    %1315 = vmatpush1.bf16.msra.mxu0 0
    %1316 = vmatprep.subr.bf16.mxu0 0
    %1317 = vmatpush1.bf16.msra.mxu0 0
    %1318 = vmatprep.subr.bf16.mxu0 0
    %1319 = vmatpush1.bf16.msra.mxu0 0
    %1320 = vmatprep.subr.bf16.mxu0 0
    %1321 = vmatpush1.bf16.msra.mxu0 0
    %1322 = vmatprep.subr.bf16.mxu0 0
    %1323 = vmatpush1.bf16.msra.mxu0 0
    %1324 = vmatprep.mubr.bf16.mxu0 0
    %1325 = vmatmul.mubr.bf16.gmra.mrb[0].mxu0 %v1090
    %v1326 = vpop.f32.mrb[0].mxu0
    %v1327 = vadd.f32 %v582, %v1326
    %v1328 = vpop.f32.mrb[0].mxu0
    %v1329 = vpop.f32.mrb[0].mxu0
    %v1330 = vpop.f32.mrb[0].mxu0
    %1331 = vdwg.mxu0
    %v1332 = vadd.f32 %v1087, %v1286
    %v1333 = vxor.u32 %v1332, 2147483648
    %v1334 = vmul.f32 %v1333, 1.442695
    %v1335 = vpow.pop %v1334
    %v1336 = vadd.f32 %v1335, 1.0
    %v1337 = vrcp.pop %v1336
    %v1338 = vmul.f32 1.0, %v1337
    %v1339 = vadd.f32 %v1088, %v1288
    %v1340 = vxor.u32 %v1339, 2147483648
    %v1341 = vmul.f32 %v1340, 1.442695
    %v1342 = vpow.pop %v1341
    %v1343 = vadd.f32 %v1342, 1.0
    %v1344 = vrcp.pop %v1343
    %v1345 = vmul.f32 1.0, %v1344
    %v1346 = vmul.f32 %v1338, %v1327
    %v1347 = vadd.f32 %v1089, %v1346
    %v1348 = vtanh.pop %v1347
    %v1349 = vsub.f32 1.0, %v1345
    %v1350 = vmul.f32 %v1349, %v1348
    %v1351 = vmul.f32 %v1345, %v1083
    %v1352 = vadd.f32 %v1350, %v1351
    %s1353 = scalar_lea.vmem [#allocation3], 16
    %1354 = vst [vmem:[%s1353] sm:$0xff] %v1352
    %s1355 = scalar_lea.vmem [#allocation2], 72
    %v1356 = vld [vmem:[%s1355] sm:$0xff]
    %v1357 = vld [vmem:[%s1355 + $0x8] sm:$0xff]
    %v1358 = vld [vmem:[%s1355 + $0x10] sm:$0xff]
    %v1359 = vpack.c.bf16 %v1352, %v1352
    %v1360 = vld [vmem:[%s3] sm:$0xff]
    %v1361 = vld [vmem:[%s3 + $0x8] sm:$0xf]
    %v1362 = vld [vmem:[%s3 + $0xc] sm:$0xff]
    %v1363 = vld [vmem:[%s3 + $0x14] sm:$0xf]
    %v1364 = vld [vmem:[%s3 + $0x18] sm:$0xff]
    %v1365 = vld [vmem:[%s3 + $0x20] sm:$0xf]
    %v1366 = vld [vmem:[%s3 + $0x24] sm:$0xff]
    %v1367 = vld [vmem:[%s3 + $0x2c] sm:$0xf]
    %v1368 = vld [vmem:[%s3 + $0x30] sm:$0xff]
    %v1369 = vld [vmem:[%s3 + $0x38] sm:$0xf]
    %v1370 = vld [vmem:[%s3 + $0x3c] sm:$0xff]
    %v1371 = vld [vmem:[%s3 + $0x44] sm:$0xf]
    %v1372 = vld [vmem:[%s3 + $0x48] sm:$0xff]
    %v1373 = vld [vmem:[%s3 + $0x50] sm:$0xf]
    %v1374 = vld [vmem:[%s3 + $0x54] sm:$0xff]
    %v1375 = vld [vmem:[%s3 + $0x5c] sm:$0xf]
    %v1376 = vld [vmem:[%s3 + $0x60] sm:$0xff]
    %v1377 = vld [vmem:[%s3 + $0x68] sm:$0xf]
    %v1378 = vld [vmem:[%s3 + $0x6c] sm:$0xff]
    %v1379 = vld [vmem:[%s3 + $0x74] sm:$0xf]
    %v1380 = vld [vmem:[%s3 + $0x78] sm:$0xff]
    %v1381 = vld [vmem:[%s3 + $0x80] sm:$0xf]
    %v1382 = vld [vmem:[%s3 + $0x84] sm:$0xff]
    %v1383 = vld [vmem:[%s3 + $0x8c] sm:$0xf]
    %v1384 = vld [vmem:[%s3 + $0x90] sm:$0xff]
    %v1385 = vld [vmem:[%s3 + $0x98] sm:$0xf]
    %v1386 = vld [vmem:[%s3 + $0x9c] sm:$0xff]
    %v1387 = vld [vmem:[%s3 + $0xa4] sm:$0xf]
    %v1388 = vld [vmem:[%s3 + $0xa8] sm:$0xff]
    %v1389 = vld [vmem:[%s3 + $0xb0] sm:$0xf]
    %v1390 = vld [vmem:[%s3 + $0xb4] sm:$0xff]
    %v1391 = vld [vmem:[%s3 + $0xbc] sm:$0xf]
    %v1424 = vunpack.c.l.b16 %v1360
    %v1425 = vunpack.c.h.b16 %v1360
    %v1426 = vunpack.c.l.b16 %v1361
    %v1427 = vunpack.c.l.b16 %v1362
    %v1428 = vunpack.c.h.b16 %v1362
    %v1429 = vunpack.c.l.b16 %v1363
    %v1430 = vunpack.c.l.b16 %v1364
    %v1431 = vunpack.c.h.b16 %v1364
    %v1432 = vunpack.c.l.b16 %v1365
    %v1433 = vunpack.c.l.b16 %v1366
    %v1434 = vunpack.c.h.b16 %v1366
    %v1435 = vunpack.c.l.b16 %v1367
    %v1436 = vunpack.c.l.b16 %v1368
    %v1437 = vunpack.c.h.b16 %v1368
    %v1438 = vunpack.c.l.b16 %v1369
    %v1439 = vunpack.c.l.b16 %v1370
    %v1440 = vunpack.c.h.b16 %v1370
    %v1441 = vunpack.c.l.b16 %v1371
    %v1442 = vunpack.c.l.b16 %v1372
    %v1443 = vunpack.c.h.b16 %v1372
    %v1444 = vunpack.c.l.b16 %v1373
    %v1445 = vunpack.c.l.b16 %v1374
    %v1446 = vunpack.c.h.b16 %v1374
    %v1447 = vunpack.c.l.b16 %v1375
    %v1448 = vunpack.c.l.b16 %v1376
    %v1449 = vunpack.c.h.b16 %v1376
    %v1450 = vunpack.c.l.b16 %v1377
    %v1451 = vunpack.c.l.b16 %v1378
    %v1452 = vunpack.c.h.b16 %v1378
    %v1453 = vunpack.c.l.b16 %v1379
    %v1454 = vunpack.c.l.b16 %v1380
    %v1455 = vunpack.c.h.b16 %v1380
    %v1456 = vunpack.c.l.b16 %v1381
    %v1457 = vunpack.c.l.b16 %v1382
    %v1458 = vunpack.c.h.b16 %v1382
    %v1459 = vunpack.c.l.b16 %v1383
    %v1460 = vunpack.c.l.b16 %v1384
    %v1461 = vunpack.c.h.b16 %v1384
    %v1462 = vunpack.c.l.b16 %v1385
    %v1463 = vunpack.c.l.b16 %v1386
    %v1464 = vunpack.c.h.b16 %v1386
    %v1465 = vunpack.c.l.b16 %v1387
    %v1466 = vunpack.c.l.b16 %v1388
    %v1467 = vunpack.c.h.b16 %v1388
    %v1468 = vunpack.c.l.b16 %v1389
    %v1469 = vunpack.c.l.b16 %v1390
    %v1470 = vunpack.c.h.b16 %v1390
    %v1471 = vunpack.c.l.b16 %v1391
    %v1472 = vpack.c.b16 %v1427, %v1424
    %v1473 = vpack.c.b16 %v1428, %v1425
    %v1474 = vpack.c.b16 %v1429, %v1426
    %v1475 = vpack.c.b16 %v1433, %v1430
    %v1476 = vpack.c.b16 %v1434, %v1431
    %v1477 = vpack.c.b16 %v1435, %v1432
    %v1478 = vpack.c.b16 %v1439, %v1436
    %v1479 = vpack.c.b16 %v1440, %v1437
    %v1480 = vpack.c.b16 %v1441, %v1438
    %v1481 = vpack.c.b16 %v1445, %v1442
    %v1482 = vpack.c.b16 %v1446, %v1443
    %v1483 = vpack.c.b16 %v1447, %v1444
    %v1484 = vpack.c.b16 %v1451, %v1448
    %v1485 = vpack.c.b16 %v1452, %v1449
    %v1486 = vpack.c.b16 %v1453, %v1450
    %v1487 = vpack.c.b16 %v1457, %v1454
    %v1488 = vpack.c.b16 %v1458, %v1455
    %v1489 = vpack.c.b16 %v1459, %v1456
    %v1490 = vpack.c.b16 %v1463, %v1460
    %v1491 = vpack.c.b16 %v1464, %v1461
    %v1492 = vpack.c.b16 %v1465, %v1462
    %v1493 = vpack.c.b16 %v1469, %v1466
    %v1494 = vpack.c.b16 %v1470, %v1467
    %v1495 = vpack.c.b16 %v1471, %v1468
    %1520 = vmatprep.subr.bf16.mxu0 %v1473
    %1521 = vmatpush1.bf16.msra.mxu0 %v1472
    %1522 = vmatprep.subr.bf16.mxu0 %v1476
    %1523 = vmatpush1.bf16.msra.mxu0 %v1475
    %1524 = vmatprep.subr.bf16.mxu0 %v1479
    %1525 = vmatpush1.bf16.msra.mxu0 %v1478
    %1526 = vmatprep.subr.bf16.mxu0 %v1482
    %1527 = vmatpush1.bf16.msra.mxu0 %v1481
    %1528 = vmatprep.subr.bf16.mxu0 %v1485
    %1529 = vmatpush1.bf16.msra.mxu0 %v1484
    %1530 = vmatprep.subr.bf16.mxu0 %v1488
    %1531 = vmatpush1.bf16.msra.mxu0 %v1487
    %1532 = vmatprep.subr.bf16.mxu0 %v1491
    %1533 = vmatpush1.bf16.msra.mxu0 %v1490
    %1534 = vmatprep.subr.bf16.mxu0 %v1494
    %1535 = vmatpush1.bf16.msra.mxu0 %v1493
    %1536 = vmatprep.subr.bf16.mxu0 0
    %1537 = vmatpush1.bf16.msra.mxu0 0
    %1538 = vmatprep.subr.bf16.mxu0 0
    %1539 = vmatpush1.bf16.msra.mxu0 0
    %1540 = vmatprep.subr.bf16.mxu0 0
    %1541 = vmatpush1.bf16.msra.mxu0 0
    %1542 = vmatprep.subr.bf16.mxu0 0
    %1543 = vmatpush1.bf16.msra.mxu0 0
    %1544 = vmatprep.subr.bf16.mxu0 0
    %1545 = vmatpush1.bf16.msra.mxu0 0
    %1546 = vmatprep.subr.bf16.mxu0 0
    %1547 = vmatpush1.bf16.msra.mxu0 0
    %1548 = vmatprep.subr.bf16.mxu0 0
    %1549 = vmatpush1.bf16.msra.mxu0 0
    %1550 = vmatprep.subr.bf16.mxu0 0
    %1551 = vmatpush1.bf16.msra.mxu0 0
    %1552 = vmatprep.mubr.bf16.mxu0 0
    %1553 = vmatmul.mubr.bf16.gmra.mrb[0].mxu0 %v1359
    %v1554 = vpop.f32.mrb[0].mxu0
    %v1555 = vadd.f32 %v574, %v1554
    %v1556 = vpop.f32.mrb[0].mxu0
    %v1557 = vadd.f32 %v578, %v1556
    %v1558 = vpop.f32.mrb[0].mxu0
    %v1559 = vpop.f32.mrb[0].mxu0
    %1560 = vdwg.mxu0
    %1561 = vmatprep.subr.bf16.mxu0 0
    %1562 = vmatpush1.bf16.msra.mxu0 %v1474
    %1563 = vmatprep.subr.bf16.mxu0 0
    %1564 = vmatpush1.bf16.msra.mxu0 %v1477
    %1565 = vmatprep.subr.bf16.mxu0 0
    %1566 = vmatpush1.bf16.msra.mxu0 %v1480
    %1567 = vmatprep.subr.bf16.mxu0 0
    %1568 = vmatpush1.bf16.msra.mxu0 %v1483
    %1569 = vmatprep.subr.bf16.mxu0 0
    %1570 = vmatpush1.bf16.msra.mxu0 %v1486
    %1571 = vmatprep.subr.bf16.mxu0 0
    %1572 = vmatpush1.bf16.msra.mxu0 %v1489
    %1573 = vmatprep.subr.bf16.mxu0 0
    %1574 = vmatpush1.bf16.msra.mxu0 %v1492
    %1575 = vmatprep.subr.bf16.mxu0 0
    %1576 = vmatpush1.bf16.msra.mxu0 %v1495
    %1577 = vmatprep.subr.bf16.mxu0 0
    %1578 = vmatpush1.bf16.msra.mxu0 0
    %1579 = vmatprep.subr.bf16.mxu0 0
    %1580 = vmatpush1.bf16.msra.mxu0 0
    %1581 = vmatprep.subr.bf16.mxu0 0
    %1582 = vmatpush1.bf16.msra.mxu0 0
    %1583 = vmatprep.subr.bf16.mxu0 0
    %1584 = vmatpush1.bf16.msra.mxu0 0
    %1585 = vmatprep.subr.bf16.mxu0 0
    %1586 = vmatpush1.bf16.msra.mxu0 0
    %1587 = vmatprep.subr.bf16.mxu0 0
    %1588 = vmatpush1.bf16.msra.mxu0 0
    %1589 = vmatprep.subr.bf16.mxu0 0
    %1590 = vmatpush1.bf16.msra.mxu0 0
    %1591 = vmatprep.subr.bf16.mxu0 0
    %1592 = vmatpush1.bf16.msra.mxu0 0
    %1593 = vmatprep.mubr.bf16.mxu0 0
    %1594 = vmatmul.mubr.bf16.gmra.mrb[0].mxu0 %v1359
    %v1595 = vpop.f32.mrb[0].mxu0
    %v1596 = vadd.f32 %v582, %v1595
    %v1597 = vpop.f32.mrb[0].mxu0
    %v1598 = vpop.f32.mrb[0].mxu0
    %v1599 = vpop.f32.mrb[0].mxu0
    %1600 = vdwg.mxu0
    %v1601 = vadd.f32 %v1356, %v1555
    %v1602 = vxor.u32 %v1601, 2147483648
    %v1603 = vmul.f32 %v1602, 1.442695
    %v1604 = vpow.pop %v1603
    %v1605 = vadd.f32 %v1604, 1.0
    %v1606 = vrcp.pop %v1605
    %v1607 = vmul.f32 1.0, %v1606
    %v1608 = vadd.f32 %v1357, %v1557
    %v1609 = vxor.u32 %v1608, 2147483648
    %v1610 = vmul.f32 %v1609, 1.442695
    %v1611 = vpow.pop %v1610
    %v1612 = vadd.f32 %v1611, 1.0
    %v1613 = vrcp.pop %v1612
    %v1614 = vmul.f32 1.0, %v1613
    %v1615 = vmul.f32 %v1607, %v1596
    %v1616 = vadd.f32 %v1358, %v1615
    %v1617 = vtanh.pop %v1616
    %v1618 = vsub.f32 1.0, %v1614
    %v1619 = vmul.f32 %v1618, %v1617
    %v1620 = vmul.f32 %v1614, %v1352
    %v1621 = vadd.f32 %v1619, %v1620
    %s1622 = scalar_lea.vmem [#allocation3], 24
    %1623 = vst [vmem:[%s1622] sm:$0xff] %v1621
    %s1624 = scalar_lea.vmem [#allocation2], 96
    %v1625 = vld [vmem:[%s1624] sm:$0xff]
    %v1626 = vld [vmem:[%s1624 + $0x8] sm:$0xff]
    %v1627 = vld [vmem:[%s1624 + $0x10] sm:$0xff]
    %v1628 = vpack.c.bf16 %v1621, %v1621
    %v1629 = vld [vmem:[%s3] sm:$0xff]
    %v1630 = vld [vmem:[%s3 + $0x8] sm:$0xf]
    %v1631 = vld [vmem:[%s3 + $0xc] sm:$0xff]
    %v1632 = vld [vmem:[%s3 + $0x14] sm:$0xf]
    %v1633 = vld [vmem:[%s3 + $0x18] sm:$0xff]
    %v1634 = vld [vmem:[%s3 + $0x20] sm:$0xf]
    %v1635 = vld [vmem:[%s3 + $0x24] sm:$0xff]
    %v1636 = vld [vmem:[%s3 + $0x2c] sm:$0xf]
    %v1637 = vld [vmem:[%s3 + $0x30] sm:$0xff]
    %v1638 = vld [vmem:[%s3 + $0x38] sm:$0xf]
    %v1639 = vld [vmem:[%s3 + $0x3c] sm:$0xff]
    %v1640 = vld [vmem:[%s3 + $0x44] sm:$0xf]
    %v1641 = vld [vmem:[%s3 + $0x48] sm:$0xff]
    %v1642 = vld [vmem:[%s3 + $0x50] sm:$0xf]
    %v1643 = vld [vmem:[%s3 + $0x54] sm:$0xff]
    %v1644 = vld [vmem:[%s3 + $0x5c] sm:$0xf]
    %v1645 = vld [vmem:[%s3 + $0x60] sm:$0xff]
    %v1646 = vld [vmem:[%s3 + $0x68] sm:$0xf]
    %v1647 = vld [vmem:[%s3 + $0x6c] sm:$0xff]
    %v1648 = vld [vmem:[%s3 + $0x74] sm:$0xf]
    %v1649 = vld [vmem:[%s3 + $0x78] sm:$0xff]
    %v1650 = vld [vmem:[%s3 + $0x80] sm:$0xf]
    %v1651 = vld [vmem:[%s3 + $0x84] sm:$0xff]
    %v1652 = vld [vmem:[%s3 + $0x8c] sm:$0xf]
    %v1653 = vld [vmem:[%s3 + $0x90] sm:$0xff]
    %v1654 = vld [vmem:[%s3 + $0x98] sm:$0xf]
    %v1655 = vld [vmem:[%s3 + $0x9c] sm:$0xff]
    %v1656 = vld [vmem:[%s3 + $0xa4] sm:$0xf]
    %v1657 = vld [vmem:[%s3 + $0xa8] sm:$0xff]
    %v1658 = vld [vmem:[%s3 + $0xb0] sm:$0xf]
    %v1659 = vld [vmem:[%s3 + $0xb4] sm:$0xff]
    %v1660 = vld [vmem:[%s3 + $0xbc] sm:$0xf]
    %v1693 = vunpack.c.l.b16 %v1629
    %v1694 = vunpack.c.h.b16 %v1629
    %v1695 = vunpack.c.l.b16 %v1630
    %v1696 = vunpack.c.l.b16 %v1631
    %v1697 = vunpack.c.h.b16 %v1631
    %v1698 = vunpack.c.l.b16 %v1632
    %v1699 = vunpack.c.l.b16 %v1633
    %v1700 = vunpack.c.h.b16 %v1633
    %v1701 = vunpack.c.l.b16 %v1634
    %v1702 = vunpack.c.l.b16 %v1635
    %v1703 = vunpack.c.h.b16 %v1635
    %v1704 = vunpack.c.l.b16 %v1636
    %v1705 = vunpack.c.l.b16 %v1637
    %v1706 = vunpack.c.h.b16 %v1637
    %v1707 = vunpack.c.l.b16 %v1638
    %v1708 = vunpack.c.l.b16 %v1639
    %v1709 = vunpack.c.h.b16 %v1639
    %v1710 = vunpack.c.l.b16 %v1640
    %v1711 = vunpack.c.l.b16 %v1641
    %v1712 = vunpack.c.h.b16 %v1641
    %v1713 = vunpack.c.l.b16 %v1642
    %v1714 = vunpack.c.l.b16 %v1643
    %v1715 = vunpack.c.h.b16 %v1643
    %v1716 = vunpack.c.l.b16 %v1644
    %v1717 = vunpack.c.l.b16 %v1645
    %v1718 = vunpack.c.h.b16 %v1645
    %v1719 = vunpack.c.l.b16 %v1646
    %v1720 = vunpack.c.l.b16 %v1647
    %v1721 = vunpack.c.h.b16 %v1647
    %v1722 = vunpack.c.l.b16 %v1648
    %v1723 = vunpack.c.l.b16 %v1649
    %v1724 = vunpack.c.h.b16 %v1649
    %v1725 = vunpack.c.l.b16 %v1650
    %v1726 = vunpack.c.l.b16 %v1651
    %v1727 = vunpack.c.h.b16 %v1651
    %v1728 = vunpack.c.l.b16 %v1652
    %v1729 = vunpack.c.l.b16 %v1653
    %v1730 = vunpack.c.h.b16 %v1653
    %v1731 = vunpack.c.l.b16 %v1654
    %v1732 = vunpack.c.l.b16 %v1655
    %v1733 = vunpack.c.h.b16 %v1655
    %v1734 = vunpack.c.l.b16 %v1656
    %v1735 = vunpack.c.l.b16 %v1657
    %v1736 = vunpack.c.h.b16 %v1657
    %v1737 = vunpack.c.l.b16 %v1658
    %v1738 = vunpack.c.l.b16 %v1659
    %v1739 = vunpack.c.h.b16 %v1659
    %v1740 = vunpack.c.l.b16 %v1660
    %v1741 = vpack.c.b16 %v1696, %v1693
    %v1742 = vpack.c.b16 %v1697, %v1694
    %v1743 = vpack.c.b16 %v1698, %v1695
    %v1744 = vpack.c.b16 %v1702, %v1699
    %v1745 = vpack.c.b16 %v1703, %v1700
    %v1746 = vpack.c.b16 %v1704, %v1701
    %v1747 = vpack.c.b16 %v1708, %v1705
    %v1748 = vpack.c.b16 %v1709, %v1706
    %v1749 = vpack.c.b16 %v1710, %v1707
    %v1750 = vpack.c.b16 %v1714, %v1711
    %v1751 = vpack.c.b16 %v1715, %v1712
    %v1752 = vpack.c.b16 %v1716, %v1713
    %v1753 = vpack.c.b16 %v1720, %v1717
    %v1754 = vpack.c.b16 %v1721, %v1718
    %v1755 = vpack.c.b16 %v1722, %v1719
    %v1756 = vpack.c.b16 %v1726, %v1723
    %v1757 = vpack.c.b16 %v1727, %v1724
    %v1758 = vpack.c.b16 %v1728, %v1725
    %v1759 = vpack.c.b16 %v1732, %v1729
    %v1760 = vpack.c.b16 %v1733, %v1730
    %v1761 = vpack.c.b16 %v1734, %v1731
    %v1762 = vpack.c.b16 %v1738, %v1735
    %v1763 = vpack.c.b16 %v1739, %v1736
    %v1764 = vpack.c.b16 %v1740, %v1737
    %1789 = vmatprep.subr.bf16.mxu0 %v1742
    %1790 = vmatpush1.bf16.msra.mxu0 %v1741
    %1791 = vmatprep.subr.bf16.mxu0 %v1745
    %1792 = vmatpush1.bf16.msra.mxu0 %v1744
    %1793 = vmatprep.subr.bf16.mxu0 %v1748
    %1794 = vmatpush1.bf16.msra.mxu0 %v1747
    %1795 = vmatprep.subr.bf16.mxu0 %v1751
    %1796 = vmatpush1.bf16.msra.mxu0 %v1750
    %1797 = vmatprep.subr.bf16.mxu0 %v1754
    %1798 = vmatpush1.bf16.msra.mxu0 %v1753
    %1799 = vmatprep.subr.bf16.mxu0 %v1757
    %1800 = vmatpush1.bf16.msra.mxu0 %v1756
    %1801 = vmatprep.subr.bf16.mxu0 %v1760
    %1802 = vmatpush1.bf16.msra.mxu0 %v1759
    %1803 = vmatprep.subr.bf16.mxu0 %v1763
    %1804 = vmatpush1.bf16.msra.mxu0 %v1762
    %1805 = vmatprep.subr.bf16.mxu0 0
    %1806 = vmatpush1.bf16.msra.mxu0 0
    %1807 = vmatprep.subr.bf16.mxu0 0
    %1808 = vmatpush1.bf16.msra.mxu0 0
    %1809 = vmatprep.subr.bf16.mxu0 0
    %1810 = vmatpush1.bf16.msra.mxu0 0
    %1811 = vmatprep.subr.bf16.mxu0 0
    %1812 = vmatpush1.bf16.msra.mxu0 0
    %1813 = vmatprep.subr.bf16.mxu0 0
    %1814 = vmatpush1.bf16.msra.mxu0 0
    %1815 = vmatprep.subr.bf16.mxu0 0
    %1816 = vmatpush1.bf16.msra.mxu0 0
    %1817 = vmatprep.subr.bf16.mxu0 0
    %1818 = vmatpush1.bf16.msra.mxu0 0
    %1819 = vmatprep.subr.bf16.mxu0 0
    %1820 = vmatpush1.bf16.msra.mxu0 0
    %1821 = vmatprep.mubr.bf16.mxu0 0
    %1822 = vmatmul.mubr.bf16.gmra.mrb[0].mxu0 %v1628
    %v1823 = vpop.f32.mrb[0].mxu0
    %v1824 = vadd.f32 %v574, %v1823
    %v1825 = vpop.f32.mrb[0].mxu0
    %v1826 = vadd.f32 %v578, %v1825
    %v1827 = vpop.f32.mrb[0].mxu0
    %v1828 = vpop.f32.mrb[0].mxu0
    %1829 = vdwg.mxu0
    %1830 = vmatprep.subr.bf16.mxu0 0
    %1831 = vmatpush1.bf16.msra.mxu0 %v1743
    %1832 = vmatprep.subr.bf16.mxu0 0
    %1833 = vmatpush1.bf16.msra.mxu0 %v1746
    %1834 = vmatprep.subr.bf16.mxu0 0
    %1835 = vmatpush1.bf16.msra.mxu0 %v1749
    %1836 = vmatprep.subr.bf16.mxu0 0
    %1837 = vmatpush1.bf16.msra.mxu0 %v1752
    %1838 = vmatprep.subr.bf16.mxu0 0
    %1839 = vmatpush1.bf16.msra.mxu0 %v1755
    %1840 = vmatprep.subr.bf16.mxu0 0
    %1841 = vmatpush1.bf16.msra.mxu0 %v1758
    %1842 = vmatprep.subr.bf16.mxu0 0
    %1843 = vmatpush1.bf16.msra.mxu0 %v1761
    %1844 = vmatprep.subr.bf16.mxu0 0
    %1845 = vmatpush1.bf16.msra.mxu0 %v1764
    %1846 = vmatprep.subr.bf16.mxu0 0
    %1847 = vmatpush1.bf16.msra.mxu0 0
    %1848 = vmatprep.subr.bf16.mxu0 0
    %1849 = vmatpush1.bf16.msra.mxu0 0
    %1850 = vmatprep.subr.bf16.mxu0 0
    %1851 = vmatpush1.bf16.msra.mxu0 0
    %1852 = vmatprep.subr.bf16.mxu0 0
    %1853 = vmatpush1.bf16.msra.mxu0 0
    %1854 = vmatprep.subr.bf16.mxu0 0
    %1855 = vmatpush1.bf16.msra.mxu0 0
    %1856 = vmatprep.subr.bf16.mxu0 0
    %1857 = vmatpush1.bf16.msra.mxu0 0
    %1858 = vmatprep.subr.bf16.mxu0 0
    %1859 = vmatpush1.bf16.msra.mxu0 0
    %1860 = vmatprep.subr.bf16.mxu0 0
    %1861 = vmatpush1.bf16.msra.mxu0 0
    %1862 = vmatprep.mubr.bf16.mxu0 0
    %1863 = vmatmul.mubr.bf16.gmra.mrb[0].mxu0 %v1628
    %v1864 = vpop.f32.mrb[0].mxu0
    %v1865 = vadd.f32 %v582, %v1864
    %v1866 = vpop.f32.mrb[0].mxu0
    %v1867 = vpop.f32.mrb[0].mxu0
    %v1868 = vpop.f32.mrb[0].mxu0
    %1869 = vdwg.mxu0
    %v1870 = vadd.f32 %v1625, %v1824
    %v1871 = vxor.u32 %v1870, 2147483648
    %v1872 = vmul.f32 %v1871, 1.442695
    %v1873 = vpow.pop %v1872
    %v1874 = vadd.f32 %v1873, 1.0
    %v1875 = vrcp.pop %v1874
    %v1876 = vmul.f32 1.0, %v1875
    %v1877 = vadd.f32 %v1626, %v1826
    %v1878 = vxor.u32 %v1877, 2147483648
    %v1879 = vmul.f32 %v1878, 1.442695
    %v1880 = vpow.pop %v1879
    %v1881 = vadd.f32 %v1880, 1.0
    %v1882 = vrcp.pop %v1881
    %v1883 = vmul.f32 1.0, %v1882
    %v1884 = vmul.f32 %v1876, %v1865
    %v1885 = vadd.f32 %v1627, %v1884
    %v1886 = vtanh.pop %v1885
    %v1887 = vsub.f32 1.0, %v1883
    %v1888 = vmul.f32 %v1887, %v1886
    %v1889 = vmul.f32 %v1883, %v1621
    %v1890 = vadd.f32 %v1888, %v1889
    %s1891 = scalar_lea.vmem [#allocation3], 32
    %1892 = vst [vmem:[%s1891] sm:$0xff] %v1890
    %s1893 = scalar_lea.vmem [#allocation2], 120
    %v1894 = vld [vmem:[%s1893] sm:$0xff]
    %v1895 = vld [vmem:[%s1893 + $0x8] sm:$0xff]
    %v1896 = vld [vmem:[%s1893 + $0x10] sm:$0xff]
    %v1897 = vpack.c.bf16 %v1890, %v1890
    %v1898 = vld [vmem:[%s3] sm:$0xff]
    %v1899 = vld [vmem:[%s3 + $0x8] sm:$0xf]
    %v1900 = vld [vmem:[%s3 + $0xc] sm:$0xff]
    %v1901 = vld [vmem:[%s3 + $0x14] sm:$0xf]
    %v1902 = vld [vmem:[%s3 + $0x18] sm:$0xff]
    %v1903 = vld [vmem:[%s3 + $0x20] sm:$0xf]
    %v1904 = vld [vmem:[%s3 + $0x24] sm:$0xff]
    %v1905 = vld [vmem:[%s3 + $0x2c] sm:$0xf]
    %v1906 = vld [vmem:[%s3 + $0x30] sm:$0xff]
    %v1907 = vld [vmem:[%s3 + $0x38] sm:$0xf]
    %v1908 = vld [vmem:[%s3 + $0x3c] sm:$0xff]
    %v1909 = vld [vmem:[%s3 + $0x44] sm:$0xf]
    %v1910 = vld [vmem:[%s3 + $0x48] sm:$0xff]
    %v1911 = vld [vmem:[%s3 + $0x50] sm:$0xf]
    %v1912 = vld [vmem:[%s3 + $0x54] sm:$0xff]
    %v1913 = vld [vmem:[%s3 + $0x5c] sm:$0xf]
    %v1914 = vld [vmem:[%s3 + $0x60] sm:$0xff]
    %v1915 = vld [vmem:[%s3 + $0x68] sm:$0xf]
    %v1916 = vld [vmem:[%s3 + $0x6c] sm:$0xff]
    %v1917 = vld [vmem:[%s3 + $0x74] sm:$0xf]
    %v1918 = vld [vmem:[%s3 + $0x78] sm:$0xff]
    %v1919 = vld [vmem:[%s3 + $0x80] sm:$0xf]
    %v1920 = vld [vmem:[%s3 + $0x84] sm:$0xff]
    %v1921 = vld [vmem:[%s3 + $0x8c] sm:$0xf]
    %v1922 = vld [vmem:[%s3 + $0x90] sm:$0xff]
    %v1923 = vld [vmem:[%s3 + $0x98] sm:$0xf]
    %v1924 = vld [vmem:[%s3 + $0x9c] sm:$0xff]
    %v1925 = vld [vmem:[%s3 + $0xa4] sm:$0xf]
    %v1926 = vld [vmem:[%s3 + $0xa8] sm:$0xff]
    %v1927 = vld [vmem:[%s3 + $0xb0] sm:$0xf]
    %v1928 = vld [vmem:[%s3 + $0xb4] sm:$0xff]
    %v1929 = vld [vmem:[%s3 + $0xbc] sm:$0xf]
    %v1962 = vunpack.c.l.b16 %v1898
    %v1963 = vunpack.c.h.b16 %v1898
    %v1964 = vunpack.c.l.b16 %v1899
    %v1965 = vunpack.c.l.b16 %v1900
    %v1966 = vunpack.c.h.b16 %v1900
    %v1967 = vunpack.c.l.b16 %v1901
    %v1968 = vunpack.c.l.b16 %v1902
    %v1969 = vunpack.c.h.b16 %v1902
    %v1970 = vunpack.c.l.b16 %v1903
    %v1971 = vunpack.c.l.b16 %v1904
    %v1972 = vunpack.c.h.b16 %v1904
    %v1973 = vunpack.c.l.b16 %v1905
    %v1974 = vunpack.c.l.b16 %v1906
    %v1975 = vunpack.c.h.b16 %v1906
    %v1976 = vunpack.c.l.b16 %v1907
    %v1977 = vunpack.c.l.b16 %v1908
    %v1978 = vunpack.c.h.b16 %v1908
    %v1979 = vunpack.c.l.b16 %v1909
    %v1980 = vunpack.c.l.b16 %v1910
    %v1981 = vunpack.c.h.b16 %v1910
    %v1982 = vunpack.c.l.b16 %v1911
    %v1983 = vunpack.c.l.b16 %v1912
    %v1984 = vunpack.c.h.b16 %v1912
    %v1985 = vunpack.c.l.b16 %v1913
    %v1986 = vunpack.c.l.b16 %v1914
    %v1987 = vunpack.c.h.b16 %v1914
    %v1988 = vunpack.c.l.b16 %v1915
    %v1989 = vunpack.c.l.b16 %v1916
    %v1990 = vunpack.c.h.b16 %v1916
    %v1991 = vunpack.c.l.b16 %v1917
    %v1992 = vunpack.c.l.b16 %v1918
    %v1993 = vunpack.c.h.b16 %v1918
    %v1994 = vunpack.c.l.b16 %v1919
    %v1995 = vunpack.c.l.b16 %v1920
    %v1996 = vunpack.c.h.b16 %v1920
    %v1997 = vunpack.c.l.b16 %v1921
    %v1998 = vunpack.c.l.b16 %v1922
    %v1999 = vunpack.c.h.b16 %v1922
    %v2000 = vunpack.c.l.b16 %v1923
    %v2001 = vunpack.c.l.b16 %v1924
    %v2002 = vunpack.c.h.b16 %v1924
    %v2003 = vunpack.c.l.b16 %v1925
    %v2004 = vunpack.c.l.b16 %v1926
    %v2005 = vunpack.c.h.b16 %v1926
    %v2006 = vunpack.c.l.b16 %v1927
    %v2007 = vunpack.c.l.b16 %v1928
    %v2008 = vunpack.c.h.b16 %v1928
    %v2009 = vunpack.c.l.b16 %v1929
    %v2010 = vpack.c.b16 %v1965, %v1962
    %v2011 = vpack.c.b16 %v1966, %v1963
    %v2012 = vpack.c.b16 %v1967, %v1964
    %v2013 = vpack.c.b16 %v1971, %v1968
    %v2014 = vpack.c.b16 %v1972, %v1969
    %v2015 = vpack.c.b16 %v1973, %v1970
    %v2016 = vpack.c.b16 %v1977, %v1974
    %v2017 = vpack.c.b16 %v1978, %v1975
    %v2018 = vpack.c.b16 %v1979, %v1976
    %v2019 = vpack.c.b16 %v1983, %v1980
    %v2020 = vpack.c.b16 %v1984, %v1981
    %v2021 = vpack.c.b16 %v1985, %v1982
    %v2022 = vpack.c.b16 %v1989, %v1986
    %v2023 = vpack.c.b16 %v1990, %v1987
    %v2024 = vpack.c.b16 %v1991, %v1988
    %v2025 = vpack.c.b16 %v1995, %v1992
    %v2026 = vpack.c.b16 %v1996, %v1993
    %v2027 = vpack.c.b16 %v1997, %v1994
    %v2028 = vpack.c.b16 %v2001, %v1998
    %v2029 = vpack.c.b16 %v2002, %v1999
    %v2030 = vpack.c.b16 %v2003, %v2000
    %v2031 = vpack.c.b16 %v2007, %v2004
    %v2032 = vpack.c.b16 %v2008, %v2005
    %v2033 = vpack.c.b16 %v2009, %v2006
    %2058 = vmatprep.subr.bf16.mxu0 %v2011
    %2059 = vmatpush1.bf16.msra.mxu0 %v2010
    %2060 = vmatprep.subr.bf16.mxu0 %v2014
    %2061 = vmatpush1.bf16.msra.mxu0 %v2013
    %2062 = vmatprep.subr.bf16.mxu0 %v2017
    %2063 = vmatpush1.bf16.msra.mxu0 %v2016
    %2064 = vmatprep.subr.bf16.mxu0 %v2020
    %2065 = vmatpush1.bf16.msra.mxu0 %v2019
    %2066 = vmatprep.subr.bf16.mxu0 %v2023
    %2067 = vmatpush1.bf16.msra.mxu0 %v2022
    %2068 = vmatprep.subr.bf16.mxu0 %v2026
    %2069 = vmatpush1.bf16.msra.mxu0 %v2025
    %2070 = vmatprep.subr.bf16.mxu0 %v2029
    %2071 = vmatpush1.bf16.msra.mxu0 %v2028
    %2072 = vmatprep.subr.bf16.mxu0 %v2032
    %2073 = vmatpush1.bf16.msra.mxu0 %v2031
    %2074 = vmatprep.subr.bf16.mxu0 0
    %2075 = vmatpush1.bf16.msra.mxu0 0
    %2076 = vmatprep.subr.bf16.mxu0 0
    %2077 = vmatpush1.bf16.msra.mxu0 0
    %2078 = vmatprep.subr.bf16.mxu0 0
    %2079 = vmatpush1.bf16.msra.mxu0 0
    %2080 = vmatprep.subr.bf16.mxu0 0
    %2081 = vmatpush1.bf16.msra.mxu0 0
    %2082 = vmatprep.subr.bf16.mxu0 0
    %2083 = vmatpush1.bf16.msra.mxu0 0
    %2084 = vmatprep.subr.bf16.mxu0 0
    %2085 = vmatpush1.bf16.msra.mxu0 0
    %2086 = vmatprep.subr.bf16.mxu0 0
    %2087 = vmatpush1.bf16.msra.mxu0 0
    %2088 = vmatprep.subr.bf16.mxu0 0
    %2089 = vmatpush1.bf16.msra.mxu0 0
    %2090 = vmatprep.mubr.bf16.mxu0 0
    %2091 = vmatmul.mubr.bf16.gmra.mrb[0].mxu0 %v1897
    %v2092 = vpop.f32.mrb[0].mxu0
    %v2093 = vadd.f32 %v574, %v2092
    %v2094 = vpop.f32.mrb[0].mxu0
    %v2095 = vadd.f32 %v578, %v2094
    %v2096 = vpop.f32.mrb[0].mxu0
    %v2097 = vpop.f32.mrb[0].mxu0
    %2098 = vdwg.mxu0
    %2099 = vmatprep.subr.bf16.mxu0 0
    %2100 = vmatpush1.bf16.msra.mxu0 %v2012
    %2101 = vmatprep.subr.bf16.mxu0 0
    %2102 = vmatpush1.bf16.msra.mxu0 %v2015
    %2103 = vmatprep.subr.bf16.mxu0 0
    %2104 = vmatpush1.bf16.msra.mxu0 %v2018
    %2105 = vmatprep.subr.bf16.mxu0 0
    %2106 = vmatpush1.bf16.msra.mxu0 %v2021
    %2107 = vmatprep.subr.bf16.mxu0 0
    %2108 = vmatpush1.bf16.msra.mxu0 %v2024
    %2109 = vmatprep.subr.bf16.mxu0 0
    %2110 = vmatpush1.bf16.msra.mxu0 %v2027
    %2111 = vmatprep.subr.bf16.mxu0 0
    %2112 = vmatpush1.bf16.msra.mxu0 %v2030
    %2113 = vmatprep.subr.bf16.mxu0 0
    %2114 = vmatpush1.bf16.msra.mxu0 %v2033
    %2115 = vmatprep.subr.bf16.mxu0 0
    %2116 = vmatpush1.bf16.msra.mxu0 0
    %2117 = vmatprep.subr.bf16.mxu0 0
    %2118 = vmatpush1.bf16.msra.mxu0 0
    %2119 = vmatprep.subr.bf16.mxu0 0
    %2120 = vmatpush1.bf16.msra.mxu0 0
    %2121 = vmatprep.subr.bf16.mxu0 0
    %2122 = vmatpush1.bf16.msra.mxu0 0
    %2123 = vmatprep.subr.bf16.mxu0 0
    %2124 = vmatpush1.bf16.msra.mxu0 0
    %2125 = vmatprep.subr.bf16.mxu0 0
    %2126 = vmatpush1.bf16.msra.mxu0 0
    %2127 = vmatprep.subr.bf16.mxu0 0
    %2128 = vmatpush1.bf16.msra.mxu0 0
    %2129 = vmatprep.subr.bf16.mxu0 0
    %2130 = vmatpush1.bf16.msra.mxu0 0
    %2131 = vmatprep.mubr.bf16.mxu0 0
    %2132 = vmatmul.mubr.bf16.gmra.mrb[0].mxu0 %v1897
    %v2133 = vpop.f32.mrb[0].mxu0
    %v2134 = vadd.f32 %v582, %v2133
    %v2135 = vpop.f32.mrb[0].mxu0
    %v2136 = vpop.f32.mrb[0].mxu0
    %v2137 = vpop.f32.mrb[0].mxu0
    %2138 = vdwg.mxu0
    %v2139 = vadd.f32 %v1894, %v2093
    %v2140 = vxor.u32 %v2139, 2147483648
    %v2141 = vmul.f32 %v2140, 1.442695
    %v2142 = vpow.pop %v2141
    %v2143 = vadd.f32 %v2142, 1.0
    %v2144 = vrcp.pop %v2143
    %v2145 = vmul.f32 1.0, %v2144
    %v2146 = vadd.f32 %v1895, %v2095
    %v2147 = vxor.u32 %v2146, 2147483648
    %v2148 = vmul.f32 %v2147, 1.442695
    %v2149 = vpow.pop %v2148
    %v2150 = vadd.f32 %v2149, 1.0
    %v2151 = vrcp.pop %v2150
    %v2152 = vmul.f32 1.0, %v2151
    %v2153 = vmul.f32 %v2145, %v2134
    %v2154 = vadd.f32 %v1896, %v2153
    %v2155 = vtanh.pop %v2154
    %v2156 = vsub.f32 1.0, %v2152
    %v2157 = vmul.f32 %v2156, %v2155
    %v2158 = vmul.f32 %v2152, %v1890
    %v2159 = vadd.f32 %v2157, %v2158
    %s2160 = scalar_lea.vmem [#allocation3], 40
    %2161 = vst [vmem:[%s2160] sm:$0xff] %v2159
    %s2162 = scalar_lea.vmem [#allocation2], 144
    %v2163 = vld [vmem:[%s2162] sm:$0xff]
    %v2164 = vld [vmem:[%s2162 + $0x8] sm:$0xff]
    %v2165 = vld [vmem:[%s2162 + $0x10] sm:$0xff]
    %v2166 = vpack.c.bf16 %v2159, %v2159
    %v2167 = vld [vmem:[%s3] sm:$0xff]
    %v2168 = vld [vmem:[%s3 + $0x8] sm:$0xf]
    %v2169 = vld [vmem:[%s3 + $0xc] sm:$0xff]
    %v2170 = vld [vmem:[%s3 + $0x14] sm:$0xf]
    %v2171 = vld [vmem:[%s3 + $0x18] sm:$0xff]
    %v2172 = vld [vmem:[%s3 + $0x20] sm:$0xf]
    %v2173 = vld [vmem:[%s3 + $0x24] sm:$0xff]
    %v2174 = vld [vmem:[%s3 + $0x2c] sm:$0xf]
    %v2175 = vld [vmem:[%s3 + $0x30] sm:$0xff]
    %v2176 = vld [vmem:[%s3 + $0x38] sm:$0xf]
    %v2177 = vld [vmem:[%s3 + $0x3c] sm:$0xff]
    %v2178 = vld [vmem:[%s3 + $0x44] sm:$0xf]
    %v2179 = vld [vmem:[%s3 + $0x48] sm:$0xff]
    %v2180 = vld [vmem:[%s3 + $0x50] sm:$0xf]
    %v2181 = vld [vmem:[%s3 + $0x54] sm:$0xff]
    %v2182 = vld [vmem:[%s3 + $0x5c] sm:$0xf]
    %v2183 = vld [vmem:[%s3 + $0x60] sm:$0xff]
    %v2184 = vld [vmem:[%s3 + $0x68] sm:$0xf]
    %v2185 = vld [vmem:[%s3 + $0x6c] sm:$0xff]
    %v2186 = vld [vmem:[%s3 + $0x74] sm:$0xf]
    %v2187 = vld [vmem:[%s3 + $0x78] sm:$0xff]
    %v2188 = vld [vmem:[%s3 + $0x80] sm:$0xf]
    %v2189 = vld [vmem:[%s3 + $0x84] sm:$0xff]
    %v2190 = vld [vmem:[%s3 + $0x8c] sm:$0xf]
    %v2191 = vld [vmem:[%s3 + $0x90] sm:$0xff]
    %v2192 = vld [vmem:[%s3 + $0x98] sm:$0xf]
    %v2193 = vld [vmem:[%s3 + $0x9c] sm:$0xff]
    %v2194 = vld [vmem:[%s3 + $0xa4] sm:$0xf]
    %v2195 = vld [vmem:[%s3 + $0xa8] sm:$0xff]
    %v2196 = vld [vmem:[%s3 + $0xb0] sm:$0xf]
    %v2197 = vld [vmem:[%s3 + $0xb4] sm:$0xff]
    %v2198 = vld [vmem:[%s3 + $0xbc] sm:$0xf]
    %v2231 = vunpack.c.l.b16 %v2167
    %v2232 = vunpack.c.h.b16 %v2167
    %v2233 = vunpack.c.l.b16 %v2168
    %v2234 = vunpack.c.l.b16 %v2169
    %v2235 = vunpack.c.h.b16 %v2169
    %v2236 = vunpack.c.l.b16 %v2170
    %v2237 = vunpack.c.l.b16 %v2171
    %v2238 = vunpack.c.h.b16 %v2171
    %v2239 = vunpack.c.l.b16 %v2172
    %v2240 = vunpack.c.l.b16 %v2173
    %v2241 = vunpack.c.h.b16 %v2173
    %v2242 = vunpack.c.l.b16 %v2174
    %v2243 = vunpack.c.l.b16 %v2175
    %v2244 = vunpack.c.h.b16 %v2175
    %v2245 = vunpack.c.l.b16 %v2176
    %v2246 = vunpack.c.l.b16 %v2177
    %v2247 = vunpack.c.h.b16 %v2177
    %v2248 = vunpack.c.l.b16 %v2178
    %v2249 = vunpack.c.l.b16 %v2179
    %v2250 = vunpack.c.h.b16 %v2179
    %v2251 = vunpack.c.l.b16 %v2180
    %v2252 = vunpack.c.l.b16 %v2181
    %v2253 = vunpack.c.h.b16 %v2181
    %v2254 = vunpack.c.l.b16 %v2182
    %v2255 = vunpack.c.l.b16 %v2183
    %v2256 = vunpack.c.h.b16 %v2183
    %v2257 = vunpack.c.l.b16 %v2184
    %v2258 = vunpack.c.l.b16 %v2185
    %v2259 = vunpack.c.h.b16 %v2185
    %v2260 = vunpack.c.l.b16 %v2186
    %v2261 = vunpack.c.l.b16 %v2187
    %v2262 = vunpack.c.h.b16 %v2187
    %v2263 = vunpack.c.l.b16 %v2188
    %v2264 = vunpack.c.l.b16 %v2189
    %v2265 = vunpack.c.h.b16 %v2189
    %v2266 = vunpack.c.l.b16 %v2190
    %v2267 = vunpack.c.l.b16 %v2191
    %v2268 = vunpack.c.h.b16 %v2191
    %v2269 = vunpack.c.l.b16 %v2192
    %v2270 = vunpack.c.l.b16 %v2193
    %v2271 = vunpack.c.h.b16 %v2193
    %v2272 = vunpack.c.l.b16 %v2194
    %v2273 = vunpack.c.l.b16 %v2195
    %v2274 = vunpack.c.h.b16 %v2195
    %v2275 = vunpack.c.l.b16 %v2196
    %v2276 = vunpack.c.l.b16 %v2197
    %v2277 = vunpack.c.h.b16 %v2197
    %v2278 = vunpack.c.l.b16 %v2198
    %v2279 = vpack.c.b16 %v2234, %v2231
    %v2280 = vpack.c.b16 %v2235, %v2232
    %v2281 = vpack.c.b16 %v2236, %v2233
    %v2282 = vpack.c.b16 %v2240, %v2237
    %v2283 = vpack.c.b16 %v2241, %v2238
    %v2284 = vpack.c.b16 %v2242, %v2239
    %v2285 = vpack.c.b16 %v2246, %v2243
    %v2286 = vpack.c.b16 %v2247, %v2244
    %v2287 = vpack.c.b16 %v2248, %v2245
    %v2288 = vpack.c.b16 %v2252, %v2249
    %v2289 = vpack.c.b16 %v2253, %v2250
    %v2290 = vpack.c.b16 %v2254, %v2251
    %v2291 = vpack.c.b16 %v2258, %v2255
    %v2292 = vpack.c.b16 %v2259, %v2256
    %v2293 = vpack.c.b16 %v2260, %v2257
    %v2294 = vpack.c.b16 %v2264, %v2261
    %v2295 = vpack.c.b16 %v2265, %v2262
    %v2296 = vpack.c.b16 %v2266, %v2263
    %v2297 = vpack.c.b16 %v2270, %v2267
    %v2298 = vpack.c.b16 %v2271, %v2268
    %v2299 = vpack.c.b16 %v2272, %v2269
    %v2300 = vpack.c.b16 %v2276, %v2273
    %v2301 = vpack.c.b16 %v2277, %v2274
    %v2302 = vpack.c.b16 %v2278, %v2275
    %2327 = vmatprep.subr.bf16.mxu0 %v2280
    %2328 = vmatpush1.bf16.msra.mxu0 %v2279
    %2329 = vmatprep.subr.bf16.mxu0 %v2283
    %2330 = vmatpush1.bf16.msra.mxu0 %v2282
    %2331 = vmatprep.subr.bf16.mxu0 %v2286
    %2332 = vmatpush1.bf16.msra.mxu0 %v2285
    %2333 = vmatprep.subr.bf16.mxu0 %v2289
    %2334 = vmatpush1.bf16.msra.mxu0 %v2288
    %2335 = vmatprep.subr.bf16.mxu0 %v2292
    %2336 = vmatpush1.bf16.msra.mxu0 %v2291
    %2337 = vmatprep.subr.bf16.mxu0 %v2295
    %2338 = vmatpush1.bf16.msra.mxu0 %v2294
    %2339 = vmatprep.subr.bf16.mxu0 %v2298
    %2340 = vmatpush1.bf16.msra.mxu0 %v2297
    %2341 = vmatprep.subr.bf16.mxu0 %v2301
    %2342 = vmatpush1.bf16.msra.mxu0 %v2300
    %2343 = vmatprep.subr.bf16.mxu0 0
    %2344 = vmatpush1.bf16.msra.mxu0 0
    %2345 = vmatprep.subr.bf16.mxu0 0
    %2346 = vmatpush1.bf16.msra.mxu0 0
    %2347 = vmatprep.subr.bf16.mxu0 0
    %2348 = vmatpush1.bf16.msra.mxu0 0
    %2349 = vmatprep.subr.bf16.mxu0 0
    %2350 = vmatpush1.bf16.msra.mxu0 0
    %2351 = vmatprep.subr.bf16.mxu0 0
    %2352 = vmatpush1.bf16.msra.mxu0 0
    %2353 = vmatprep.subr.bf16.mxu0 0
    %2354 = vmatpush1.bf16.msra.mxu0 0
    %2355 = vmatprep.subr.bf16.mxu0 0
    %2356 = vmatpush1.bf16.msra.mxu0 0
    %2357 = vmatprep.subr.bf16.mxu0 0
    %2358 = vmatpush1.bf16.msra.mxu0 0
    %2359 = vmatprep.mubr.bf16.mxu0 0
    %2360 = vmatmul.mubr.bf16.gmra.mrb[0].mxu0 %v2166
    %v2361 = vpop.f32.mrb[0].mxu0
    %v2362 = vadd.f32 %v574, %v2361
    %v2363 = vpop.f32.mrb[0].mxu0
    %v2364 = vadd.f32 %v578, %v2363
    %v2365 = vpop.f32.mrb[0].mxu0
    %v2366 = vpop.f32.mrb[0].mxu0
    %2367 = vdwg.mxu0
    %2368 = vmatprep.subr.bf16.mxu0 0
    %2369 = vmatpush1.bf16.msra.mxu0 %v2281
    %2370 = vmatprep.subr.bf16.mxu0 0
    %2371 = vmatpush1.bf16.msra.mxu0 %v2284
    %2372 = vmatprep.subr.bf16.mxu0 0
    %2373 = vmatpush1.bf16.msra.mxu0 %v2287
    %2374 = vmatprep.subr.bf16.mxu0 0
    %2375 = vmatpush1.bf16.msra.mxu0 %v2290
    %2376 = vmatprep.subr.bf16.mxu0 0
    %2377 = vmatpush1.bf16.msra.mxu0 %v2293
    %2378 = vmatprep.subr.bf16.mxu0 0
    %2379 = vmatpush1.bf16.msra.mxu0 %v2296
    %2380 = vmatprep.subr.bf16.mxu0 0
    %2381 = vmatpush1.bf16.msra.mxu0 %v2299
    %2382 = vmatprep.subr.bf16.mxu0 0
    %2383 = vmatpush1.bf16.msra.mxu0 %v2302
    %2384 = vmatprep.subr.bf16.mxu0 0
    %2385 = vmatpush1.bf16.msra.mxu0 0
    %2386 = vmatprep.subr.bf16.mxu0 0
    %2387 = vmatpush1.bf16.msra.mxu0 0
    %2388 = vmatprep.subr.bf16.mxu0 0
    %2389 = vmatpush1.bf16.msra.mxu0 0
    %2390 = vmatprep.subr.bf16.mxu0 0
    %2391 = vmatpush1.bf16.msra.mxu0 0
    %2392 = vmatprep.subr.bf16.mxu0 0
    %2393 = vmatpush1.bf16.msra.mxu0 0
    %2394 = vmatprep.subr.bf16.mxu0 0
    %2395 = vmatpush1.bf16.msra.mxu0 0
    %2396 = vmatprep.subr.bf16.mxu0 0
    %2397 = vmatpush1.bf16.msra.mxu0 0
    %2398 = vmatprep.subr.bf16.mxu0 0
    %2399 = vmatpush1.bf16.msra.mxu0 0
    %2400 = vmatprep.mubr.bf16.mxu0 0
    %2401 = vmatmul.mubr.bf16.gmra.mrb[0].mxu0 %v2166
    %v2402 = vpop.f32.mrb[0].mxu0
    %v2403 = vadd.f32 %v582, %v2402
    %v2404 = vpop.f32.mrb[0].mxu0
    %v2405 = vpop.f32.mrb[0].mxu0
    %v2406 = vpop.f32.mrb[0].mxu0
    %2407 = vdwg.mxu0
    %v2408 = vadd.f32 %v2163, %v2362
    %v2409 = vxor.u32 %v2408, 2147483648
    %v2410 = vmul.f32 %v2409, 1.442695
    %v2411 = vpow.pop %v2410
    %v2412 = vadd.f32 %v2411, 1.0
    %v2413 = vrcp.pop %v2412
    %v2414 = vmul.f32 1.0, %v2413
    %v2415 = vadd.f32 %v2164, %v2364
    %v2416 = vxor.u32 %v2415, 2147483648
    %v2417 = vmul.f32 %v2416, 1.442695
    %v2418 = vpow.pop %v2417
    %v2419 = vadd.f32 %v2418, 1.0
    %v2420 = vrcp.pop %v2419
    %v2421 = vmul.f32 1.0, %v2420
    %v2422 = vmul.f32 %v2414, %v2403
    %v2423 = vadd.f32 %v2165, %v2422
    %v2424 = vtanh.pop %v2423
    %v2425 = vsub.f32 1.0, %v2421
    %v2426 = vmul.f32 %v2425, %v2424
    %v2427 = vmul.f32 %v2421, %v2159
    %v2428 = vadd.f32 %v2426, %v2427
    %s2429 = scalar_lea.vmem [#allocation3], 48
    %2430 = vst [vmem:[%s2429] sm:$0xff] %v2428
    %s2431 = scalar_lea.vmem [#allocation2], 168
    %v2432 = vld [vmem:[%s2431] sm:$0xff]
    %v2433 = vld [vmem:[%s2431 + $0x8] sm:$0xff]
    %v2434 = vld [vmem:[%s2431 + $0x10] sm:$0xff]
    %v2435 = vpack.c.bf16 %v2428, %v2428
    %v2436 = vld [vmem:[%s3] sm:$0xff]
    %v2437 = vld [vmem:[%s3 + $0x8] sm:$0xf]
    %v2438 = vld [vmem:[%s3 + $0xc] sm:$0xff]
    %v2439 = vld [vmem:[%s3 + $0x14] sm:$0xf]
    %v2440 = vld [vmem:[%s3 + $0x18] sm:$0xff]
    %v2441 = vld [vmem:[%s3 + $0x20] sm:$0xf]
    %v2442 = vld [vmem:[%s3 + $0x24] sm:$0xff]
    %v2443 = vld [vmem:[%s3 + $0x2c] sm:$0xf]
    %v2444 = vld [vmem:[%s3 + $0x30] sm:$0xff]
    %v2445 = vld [vmem:[%s3 + $0x38] sm:$0xf]
    %v2446 = vld [vmem:[%s3 + $0x3c] sm:$0xff]
    %v2447 = vld [vmem:[%s3 + $0x44] sm:$0xf]
    %v2448 = vld [vmem:[%s3 + $0x48] sm:$0xff]
    %v2449 = vld [vmem:[%s3 + $0x50] sm:$0xf]
    %v2450 = vld [vmem:[%s3 + $0x54] sm:$0xff]
    %v2451 = vld [vmem:[%s3 + $0x5c] sm:$0xf]
    %v2452 = vld [vmem:[%s3 + $0x60] sm:$0xff]
    %v2453 = vld [vmem:[%s3 + $0x68] sm:$0xf]
    %v2454 = vld [vmem:[%s3 + $0x6c] sm:$0xff]
    %v2455 = vld [vmem:[%s3 + $0x74] sm:$0xf]
    %v2456 = vld [vmem:[%s3 + $0x78] sm:$0xff]
    %v2457 = vld [vmem:[%s3 + $0x80] sm:$0xf]
    %v2458 = vld [vmem:[%s3 + $0x84] sm:$0xff]
    %v2459 = vld [vmem:[%s3 + $0x8c] sm:$0xf]
    %v2460 = vld [vmem:[%s3 + $0x90] sm:$0xff]
    %v2461 = vld [vmem:[%s3 + $0x98] sm:$0xf]
    %v2462 = vld [vmem:[%s3 + $0x9c] sm:$0xff]
    %v2463 = vld [vmem:[%s3 + $0xa4] sm:$0xf]
    %v2464 = vld [vmem:[%s3 + $0xa8] sm:$0xff]
    %v2465 = vld [vmem:[%s3 + $0xb0] sm:$0xf]
    %v2466 = vld [vmem:[%s3 + $0xb4] sm:$0xff]
    %v2467 = vld [vmem:[%s3 + $0xbc] sm:$0xf]
    %v2500 = vunpack.c.l.b16 %v2436
    %v2501 = vunpack.c.h.b16 %v2436
    %v2502 = vunpack.c.l.b16 %v2437
    %v2503 = vunpack.c.l.b16 %v2438
    %v2504 = vunpack.c.h.b16 %v2438
    %v2505 = vunpack.c.l.b16 %v2439
    %v2506 = vunpack.c.l.b16 %v2440
    %v2507 = vunpack.c.h.b16 %v2440
    %v2508 = vunpack.c.l.b16 %v2441
    %v2509 = vunpack.c.l.b16 %v2442
    %v2510 = vunpack.c.h.b16 %v2442
    %v2511 = vunpack.c.l.b16 %v2443
    %v2512 = vunpack.c.l.b16 %v2444
    %v2513 = vunpack.c.h.b16 %v2444
    %v2514 = vunpack.c.l.b16 %v2445
    %v2515 = vunpack.c.l.b16 %v2446
    %v2516 = vunpack.c.h.b16 %v2446
    %v2517 = vunpack.c.l.b16 %v2447
    %v2518 = vunpack.c.l.b16 %v2448
    %v2519 = vunpack.c.h.b16 %v2448
    %v2520 = vunpack.c.l.b16 %v2449
    %v2521 = vunpack.c.l.b16 %v2450
    %v2522 = vunpack.c.h.b16 %v2450
    %v2523 = vunpack.c.l.b16 %v2451
    %v2524 = vunpack.c.l.b16 %v2452
    %v2525 = vunpack.c.h.b16 %v2452
    %v2526 = vunpack.c.l.b16 %v2453
    %v2527 = vunpack.c.l.b16 %v2454
    %v2528 = vunpack.c.h.b16 %v2454
    %v2529 = vunpack.c.l.b16 %v2455
    %v2530 = vunpack.c.l.b16 %v2456
    %v2531 = vunpack.c.h.b16 %v2456
    %v2532 = vunpack.c.l.b16 %v2457
    %v2533 = vunpack.c.l.b16 %v2458
    %v2534 = vunpack.c.h.b16 %v2458
    %v2535 = vunpack.c.l.b16 %v2459
    %v2536 = vunpack.c.l.b16 %v2460
    %v2537 = vunpack.c.h.b16 %v2460
    %v2538 = vunpack.c.l.b16 %v2461
    %v2539 = vunpack.c.l.b16 %v2462
    %v2540 = vunpack.c.h.b16 %v2462
    %v2541 = vunpack.c.l.b16 %v2463
    %v2542 = vunpack.c.l.b16 %v2464
    %v2543 = vunpack.c.h.b16 %v2464
    %v2544 = vunpack.c.l.b16 %v2465
    %v2545 = vunpack.c.l.b16 %v2466
    %v2546 = vunpack.c.h.b16 %v2466
    %v2547 = vunpack.c.l.b16 %v2467
    %v2548 = vpack.c.b16 %v2503, %v2500
    %v2549 = vpack.c.b16 %v2504, %v2501
    %v2550 = vpack.c.b16 %v2505, %v2502
    %v2551 = vpack.c.b16 %v2509, %v2506
    %v2552 = vpack.c.b16 %v2510, %v2507
    %v2553 = vpack.c.b16 %v2511, %v2508
    %v2554 = vpack.c.b16 %v2515, %v2512
    %v2555 = vpack.c.b16 %v2516, %v2513
    %v2556 = vpack.c.b16 %v2517, %v2514
    %v2557 = vpack.c.b16 %v2521, %v2518
    %v2558 = vpack.c.b16 %v2522, %v2519
    %v2559 = vpack.c.b16 %v2523, %v2520
    %v2560 = vpack.c.b16 %v2527, %v2524
    %v2561 = vpack.c.b16 %v2528, %v2525
    %v2562 = vpack.c.b16 %v2529, %v2526
    %v2563 = vpack.c.b16 %v2533, %v2530
    %v2564 = vpack.c.b16 %v2534, %v2531
    %v2565 = vpack.c.b16 %v2535, %v2532
    %v2566 = vpack.c.b16 %v2539, %v2536
    %v2567 = vpack.c.b16 %v2540, %v2537
    %v2568 = vpack.c.b16 %v2541, %v2538
    %v2569 = vpack.c.b16 %v2545, %v2542
    %v2570 = vpack.c.b16 %v2546, %v2543
    %v2571 = vpack.c.b16 %v2547, %v2544
    %2596 = vmatprep.subr.bf16.mxu0 %v2549
    %2597 = vmatpush1.bf16.msra.mxu0 %v2548
    %2598 = vmatprep.subr.bf16.mxu0 %v2552
    %2599 = vmatpush1.bf16.msra.mxu0 %v2551
    %2600 = vmatprep.subr.bf16.mxu0 %v2555
    %2601 = vmatpush1.bf16.msra.mxu0 %v2554
    %2602 = vmatprep.subr.bf16.mxu0 %v2558
    %2603 = vmatpush1.bf16.msra.mxu0 %v2557
    %2604 = vmatprep.subr.bf16.mxu0 %v2561
    %2605 = vmatpush1.bf16.msra.mxu0 %v2560
    %2606 = vmatprep.subr.bf16.mxu0 %v2564
    %2607 = vmatpush1.bf16.msra.mxu0 %v2563
    %2608 = vmatprep.subr.bf16.mxu0 %v2567
    %2609 = vmatpush1.bf16.msra.mxu0 %v2566
    %2610 = vmatprep.subr.bf16.mxu0 %v2570
    %2611 = vmatpush1.bf16.msra.mxu0 %v2569
    %2612 = vmatprep.subr.bf16.mxu0 0
    %2613 = vmatpush1.bf16.msra.mxu0 0
    %2614 = vmatprep.subr.bf16.mxu0 0
    %2615 = vmatpush1.bf16.msra.mxu0 0
    %2616 = vmatprep.subr.bf16.mxu0 0
    %2617 = vmatpush1.bf16.msra.mxu0 0
    %2618 = vmatprep.subr.bf16.mxu0 0
    %2619 = vmatpush1.bf16.msra.mxu0 0
    %2620 = vmatprep.subr.bf16.mxu0 0
    %2621 = vmatpush1.bf16.msra.mxu0 0
    %2622 = vmatprep.subr.bf16.mxu0 0
    %2623 = vmatpush1.bf16.msra.mxu0 0
    %2624 = vmatprep.subr.bf16.mxu0 0
    %2625 = vmatpush1.bf16.msra.mxu0 0
    %2626 = vmatprep.subr.bf16.mxu0 0
    %2627 = vmatpush1.bf16.msra.mxu0 0
    %2628 = vmatprep.mubr.bf16.mxu0 0
    %2629 = vmatmul.mubr.bf16.gmra.mrb[0].mxu0 %v2435
    %v2630 = vpop.f32.mrb[0].mxu0
    %v2631 = vadd.f32 %v574, %v2630
    %v2632 = vpop.f32.mrb[0].mxu0
    %v2633 = vadd.f32 %v578, %v2632
    %v2634 = vpop.f32.mrb[0].mxu0
    %v2635 = vpop.f32.mrb[0].mxu0
    %2636 = vdwg.mxu0
    %2637 = vmatprep.subr.bf16.mxu0 0
    %2638 = vmatpush1.bf16.msra.mxu0 %v2550
    %2639 = vmatprep.subr.bf16.mxu0 0
    %2640 = vmatpush1.bf16.msra.mxu0 %v2553
    %2641 = vmatprep.subr.bf16.mxu0 0
    %2642 = vmatpush1.bf16.msra.mxu0 %v2556
    %2643 = vmatprep.subr.bf16.mxu0 0
    %2644 = vmatpush1.bf16.msra.mxu0 %v2559
    %2645 = vmatprep.subr.bf16.mxu0 0
    %2646 = vmatpush1.bf16.msra.mxu0 %v2562
    %2647 = vmatprep.subr.bf16.mxu0 0
    %2648 = vmatpush1.bf16.msra.mxu0 %v2565
    %2649 = vmatprep.subr.bf16.mxu0 0
    %2650 = vmatpush1.bf16.msra.mxu0 %v2568
    %2651 = vmatprep.subr.bf16.mxu0 0
    %2652 = vmatpush1.bf16.msra.mxu0 %v2571
    %2653 = vmatprep.subr.bf16.mxu0 0
    %2654 = vmatpush1.bf16.msra.mxu0 0
    %2655 = vmatprep.subr.bf16.mxu0 0
    %2656 = vmatpush1.bf16.msra.mxu0 0
    %2657 = vmatprep.subr.bf16.mxu0 0
    %2658 = vmatpush1.bf16.msra.mxu0 0
    %2659 = vmatprep.subr.bf16.mxu0 0
    %2660 = vmatpush1.bf16.msra.mxu0 0
    %2661 = vmatprep.subr.bf16.mxu0 0
    %2662 = vmatpush1.bf16.msra.mxu0 0
    %2663 = vmatprep.subr.bf16.mxu0 0
    %2664 = vmatpush1.bf16.msra.mxu0 0
    %2665 = vmatprep.subr.bf16.mxu0 0
    %2666 = vmatpush1.bf16.msra.mxu0 0
    %2667 = vmatprep.subr.bf16.mxu0 0
    %2668 = vmatpush1.bf16.msra.mxu0 0
    %2669 = vmatprep.mubr.bf16.mxu0 0
    %2670 = vmatmul.mubr.bf16.gmra.mrb[0].mxu0 %v2435
    %v2671 = vpop.f32.mrb[0].mxu0
    %v2672 = vadd.f32 %v582, %v2671
    %v2673 = vpop.f32.mrb[0].mxu0
    %v2674 = vpop.f32.mrb[0].mxu0
    %v2675 = vpop.f32.mrb[0].mxu0
    %2676 = vdwg.mxu0
    %v2677 = vadd.f32 %v2432, %v2631
    %v2678 = vxor.u32 %v2677, 2147483648
    %v2679 = vmul.f32 %v2678, 1.442695
    %v2680 = vpow.pop %v2679
    %v2681 = vadd.f32 %v2680, 1.0
    %v2682 = vrcp.pop %v2681
    %v2683 = vmul.f32 1.0, %v2682
    %v2684 = vadd.f32 %v2433, %v2633
    %v2685 = vxor.u32 %v2684, 2147483648
    %v2686 = vmul.f32 %v2685, 1.442695
    %v2687 = vpow.pop %v2686
    %v2688 = vadd.f32 %v2687, 1.0
    %v2689 = vrcp.pop %v2688
    %v2690 = vmul.f32 1.0, %v2689
    %v2691 = vmul.f32 %v2683, %v2672
    %v2692 = vadd.f32 %v2434, %v2691
    %v2693 = vtanh.pop %v2692
    %v2694 = vsub.f32 1.0, %v2690
    %v2695 = vmul.f32 %v2694, %v2693
    %v2696 = vmul.f32 %v2690, %v2428
    %v2697 = vadd.f32 %v2695, %v2696
    %s2698 = scalar_lea.vmem [#allocation3], 56
    %2699 = vst [vmem:[%s2698] sm:$0xff] %v2697
    %v2700 = vld [vmem:[%s1] sm:$0xff]
    %v2701 = vpack.c.bf16 %v2700, %v2700
    %v2702 = vld [vmem:[#allocation5] sm:$0xf]
    %v2703 = vld [vmem:[#allocation5 + $0x4] sm:$0xf]
    %v2704 = vld [vmem:[#allocation5 + $0x8] sm:$0xf]
    %v2705 = vld [vmem:[#allocation5 + $0xc] sm:$0xf]
    %v2706 = vld [vmem:[#allocation5 + $0x10] sm:$0xf]
    %v2707 = vld [vmem:[#allocation5 + $0x14] sm:$0xf]
    %v2708 = vld [vmem:[#allocation5 + $0x18] sm:$0xf]
    %v2709 = vld [vmem:[#allocation5 + $0x1c] sm:$0xf]
    %v2710 = vld [vmem:[#allocation5 + $0x20] sm:$0xf]
    %v2711 = vld [vmem:[#allocation5 + $0x24] sm:$0xf]
    %v2712 = vld [vmem:[#allocation5 + $0x28] sm:$0xf]
    %v2713 = vld [vmem:[#allocation5 + $0x2c] sm:$0xf]
    %v2714 = vld [vmem:[#allocation5 + $0x30] sm:$0xf]
    %v2715 = vld [vmem:[#allocation5 + $0x34] sm:$0xf]
    %v2716 = vld [vmem:[#allocation5 + $0x38] sm:$0xf]
    %v2717 = vld [vmem:[#allocation5 + $0x3c] sm:$0xf]
    %v2718 = vld [vmem:[%s7] sm:$0x1]
    %v2720 = vlaneseq
    %v2721 = vshrl.u32 %v2720, 7
    %v2722 = vsub.s32 0, %v2721
    %v2723 = vrot.slane %v2718, %v2722
    %v2741 = vunpack.c.l.b16 %v2702
    %v2742 = vunpack.c.l.b16 %v2703
    %v2743 = vunpack.c.l.b16 %v2704
    %v2744 = vunpack.c.l.b16 %v2705
    %v2745 = vunpack.c.l.b16 %v2706
    %v2746 = vunpack.c.l.b16 %v2707
    %v2747 = vunpack.c.l.b16 %v2708
    %v2748 = vunpack.c.l.b16 %v2709
    %v2749 = vunpack.c.l.b16 %v2710
    %v2750 = vunpack.c.l.b16 %v2711
    %v2751 = vunpack.c.l.b16 %v2712
    %v2752 = vunpack.c.l.b16 %v2713
    %v2753 = vunpack.c.l.b16 %v2714
    %v2754 = vunpack.c.l.b16 %v2715
    %v2755 = vunpack.c.l.b16 %v2716
    %v2756 = vunpack.c.l.b16 %v2717
    %v2757 = vpack.c.b16 %v2742, %v2741
    %v2758 = vpack.c.b16 %v2744, %v2743
    %v2759 = vpack.c.b16 %v2746, %v2745
    %v2760 = vpack.c.b16 %v2748, %v2747
    %v2761 = vpack.c.b16 %v2750, %v2749
    %v2762 = vpack.c.b16 %v2752, %v2751
    %v2763 = vpack.c.b16 %v2754, %v2753
    %v2764 = vpack.c.b16 %v2756, %v2755
    %2773 = vmatprep.subr.bf16.mxu0 0
    %2774 = vmatpush1.bf16.msra.mxu0 %v2757
    %2775 = vmatprep.subr.bf16.mxu0 0
    %2776 = vmatpush1.bf16.msra.mxu0 %v2758
    %2777 = vmatprep.subr.bf16.mxu0 0
    %2778 = vmatpush1.bf16.msra.mxu0 %v2759
    %2779 = vmatprep.subr.bf16.mxu0 0
    %2780 = vmatpush1.bf16.msra.mxu0 %v2760
    %2781 = vmatprep.subr.bf16.mxu0 0
    %2782 = vmatpush1.bf16.msra.mxu0 %v2761
    %2783 = vmatprep.subr.bf16.mxu0 0
    %2784 = vmatpush1.bf16.msra.mxu0 %v2762
    %2785 = vmatprep.subr.bf16.mxu0 0
    %2786 = vmatpush1.bf16.msra.mxu0 %v2763
    %2787 = vmatprep.subr.bf16.mxu0 0
    %2788 = vmatpush1.bf16.msra.mxu0 %v2764
    %2789 = vmatprep.subr.bf16.mxu0 0
    %2790 = vmatpush1.bf16.msra.mxu0 0
    %2791 = vmatprep.subr.bf16.mxu0 0
    %2792 = vmatpush1.bf16.msra.mxu0 0
    %2793 = vmatprep.subr.bf16.mxu0 0
    %2794 = vmatpush1.bf16.msra.mxu0 0
    %2795 = vmatprep.subr.bf16.mxu0 0
    %2796 = vmatpush1.bf16.msra.mxu0 0
    %2797 = vmatprep.subr.bf16.mxu0 0
    %2798 = vmatpush1.bf16.msra.mxu0 0
    %2799 = vmatprep.subr.bf16.mxu0 0
    %2800 = vmatpush1.bf16.msra.mxu0 0
    %2801 = vmatprep.subr.bf16.mxu0 0
    %2802 = vmatpush1.bf16.msra.mxu0 0
    %2803 = vmatprep.subr.bf16.mxu0 0
    %2804 = vmatpush1.bf16.msra.mxu0 0
    %2805 = vmatprep.mubr.bf16.mxu0 0
    %2806 = vmatmul.mubr.bf16.gmra.mrb[0].mxu0 %v2701
    %v2807 = vpop.f32.mrb[0].mxu0
    %v2808 = vadd.f32 %v2723, %v2807
    %v2809 = vpop.f32.mrb[0].mxu0
    %v2810 = vpop.f32.mrb[0].mxu0
    %v2811 = vpop.f32.mrb[0].mxu0
    %2812 = vdwg.mxu0
    %v2813 = vpack.c.bf16 %v2808, %v2808
    %v2814 = vld [vmem:[#allocation9] sm:$0xf]
    %v2815 = vld [vmem:[#allocation9 + $0x4] sm:$0xf]
    %v2816 = vld [vmem:[#allocation9 + $0x8] sm:$0xf]
    %v2817 = vld [vmem:[#allocation9 + $0xc] sm:$0xf]
    %v2818 = vld [vmem:[#allocation9 + $0x10] sm:$0xf]
    %v2819 = vld [vmem:[#allocation9 + $0x14] sm:$0xf]
    %v2820 = vld [vmem:[#allocation9 + $0x18] sm:$0xf]
    %v2821 = vld [vmem:[#allocation9 + $0x1c] sm:$0xf]
    %v2822 = vld [vmem:[#allocation9 + $0x20] sm:$0xf]
    %v2823 = vld [vmem:[#allocation9 + $0x24] sm:$0xf]
    %v2824 = vld [vmem:[#allocation9 + $0x28] sm:$0xf]
    %v2825 = vld [vmem:[#allocation9 + $0x2c] sm:$0xf]
    %v2826 = vld [vmem:[#allocation9 + $0x30] sm:$0xf]
    %v2827 = vld [vmem:[#allocation9 + $0x34] sm:$0xf]
    %v2828 = vld [vmem:[#allocation9 + $0x38] sm:$0xf]
    %v2829 = vld [vmem:[#allocation9 + $0x3c] sm:$0xf]
    %v2830 = vld [vmem:[%s10] sm:$0x1]
    %v2832 = vlaneseq
    %v2833 = vshrl.u32 %v2832, 7
    %v2834 = vsub.s32 0, %v2833
    %v2835 = vrot.slane %v2830, %v2834
    %v2853 = vunpack.c.l.b16 %v2814
    %v2854 = vunpack.c.l.b16 %v2815
    %v2855 = vunpack.c.l.b16 %v2816
    %v2856 = vunpack.c.l.b16 %v2817
    %v2857 = vunpack.c.l.b16 %v2818
    %v2858 = vunpack.c.l.b16 %v2819
    %v2859 = vunpack.c.l.b16 %v2820
    %v2860 = vunpack.c.l.b16 %v2821
    %v2861 = vunpack.c.l.b16 %v2822
    %v2862 = vunpack.c.l.b16 %v2823
    %v2863 = vunpack.c.l.b16 %v2824
    %v2864 = vunpack.c.l.b16 %v2825
    %v2865 = vunpack.c.l.b16 %v2826
    %v2866 = vunpack.c.l.b16 %v2827
    %v2867 = vunpack.c.l.b16 %v2828
    %v2868 = vunpack.c.l.b16 %v2829
    %v2869 = vpack.c.b16 %v2854, %v2853
    %v2870 = vpack.c.b16 %v2856, %v2855
    %v2871 = vpack.c.b16 %v2858, %v2857
    %v2872 = vpack.c.b16 %v2860, %v2859
    %v2873 = vpack.c.b16 %v2862, %v2861
    %v2874 = vpack.c.b16 %v2864, %v2863
    %v2875 = vpack.c.b16 %v2866, %v2865
    %v2876 = vpack.c.b16 %v2868, %v2867
    %2885 = vmatprep.subr.bf16.mxu0 0
    %2886 = vmatpush1.bf16.msra.mxu0 %v2869
    %2887 = vmatprep.subr.bf16.mxu0 0
    %2888 = vmatpush1.bf16.msra.mxu0 %v2870
    %2889 = vmatprep.subr.bf16.mxu0 0
    %2890 = vmatpush1.bf16.msra.mxu0 %v2871
    %2891 = vmatprep.subr.bf16.mxu0 0
    %2892 = vmatpush1.bf16.msra.mxu0 %v2872
    %2893 = vmatprep.subr.bf16.mxu0 0
    %2894 = vmatpush1.bf16.msra.mxu0 %v2873
    %2895 = vmatprep.subr.bf16.mxu0 0
    %2896 = vmatpush1.bf16.msra.mxu0 %v2874
    %2897 = vmatprep.subr.bf16.mxu0 0
    %2898 = vmatpush1.bf16.msra.mxu0 %v2875
    %2899 = vmatprep.subr.bf16.mxu0 0
    %2900 = vmatpush1.bf16.msra.mxu0 %v2876
    %2901 = vmatprep.subr.bf16.mxu0 0
    %2902 = vmatpush1.bf16.msra.mxu0 0
    %2903 = vmatprep.subr.bf16.mxu0 0
    %2904 = vmatpush1.bf16.msra.mxu0 0
    %2905 = vmatprep.subr.bf16.mxu0 0
    %2906 = vmatpush1.bf16.msra.mxu0 0
    %2907 = vmatprep.subr.bf16.mxu0 0
    %2908 = vmatpush1.bf16.msra.mxu0 0
    %2909 = vmatprep.subr.bf16.mxu0 0
    %2910 = vmatpush1.bf16.msra.mxu0 0
    %2911 = vmatprep.subr.bf16.mxu0 0
    %2912 = vmatpush1.bf16.msra.mxu0 0
    %2913 = vmatprep.subr.bf16.mxu0 0
    %2914 = vmatpush1.bf16.msra.mxu0 0
    %2915 = vmatprep.subr.bf16.mxu0 0
    %2916 = vmatpush1.bf16.msra.mxu0 0
    %2917 = vmatprep.mubr.bf16.mxu0 0
    %2918 = vmatmul.mubr.bf16.gmra.mrb[0].mxu0 %v2813
    %v2919 = vpop.f32.mrb[0].mxu0
    %v2920 = vadd.f32 %v2835, %v2919
    %v2921 = vpop.f32.mrb[0].mxu0
    %v2922 = vpop.f32.mrb[0].mxu0
    %v2923 = vpop.f32.mrb[0].mxu0
    %2924 = vdwg.mxu0
    %v2925 = vld [vmem:[#allocation3] sm:$0xff]
    %v2926 = vld [vmem:[#allocation3 + $0x8] sm:$0xff]
    %v2927 = vld [vmem:[#allocation3 + $0x10] sm:$0xff]
    %v2928 = vld [vmem:[#allocation3 + $0x18] sm:$0xff]
    %v2929 = vld [vmem:[#allocation3 + $0x20] sm:$0xff]
    %v2930 = vld [vmem:[#allocation3 + $0x28] sm:$0xff]
    %v2931 = vld [vmem:[#allocation3 + $0x30] sm:$0xff]
    %v2932 = vld [vmem:[#allocation3 + $0x38] sm:$0xff]
    %v2933 = vpack.c.bf16 %v2926, %v2925
    %v2934 = vpack.c.bf16 %v2928, %v2927
    %v2935 = vpack.c.bf16 %v2930, %v2929
    %v2936 = vpack.c.bf16 %v2932, %v2931
    %v2937 = vld [vmem:[#allocation7] sm:$0xf]
    %v2938 = vld [vmem:[#allocation7 + $0x4] sm:$0xf]
    %v2939 = vld [vmem:[#allocation7 + $0x8] sm:$0xf]
    %v2940 = vld [vmem:[#allocation7 + $0xc] sm:$0xf]
    %v2941 = vld [vmem:[#allocation7 + $0x10] sm:$0xf]
    %v2942 = vld [vmem:[#allocation7 + $0x14] sm:$0xf]
    %v2943 = vld [vmem:[#allocation7 + $0x18] sm:$0xf]
    %v2944 = vld [vmem:[#allocation7 + $0x1c] sm:$0xf]
    %v2945 = vld [vmem:[#allocation7 + $0x20] sm:$0xf]
    %v2946 = vld [vmem:[#allocation7 + $0x24] sm:$0xf]
    %v2947 = vld [vmem:[#allocation7 + $0x28] sm:$0xf]
    %v2948 = vld [vmem:[#allocation7 + $0x2c] sm:$0xf]
    %v2949 = vld [vmem:[#allocation7 + $0x30] sm:$0xf]
    %v2950 = vld [vmem:[#allocation7 + $0x34] sm:$0xf]
    %v2951 = vld [vmem:[#allocation7 + $0x38] sm:$0xf]
    %v2952 = vld [vmem:[#allocation7 + $0x3c] sm:$0xf]
    %v2969 = vunpack.c.l.b16 %v2937
    %v2970 = vunpack.c.l.b16 %v2938
    %v2971 = vunpack.c.l.b16 %v2939
    %v2972 = vunpack.c.l.b16 %v2940
    %v2973 = vunpack.c.l.b16 %v2941
    %v2974 = vunpack.c.l.b16 %v2942
    %v2975 = vunpack.c.l.b16 %v2943
    %v2976 = vunpack.c.l.b16 %v2944
    %v2977 = vunpack.c.l.b16 %v2945
    %v2978 = vunpack.c.l.b16 %v2946
    %v2979 = vunpack.c.l.b16 %v2947
    %v2980 = vunpack.c.l.b16 %v2948
    %v2981 = vunpack.c.l.b16 %v2949
    %v2982 = vunpack.c.l.b16 %v2950
    %v2983 = vunpack.c.l.b16 %v2951
    %v2984 = vunpack.c.l.b16 %v2952
    %v2985 = vpack.c.b16 %v2970, %v2969
    %v2986 = vpack.c.b16 %v2972, %v2971
    %v2987 = vpack.c.b16 %v2974, %v2973
    %v2988 = vpack.c.b16 %v2976, %v2975
    %v2989 = vpack.c.b16 %v2978, %v2977
    %v2990 = vpack.c.b16 %v2980, %v2979
    %v2991 = vpack.c.b16 %v2982, %v2981
    %v2992 = vpack.c.b16 %v2984, %v2983
    %3001 = vmatprep.subr.bf16.mxu0 0
    %3002 = vmatpush1.bf16.msra.mxu0 %v2985
    %3003 = vmatprep.subr.bf16.mxu0 0
    %3004 = vmatpush1.bf16.msra.mxu0 %v2986
    %3005 = vmatprep.subr.bf16.mxu0 0
    %3006 = vmatpush1.bf16.msra.mxu0 %v2987
    %3007 = vmatprep.subr.bf16.mxu0 0
    %3008 = vmatpush1.bf16.msra.mxu0 %v2988
    %3009 = vmatprep.subr.bf16.mxu0 0
    %3010 = vmatpush1.bf16.msra.mxu0 %v2989
    %3011 = vmatprep.subr.bf16.mxu0 0
    %3012 = vmatpush1.bf16.msra.mxu0 %v2990
    %3013 = vmatprep.subr.bf16.mxu0 0
    %3014 = vmatpush1.bf16.msra.mxu0 %v2991
    %3015 = vmatprep.subr.bf16.mxu0 0
    %3016 = vmatpush1.bf16.msra.mxu0 %v2992
    %3017 = vmatprep.subr.bf16.mxu0 0
    %3018 = vmatpush1.bf16.msra.mxu0 0
    %3019 = vmatprep.subr.bf16.mxu0 0
    %3020 = vmatpush1.bf16.msra.mxu0 0
    %3021 = vmatprep.subr.bf16.mxu0 0
    %3022 = vmatpush1.bf16.msra.mxu0 0
    %3023 = vmatprep.subr.bf16.mxu0 0
    %3024 = vmatpush1.bf16.msra.mxu0 0
    %3025 = vmatprep.subr.bf16.mxu0 0
    %3026 = vmatpush1.bf16.msra.mxu0 0
    %3027 = vmatprep.subr.bf16.mxu0 0
    %3028 = vmatpush1.bf16.msra.mxu0 0
    %3029 = vmatprep.subr.bf16.mxu0 0
    %3030 = vmatpush1.bf16.msra.mxu0 0
    %3031 = vmatprep.subr.bf16.mxu0 0
    %3032 = vmatpush1.bf16.msra.mxu0 0
    %3033 = vmatprep.mubr.bf16.mxu0 0
    %3034 = vmatmul.mubr.bf16.gmra.mrb[0].mxu0 %v2933
    %v3035 = vpop.f32.mrb[0].mxu0
    %v3036 = vadd.f32 0.0, %v3035
    %v3037 = vpop.f32.mrb[0].mxu0
    %v3038 = vpop.f32.mrb[0].mxu0
    %v3039 = vadd.f32 0.0, %v3038
    %v3040 = vpop.f32.mrb[0].mxu0
    %3041 = vmatprep.mubr.bf16.mxu0 0
    %3042 = vmatmul.mubr.bf16.gmra.mrb[0].mxu0 %v2934
    %v3043 = vpop.f32.mrb[0].mxu0
    %v3044 = vadd.f32 0.0, %v3043
    %v3045 = vpop.f32.mrb[0].mxu0
    %v3046 = vpop.f32.mrb[0].mxu0
    %v3047 = vadd.f32 0.0, %v3046
    %v3048 = vpop.f32.mrb[0].mxu0
    %3049 = vmatprep.mubr.bf16.mxu0 0
    %3050 = vmatmul.mubr.bf16.gmra.mrb[0].mxu0 %v2935
    %v3051 = vpop.f32.mrb[0].mxu0
    %v3052 = vadd.f32 0.0, %v3051
    %v3053 = vpop.f32.mrb[0].mxu0
    %v3054 = vpop.f32.mrb[0].mxu0
    %v3055 = vadd.f32 0.0, %v3054
    %v3056 = vpop.f32.mrb[0].mxu0
    %3057 = vmatprep.mubr.bf16.mxu0 0
    %3058 = vmatmul.mubr.bf16.gmra.mrb[0].mxu0 %v2936
    %v3059 = vpop.f32.mrb[0].mxu0
    %v3060 = vadd.f32 0.0, %v3059
    %v3061 = vpop.f32.mrb[0].mxu0
    %v3062 = vpop.f32.mrb[0].mxu0
    %v3063 = vadd.f32 0.0, %v3062
    %v3064 = vpop.f32.mrb[0].mxu0
    %3065 = vdwg.mxu0
    %v3066 = vadd.f32 %v3036, %v2920
    %v3067 = vadd.f32 %v3039, %v2920
    %v3068 = vadd.f32 %v3044, %v2920
    %v3069 = vadd.f32 %v3047, %v2920
    %v3070 = vadd.f32 %v3052, %v2920
    %v3071 = vadd.f32 %v3055, %v2920
    %v3072 = vadd.f32 %v3060, %v2920
    %v3073 = vadd.f32 %v3063, %v2920
    %v3074 = vtanh.pop %v3066
    %v3075 = vtanh.pop %v3067
    %v3076 = vtanh.pop %v3068
    %v3077 = vtanh.pop %v3069
    %v3078 = vtanh.pop %v3070
    %v3079 = vtanh.pop %v3071
    %v3080 = vtanh.pop %v3072
    %v3081 = vtanh.pop %v3073
    %v3082 = vld [vmem:[%s0] sm:$0xff]
    %v3083 = vld [vmem:[%s0 + $0x8] sm:$0xff]
    %v3084 = vld [vmem:[%s0 + $0x10] sm:$0xff]
    %v3085 = vld [vmem:[%s0 + $0x18] sm:$0xff]
    %v3086 = vld [vmem:[%s0 + $0x20] sm:$0xff]
    %v3087 = vld [vmem:[%s0 + $0x28] sm:$0xff]
    %v3088 = vld [vmem:[%s0 + $0x30] sm:$0xff]
    %v3089 = vld [vmem:[%s0 + $0x38] sm:$0xff]
    %v3090 = vtanh.pop %v3082
    %v3091 = vtanh.pop %v3083
    %v3092 = vtanh.pop %v3084
    %v3093 = vtanh.pop %v3085
    %v3094 = vtanh.pop %v3086
    %v3095 = vtanh.pop %v3087
    %v3096 = vtanh.pop %v3088
    %v3097 = vtanh.pop %v3089
    %v3098 = vtanh.pop %v3090
    %v3099 = vtanh.pop %v3091
    %v3100 = vtanh.pop %v3092
    %v3101 = vtanh.pop %v3093
    %v3102 = vtanh.pop %v3094
    %v3103 = vtanh.pop %v3095
    %v3104 = vtanh.pop %v3096
    %v3105 = vtanh.pop %v3097
    %v3106 = vpack.c.bf16 %v3075, %v3074
    %v3107 = vpack.c.bf16 %v3077, %v3076
    %v3108 = vpack.c.bf16 %v3079, %v3078
    %v3109 = vpack.c.bf16 %v3081, %v3080
    %v3110 = vld [vmem:[#allocation10] sm:$0xff]
    %v3111 = vld [vmem:[#allocation10 + $0x8] sm:$0xf]
    %v3112 = vld [vmem:[#allocation10 + $0xc] sm:$0xff]
    %v3113 = vld [vmem:[#allocation10 + $0x14] sm:$0xf]
    %v3114 = vld [vmem:[#allocation10 + $0x18] sm:$0xff]
    %v3115 = vld [vmem:[#allocation10 + $0x20] sm:$0xf]
    %v3116 = vld [vmem:[#allocation10 + $0x24] sm:$0xff]
    %v3117 = vld [vmem:[#allocation10 + $0x2c] sm:$0xf]
    %v3118 = vld [vmem:[#allocation10 + $0x30] sm:$0xff]
    %v3119 = vld [vmem:[#allocation10 + $0x38] sm:$0xf]
    %v3120 = vld [vmem:[#allocation10 + $0x3c] sm:$0xff]
    %v3121 = vld [vmem:[#allocation10 + $0x44] sm:$0xf]
    %v3122 = vld [vmem:[#allocation10 + $0x48] sm:$0xff]
    %v3123 = vld [vmem:[#allocation10 + $0x50] sm:$0xf]
    %v3124 = vld [vmem:[#allocation10 + $0x54] sm:$0xff]
    %v3125 = vld [vmem:[#allocation10 + $0x5c] sm:$0xf]
    %v3126 = vld [vmem:[#allocation10 + $0x60] sm:$0xff]
    %v3127 = vld [vmem:[#allocation10 + $0x68] sm:$0xf]
    %v3128 = vld [vmem:[#allocation10 + $0x6c] sm:$0xff]
    %v3129 = vld [vmem:[#allocation10 + $0x74] sm:$0xf]
    %v3130 = vld [vmem:[#allocation10 + $0x78] sm:$0xff]
    %v3131 = vld [vmem:[#allocation10 + $0x80] sm:$0xf]
    %v3132 = vld [vmem:[#allocation10 + $0x84] sm:$0xff]
    %v3133 = vld [vmem:[#allocation10 + $0x8c] sm:$0xf]
    %v3134 = vld [vmem:[#allocation10 + $0x90] sm:$0xff]
    %v3135 = vld [vmem:[#allocation10 + $0x98] sm:$0xf]
    %v3136 = vld [vmem:[#allocation10 + $0x9c] sm:$0xff]
    %v3137 = vld [vmem:[#allocation10 + $0xa4] sm:$0xf]
    %v3138 = vld [vmem:[#allocation10 + $0xa8] sm:$0xff]
    %v3139 = vld [vmem:[#allocation10 + $0xb0] sm:$0xf]
    %v3140 = vld [vmem:[#allocation10 + $0xb4] sm:$0xff]
    %v3141 = vld [vmem:[#allocation10 + $0xbc] sm:$0xf]
    %v3142 = vpack.c.bf16 %v3099, %v3098
    %v3143 = vpack.c.bf16 %v3101, %v3100
    %v3144 = vpack.c.bf16 %v3103, %v3102
    %v3145 = vpack.c.bf16 %v3105, %v3104
    %v3146 = vld [vmem:[#allocation12] sm:$0xff]
    %v3147 = vld [vmem:[#allocation12 + $0x8] sm:$0xf]
    %v3148 = vld [vmem:[#allocation12 + $0xc] sm:$0xff]
    %v3149 = vld [vmem:[#allocation12 + $0x14] sm:$0xf]
    %v3150 = vld [vmem:[#allocation12 + $0x18] sm:$0xff]
    %v3151 = vld [vmem:[#allocation12 + $0x20] sm:$0xf]
    %v3152 = vld [vmem:[#allocation12 + $0x24] sm:$0xff]
    %v3153 = vld [vmem:[#allocation12 + $0x2c] sm:$0xf]
    %v3154 = vld [vmem:[#allocation12 + $0x30] sm:$0xff]
    %v3155 = vld [vmem:[#allocation12 + $0x38] sm:$0xf]
    %v3156 = vld [vmem:[#allocation12 + $0x3c] sm:$0xff]
    %v3157 = vld [vmem:[#allocation12 + $0x44] sm:$0xf]
    %v3158 = vld [vmem:[#allocation12 + $0x48] sm:$0xff]
    %v3159 = vld [vmem:[#allocation12 + $0x50] sm:$0xf]
    %v3160 = vld [vmem:[#allocation12 + $0x54] sm:$0xff]
    %v3161 = vld [vmem:[#allocation12 + $0x5c] sm:$0xf]
    %v3162 = vld [vmem:[#allocation12 + $0x60] sm:$0xff]
    %v3163 = vld [vmem:[#allocation12 + $0x68] sm:$0xf]
    %v3164 = vld [vmem:[#allocation12 + $0x6c] sm:$0xff]
    %v3165 = vld [vmem:[#allocation12 + $0x74] sm:$0xf]
    %v3166 = vld [vmem:[#allocation12 + $0x78] sm:$0xff]
    %v3167 = vld [vmem:[#allocation12 + $0x80] sm:$0xf]
    %v3168 = vld [vmem:[#allocation12 + $0x84] sm:$0xff]
    %v3169 = vld [vmem:[#allocation12 + $0x8c] sm:$0xf]
    %v3170 = vld [vmem:[#allocation12 + $0x90] sm:$0xff]
    %v3171 = vld [vmem:[#allocation12 + $0x98] sm:$0xf]
    %v3172 = vld [vmem:[#allocation12 + $0x9c] sm:$0xff]
    %v3173 = vld [vmem:[#allocation12 + $0xa4] sm:$0xf]
    %v3174 = vld [vmem:[#allocation12 + $0xa8] sm:$0xff]
    %v3175 = vld [vmem:[#allocation12 + $0xb0] sm:$0xf]
    %v3176 = vld [vmem:[#allocation12 + $0xb4] sm:$0xff]
    %v3177 = vld [vmem:[#allocation12 + $0xbc] sm:$0xf]
    %v3210 = vunpack.c.l.b16 %v3146
    %v3211 = vunpack.c.h.b16 %v3146
    %v3212 = vunpack.c.l.b16 %v3147
    %v3213 = vunpack.c.l.b16 %v3148
    %v3214 = vunpack.c.h.b16 %v3148
    %v3215 = vunpack.c.l.b16 %v3149
    %v3216 = vunpack.c.l.b16 %v3150
    %v3217 = vunpack.c.h.b16 %v3150
    %v3218 = vunpack.c.l.b16 %v3151
    %v3219 = vunpack.c.l.b16 %v3152
    %v3220 = vunpack.c.h.b16 %v3152
    %v3221 = vunpack.c.l.b16 %v3153
    %v3222 = vunpack.c.l.b16 %v3154
    %v3223 = vunpack.c.h.b16 %v3154
    %v3224 = vunpack.c.l.b16 %v3155
    %v3225 = vunpack.c.l.b16 %v3156
    %v3226 = vunpack.c.h.b16 %v3156
    %v3227 = vunpack.c.l.b16 %v3157
    %v3228 = vunpack.c.l.b16 %v3158
    %v3229 = vunpack.c.h.b16 %v3158
    %v3230 = vunpack.c.l.b16 %v3159
    %v3231 = vunpack.c.l.b16 %v3160
    %v3232 = vunpack.c.h.b16 %v3160
    %v3233 = vunpack.c.l.b16 %v3161
    %v3234 = vunpack.c.l.b16 %v3162
    %v3235 = vunpack.c.h.b16 %v3162
    %v3236 = vunpack.c.l.b16 %v3163
    %v3237 = vunpack.c.l.b16 %v3164
    %v3238 = vunpack.c.h.b16 %v3164
    %v3239 = vunpack.c.l.b16 %v3165
    %v3240 = vunpack.c.l.b16 %v3166
    %v3241 = vunpack.c.h.b16 %v3166
    %v3242 = vunpack.c.l.b16 %v3167
    %v3243 = vunpack.c.l.b16 %v3168
    %v3244 = vunpack.c.h.b16 %v3168
    %v3245 = vunpack.c.l.b16 %v3169
    %v3246 = vunpack.c.l.b16 %v3170
    %v3247 = vunpack.c.h.b16 %v3170
    %v3248 = vunpack.c.l.b16 %v3171
    %v3249 = vunpack.c.l.b16 %v3172
    %v3250 = vunpack.c.h.b16 %v3172
    %v3251 = vunpack.c.l.b16 %v3173
    %v3252 = vunpack.c.l.b16 %v3174
    %v3253 = vunpack.c.h.b16 %v3174
    %v3254 = vunpack.c.l.b16 %v3175
    %v3255 = vunpack.c.l.b16 %v3176
    %v3256 = vunpack.c.h.b16 %v3176
    %v3257 = vunpack.c.l.b16 %v3177
    %v3258 = vpack.c.b16 %v3213, %v3210
    %v3259 = vpack.c.b16 %v3214, %v3211
    %v3260 = vpack.c.b16 %v3215, %v3212
    %v3261 = vpack.c.b16 %v3219, %v3216
    %v3262 = vpack.c.b16 %v3220, %v3217
    %v3263 = vpack.c.b16 %v3221, %v3218
    %v3264 = vpack.c.b16 %v3225, %v3222
    %v3265 = vpack.c.b16 %v3226, %v3223
    %v3266 = vpack.c.b16 %v3227, %v3224
    %v3267 = vpack.c.b16 %v3231, %v3228
    %v3268 = vpack.c.b16 %v3232, %v3229
    %v3269 = vpack.c.b16 %v3233, %v3230
    %v3270 = vpack.c.b16 %v3237, %v3234
    %v3271 = vpack.c.b16 %v3238, %v3235
    %v3272 = vpack.c.b16 %v3239, %v3236
    %v3273 = vpack.c.b16 %v3243, %v3240
    %v3274 = vpack.c.b16 %v3244, %v3241
    %v3275 = vpack.c.b16 %v3245, %v3242
    %v3276 = vpack.c.b16 %v3249, %v3246
    %v3277 = vpack.c.b16 %v3250, %v3247
    %v3278 = vpack.c.b16 %v3251, %v3248
    %v3279 = vpack.c.b16 %v3255, %v3252
    %v3280 = vpack.c.b16 %v3256, %v3253
    %v3281 = vpack.c.b16 %v3257, %v3254
    %3306 = vmatprep.subr.bf16.mxu0 %v3259
    %3307 = vmatpush1.bf16.msra.mxu0 %v3258
    %3308 = vmatprep.subr.bf16.mxu0 %v3262
    %3309 = vmatpush1.bf16.msra.mxu0 %v3261
    %3310 = vmatprep.subr.bf16.mxu0 %v3265
    %3311 = vmatpush1.bf16.msra.mxu0 %v3264
    %3312 = vmatprep.subr.bf16.mxu0 %v3268
    %3313 = vmatpush1.bf16.msra.mxu0 %v3267
    %3314 = vmatprep.subr.bf16.mxu0 %v3271
    %3315 = vmatpush1.bf16.msra.mxu0 %v3270
    %3316 = vmatprep.subr.bf16.mxu0 %v3274
    %3317 = vmatpush1.bf16.msra.mxu0 %v3273
    %3318 = vmatprep.subr.bf16.mxu0 %v3277
    %3319 = vmatpush1.bf16.msra.mxu0 %v3276
    %3320 = vmatprep.subr.bf16.mxu0 %v3280
    %3321 = vmatpush1.bf16.msra.mxu0 %v3279
    %3322 = vmatprep.subr.bf16.mxu0 0
    %3323 = vmatpush1.bf16.msra.mxu0 0
    %3324 = vmatprep.subr.bf16.mxu0 0
    %3325 = vmatpush1.bf16.msra.mxu0 0
    %3326 = vmatprep.subr.bf16.mxu0 0
    %3327 = vmatpush1.bf16.msra.mxu0 0
    %3328 = vmatprep.subr.bf16.mxu0 0
    %3329 = vmatpush1.bf16.msra.mxu0 0
    %3330 = vmatprep.subr.bf16.mxu0 0
    %3331 = vmatpush1.bf16.msra.mxu0 0
    %3332 = vmatprep.subr.bf16.mxu0 0
    %3333 = vmatpush1.bf16.msra.mxu0 0
    %3334 = vmatprep.subr.bf16.mxu0 0
    %3335 = vmatpush1.bf16.msra.mxu0 0
    %3336 = vmatprep.subr.bf16.mxu0 0
    %3337 = vmatpush1.bf16.msra.mxu0 0
    %3338 = vmatprep.mubr.bf16.mxu0 0
    %3339 = vmatmul.mubr.bf16.gmra.mrb[0].mxu0 %v3142
    %v3340 = vpop.f32.mrb[0].mxu0
    %v3341 = vadd.f32 0.0, %v3340
    %v3342 = vpop.f32.mrb[0].mxu0
    %v3343 = vadd.f32 0.0, %v3342
    %v3344 = vpop.f32.mrb[0].mxu0
    %v3345 = vadd.f32 0.0, %v3344
    %v3346 = vpop.f32.mrb[0].mxu0
    %v3347 = vadd.f32 0.0, %v3346
    %3348 = vmatprep.mubr.bf16.mxu0 0
    %3349 = vmatmul.mubr.bf16.gmra.mrb[0].mxu0 %v3143
    %v3350 = vpop.f32.mrb[0].mxu0
    %v3351 = vadd.f32 0.0, %v3350
    %v3352 = vpop.f32.mrb[0].mxu0
    %v3353 = vadd.f32 0.0, %v3352
    %v3354 = vpop.f32.mrb[0].mxu0
    %v3355 = vadd.f32 0.0, %v3354
    %v3356 = vpop.f32.mrb[0].mxu0
    %v3357 = vadd.f32 0.0, %v3356
    %3358 = vmatprep.mubr.bf16.mxu0 0
    %3359 = vmatmul.mubr.bf16.gmra.mrb[0].mxu0 %v3144
    %v3360 = vpop.f32.mrb[0].mxu0
    %v3361 = vadd.f32 0.0, %v3360
    %v3362 = vpop.f32.mrb[0].mxu0
    %v3363 = vadd.f32 0.0, %v3362
    %v3364 = vpop.f32.mrb[0].mxu0
    %v3365 = vadd.f32 0.0, %v3364
    %v3366 = vpop.f32.mrb[0].mxu0
    %v3367 = vadd.f32 0.0, %v3366
    %3368 = vmatprep.mubr.bf16.mxu0 0
    %3369 = vmatmul.mubr.bf16.gmra.mrb[0].mxu0 %v3145
    %v3370 = vpop.f32.mrb[0].mxu0
    %v3371 = vadd.f32 0.0, %v3370
    %v3372 = vpop.f32.mrb[0].mxu0
    %v3373 = vadd.f32 0.0, %v3372
    %v3374 = vpop.f32.mrb[0].mxu0
    %v3375 = vadd.f32 0.0, %v3374
    %v3376 = vpop.f32.mrb[0].mxu0
    %v3377 = vadd.f32 0.0, %v3376
    %3378 = vdwg.mxu0
    %3379 = vmatprep.subr.bf16.mxu0 0
    %3380 = vmatpush1.bf16.msra.mxu0 %v3260
    %3381 = vmatprep.subr.bf16.mxu0 0
    %3382 = vmatpush1.bf16.msra.mxu0 %v3263
    %3383 = vmatprep.subr.bf16.mxu0 0
    %3384 = vmatpush1.bf16.msra.mxu0 %v3266
    %3385 = vmatprep.subr.bf16.mxu0 0
    %3386 = vmatpush1.bf16.msra.mxu0 %v3269
    %3387 = vmatprep.subr.bf16.mxu0 0
    %3388 = vmatpush1.bf16.msra.mxu0 %v3272
    %3389 = vmatprep.subr.bf16.mxu0 0
    %3390 = vmatpush1.bf16.msra.mxu0 %v3275
    %3391 = vmatprep.subr.bf16.mxu0 0
    %3392 = vmatpush1.bf16.msra.mxu0 %v3278
    %3393 = vmatprep.subr.bf16.mxu0 0
    %3394 = vmatpush1.bf16.msra.mxu0 %v3281
    %3395 = vmatprep.subr.bf16.mxu0 0
    %3396 = vmatpush1.bf16.msra.mxu0 0
    %3397 = vmatprep.subr.bf16.mxu0 0
    %3398 = vmatpush1.bf16.msra.mxu0 0
    %3399 = vmatprep.subr.bf16.mxu0 0
    %3400 = vmatpush1.bf16.msra.mxu0 0
    %3401 = vmatprep.subr.bf16.mxu0 0
    %3402 = vmatpush1.bf16.msra.mxu0 0
    %3403 = vmatprep.subr.bf16.mxu0 0
    %3404 = vmatpush1.bf16.msra.mxu0 0
    %3405 = vmatprep.subr.bf16.mxu0 0
    %3406 = vmatpush1.bf16.msra.mxu0 0
    %3407 = vmatprep.subr.bf16.mxu0 0
    %3408 = vmatpush1.bf16.msra.mxu0 0
    %3409 = vmatprep.subr.bf16.mxu0 0
    %3410 = vmatpush1.bf16.msra.mxu0 0
    %3411 = vmatprep.mubr.bf16.mxu0 0
    %3412 = vmatmul.mubr.bf16.gmra.mrb[0].mxu0 %v3142
    %v3413 = vpop.f32.mrb[0].mxu0
    %v3414 = vadd.f32 0.0, %v3413
    %v3415 = vpop.f32.mrb[0].mxu0
    %v3416 = vpop.f32.mrb[0].mxu0
    %v3417 = vadd.f32 0.0, %v3416
    %v3418 = vpop.f32.mrb[0].mxu0
    %3419 = vmatprep.mubr.bf16.mxu0 0
    %3420 = vmatmul.mubr.bf16.gmra.mrb[0].mxu0 %v3143
    %v3421 = vpop.f32.mrb[0].mxu0
    %v3422 = vadd.f32 0.0, %v3421
    %v3423 = vpop.f32.mrb[0].mxu0
    %v3424 = vpop.f32.mrb[0].mxu0
    %v3425 = vadd.f32 0.0, %v3424
    %v3426 = vpop.f32.mrb[0].mxu0
    %3427 = vmatprep.mubr.bf16.mxu0 0
    %3428 = vmatmul.mubr.bf16.gmra.mrb[0].mxu0 %v3144
    %v3429 = vpop.f32.mrb[0].mxu0
    %v3430 = vadd.f32 0.0, %v3429
    %v3431 = vpop.f32.mrb[0].mxu0
    %v3432 = vpop.f32.mrb[0].mxu0
    %v3433 = vadd.f32 0.0, %v3432
    %v3434 = vpop.f32.mrb[0].mxu0
    %3435 = vmatprep.mubr.bf16.mxu0 0
    %3436 = vmatmul.mubr.bf16.gmra.mrb[0].mxu0 %v3145
    %v3437 = vpop.f32.mrb[0].mxu0
    %v3438 = vadd.f32 0.0, %v3437
    %v3439 = vpop.f32.mrb[0].mxu0
    %v3440 = vpop.f32.mrb[0].mxu0
    %v3441 = vadd.f32 0.0, %v3440
    %v3442 = vpop.f32.mrb[0].mxu0
    %3443 = vdwg.mxu0
    %v3476 = vunpack.c.l.b16 %v3110
    %v3477 = vunpack.c.h.b16 %v3110
    %v3478 = vunpack.c.l.b16 %v3111
    %v3479 = vunpack.c.l.b16 %v3112
    %v3480 = vunpack.c.h.b16 %v3112
    %v3481 = vunpack.c.l.b16 %v3113
    %v3482 = vunpack.c.l.b16 %v3114
    %v3483 = vunpack.c.h.b16 %v3114
    %v3484 = vunpack.c.l.b16 %v3115
    %v3485 = vunpack.c.l.b16 %v3116
    %v3486 = vunpack.c.h.b16 %v3116
    %v3487 = vunpack.c.l.b16 %v3117
    %v3488 = vunpack.c.l.b16 %v3118
    %v3489 = vunpack.c.h.b16 %v3118
    %v3490 = vunpack.c.l.b16 %v3119
    %v3491 = vunpack.c.l.b16 %v3120
    %v3492 = vunpack.c.h.b16 %v3120
    %v3493 = vunpack.c.l.b16 %v3121
    %v3494 = vunpack.c.l.b16 %v3122
    %v3495 = vunpack.c.h.b16 %v3122
    %v3496 = vunpack.c.l.b16 %v3123
    %v3497 = vunpack.c.l.b16 %v3124
    %v3498 = vunpack.c.h.b16 %v3124
    %v3499 = vunpack.c.l.b16 %v3125
    %v3500 = vunpack.c.l.b16 %v3126
    %v3501 = vunpack.c.h.b16 %v3126
    %v3502 = vunpack.c.l.b16 %v3127
    %v3503 = vunpack.c.l.b16 %v3128
    %v3504 = vunpack.c.h.b16 %v3128
    %v3505 = vunpack.c.l.b16 %v3129
    %v3506 = vunpack.c.l.b16 %v3130
    %v3507 = vunpack.c.h.b16 %v3130
    %v3508 = vunpack.c.l.b16 %v3131
    %v3509 = vunpack.c.l.b16 %v3132
    %v3510 = vunpack.c.h.b16 %v3132
    %v3511 = vunpack.c.l.b16 %v3133
    %v3512 = vunpack.c.l.b16 %v3134
    %v3513 = vunpack.c.h.b16 %v3134
    %v3514 = vunpack.c.l.b16 %v3135
    %v3515 = vunpack.c.l.b16 %v3136
    %v3516 = vunpack.c.h.b16 %v3136
    %v3517 = vunpack.c.l.b16 %v3137
    %v3518 = vunpack.c.l.b16 %v3138
    %v3519 = vunpack.c.h.b16 %v3138
    %v3520 = vunpack.c.l.b16 %v3139
    %v3521 = vunpack.c.l.b16 %v3140
    %v3522 = vunpack.c.h.b16 %v3140
    %v3523 = vunpack.c.l.b16 %v3141
    %v3524 = vpack.c.b16 %v3479, %v3476
    %v3525 = vpack.c.b16 %v3480, %v3477
    %v3526 = vpack.c.b16 %v3481, %v3478
    %v3527 = vpack.c.b16 %v3485, %v3482
    %v3528 = vpack.c.b16 %v3486, %v3483
    %v3529 = vpack.c.b16 %v3487, %v3484
    %v3530 = vpack.c.b16 %v3491, %v3488
    %v3531 = vpack.c.b16 %v3492, %v3489
    %v3532 = vpack.c.b16 %v3493, %v3490
    %v3533 = vpack.c.b16 %v3497, %v3494
    %v3534 = vpack.c.b16 %v3498, %v3495
    %v3535 = vpack.c.b16 %v3499, %v3496
    %v3536 = vpack.c.b16 %v3503, %v3500
    %v3537 = vpack.c.b16 %v3504, %v3501
    %v3538 = vpack.c.b16 %v3505, %v3502
    %v3539 = vpack.c.b16 %v3509, %v3506
    %v3540 = vpack.c.b16 %v3510, %v3507
    %v3541 = vpack.c.b16 %v3511, %v3508
    %v3542 = vpack.c.b16 %v3515, %v3512
    %v3543 = vpack.c.b16 %v3516, %v3513
    %v3544 = vpack.c.b16 %v3517, %v3514
    %v3545 = vpack.c.b16 %v3521, %v3518
    %v3546 = vpack.c.b16 %v3522, %v3519
    %v3547 = vpack.c.b16 %v3523, %v3520
    %3572 = vmatprep.subr.bf16.mxu0 %v3525
    %3573 = vmatpush1.bf16.msra.mxu0 %v3524
    %3574 = vmatprep.subr.bf16.mxu0 %v3528
    %3575 = vmatpush1.bf16.msra.mxu0 %v3527
    %3576 = vmatprep.subr.bf16.mxu0 %v3531
    %3577 = vmatpush1.bf16.msra.mxu0 %v3530
    %3578 = vmatprep.subr.bf16.mxu0 %v3534
    %3579 = vmatpush1.bf16.msra.mxu0 %v3533
    %3580 = vmatprep.subr.bf16.mxu0 %v3537
    %3581 = vmatpush1.bf16.msra.mxu0 %v3536
    %3582 = vmatprep.subr.bf16.mxu0 %v3540
    %3583 = vmatpush1.bf16.msra.mxu0 %v3539
    %3584 = vmatprep.subr.bf16.mxu0 %v3543
    %3585 = vmatpush1.bf16.msra.mxu0 %v3542
    %3586 = vmatprep.subr.bf16.mxu0 %v3546
    %3587 = vmatpush1.bf16.msra.mxu0 %v3545
    %3588 = vmatprep.subr.bf16.mxu0 0
    %3589 = vmatpush1.bf16.msra.mxu0 0
    %3590 = vmatprep.subr.bf16.mxu0 0
    %3591 = vmatpush1.bf16.msra.mxu0 0
    %3592 = vmatprep.subr.bf16.mxu0 0
    %3593 = vmatpush1.bf16.msra.mxu0 0
    %3594 = vmatprep.subr.bf16.mxu0 0
    %3595 = vmatpush1.bf16.msra.mxu0 0
    %3596 = vmatprep.subr.bf16.mxu0 0
    %3597 = vmatpush1.bf16.msra.mxu0 0
    %3598 = vmatprep.subr.bf16.mxu0 0
    %3599 = vmatpush1.bf16.msra.mxu0 0
    %3600 = vmatprep.subr.bf16.mxu0 0
    %3601 = vmatpush1.bf16.msra.mxu0 0
    %3602 = vmatprep.subr.bf16.mxu0 0
    %3603 = vmatpush1.bf16.msra.mxu0 0
    %3604 = vmatprep.mubr.bf16.mxu0 0
    %3605 = vmatmul.mubr.bf16.gmra.mrb[0].mxu0 %v3106
    %v3606 = vpop.f32.mrb[0].mxu0
    %v3607 = vadd.f32 %v3341, %v3606
    %v3608 = vpop.f32.mrb[0].mxu0
    %v3609 = vadd.f32 %v3343, %v3608
    %v3610 = vpop.f32.mrb[0].mxu0
    %v3611 = vadd.f32 %v3345, %v3610
    %v3612 = vpop.f32.mrb[0].mxu0
    %v3613 = vadd.f32 %v3347, %v3612
    %3614 = vmatprep.mubr.bf16.mxu0 0
    %3615 = vmatmul.mubr.bf16.gmra.mrb[0].mxu0 %v3107
    %v3616 = vpop.f32.mrb[0].mxu0
    %v3617 = vadd.f32 %v3351, %v3616
    %v3618 = vpop.f32.mrb[0].mxu0
    %v3619 = vadd.f32 %v3353, %v3618
    %v3620 = vpop.f32.mrb[0].mxu0
    %v3621 = vadd.f32 %v3355, %v3620
    %v3622 = vpop.f32.mrb[0].mxu0
    %v3623 = vadd.f32 %v3357, %v3622
    %3624 = vmatprep.mubr.bf16.mxu0 0
    %3625 = vmatmul.mubr.bf16.gmra.mrb[0].mxu0 %v3108
    %v3626 = vpop.f32.mrb[0].mxu0
    %v3627 = vadd.f32 %v3361, %v3626
    %v3628 = vpop.f32.mrb[0].mxu0
    %v3629 = vadd.f32 %v3363, %v3628
    %v3630 = vpop.f32.mrb[0].mxu0
    %v3631 = vadd.f32 %v3365, %v3630
    %v3632 = vpop.f32.mrb[0].mxu0
    %v3633 = vadd.f32 %v3367, %v3632
    %3634 = vmatprep.mubr.bf16.mxu0 0
    %3635 = vmatmul.mubr.bf16.gmra.mrb[0].mxu0 %v3109
    %v3636 = vpop.f32.mrb[0].mxu0
    %v3637 = vadd.f32 %v3371, %v3636
    %v3638 = vpop.f32.mrb[0].mxu0
    %v3639 = vadd.f32 %v3373, %v3638
    %v3640 = vpop.f32.mrb[0].mxu0
    %v3641 = vadd.f32 %v3375, %v3640
    %v3642 = vpop.f32.mrb[0].mxu0
    %v3643 = vadd.f32 %v3377, %v3642
    %3644 = vdwg.mxu0
    %3645 = vmatprep.subr.bf16.mxu0 0
    %3646 = vmatpush1.bf16.msra.mxu0 %v3526
    %3647 = vmatprep.subr.bf16.mxu0 0
    %3648 = vmatpush1.bf16.msra.mxu0 %v3529
    %3649 = vmatprep.subr.bf16.mxu0 0
    %3650 = vmatpush1.bf16.msra.mxu0 %v3532
    %3651 = vmatprep.subr.bf16.mxu0 0
    %3652 = vmatpush1.bf16.msra.mxu0 %v3535
    %3653 = vmatprep.subr.bf16.mxu0 0
    %3654 = vmatpush1.bf16.msra.mxu0 %v3538
    %3655 = vmatprep.subr.bf16.mxu0 0
    %3656 = vmatpush1.bf16.msra.mxu0 %v3541
    %3657 = vmatprep.subr.bf16.mxu0 0
    %3658 = vmatpush1.bf16.msra.mxu0 %v3544
    %3659 = vmatprep.subr.bf16.mxu0 0
    %3660 = vmatpush1.bf16.msra.mxu0 %v3547
    %3661 = vmatprep.subr.bf16.mxu0 0
    %3662 = vmatpush1.bf16.msra.mxu0 0
    %3663 = vmatprep.subr.bf16.mxu0 0
    %3664 = vmatpush1.bf16.msra.mxu0 0
    %3665 = vmatprep.subr.bf16.mxu0 0
    %3666 = vmatpush1.bf16.msra.mxu0 0
    %3667 = vmatprep.subr.bf16.mxu0 0
    %3668 = vmatpush1.bf16.msra.mxu0 0
    %3669 = vmatprep.subr.bf16.mxu0 0
    %3670 = vmatpush1.bf16.msra.mxu0 0
    %3671 = vmatprep.subr.bf16.mxu0 0
    %3672 = vmatpush1.bf16.msra.mxu0 0
    %3673 = vmatprep.subr.bf16.mxu0 0
    %3674 = vmatpush1.bf16.msra.mxu0 0
    %3675 = vmatprep.subr.bf16.mxu0 0
    %3676 = vmatpush1.bf16.msra.mxu0 0
    %3677 = vmatprep.mubr.bf16.mxu0 0
    %3678 = vmatmul.mubr.bf16.gmra.mrb[0].mxu0 %v3106
    %v3679 = vpop.f32.mrb[0].mxu0
    %v3680 = vadd.f32 %v3414, %v3679
    %v3681 = vpop.f32.mrb[0].mxu0
    %v3682 = vpop.f32.mrb[0].mxu0
    %v3683 = vadd.f32 %v3417, %v3682
    %v3684 = vpop.f32.mrb[0].mxu0
    %3685 = vmatprep.mubr.bf16.mxu0 0
    %3686 = vmatmul.mubr.bf16.gmra.mrb[0].mxu0 %v3107
    %v3687 = vpop.f32.mrb[0].mxu0
    %v3688 = vadd.f32 %v3422, %v3687
    %v3689 = vpop.f32.mrb[0].mxu0
    %v3690 = vpop.f32.mrb[0].mxu0
    %v3691 = vadd.f32 %v3425, %v3690
    %v3692 = vpop.f32.mrb[0].mxu0
    %3693 = vmatprep.mubr.bf16.mxu0 0
    %3694 = vmatmul.mubr.bf16.gmra.mrb[0].mxu0 %v3108
    %v3695 = vpop.f32.mrb[0].mxu0
    %v3696 = vadd.f32 %v3430, %v3695
    %v3697 = vpop.f32.mrb[0].mxu0
    %v3698 = vpop.f32.mrb[0].mxu0
    %v3699 = vadd.f32 %v3433, %v3698
    %v3700 = vpop.f32.mrb[0].mxu0
    %3701 = vmatprep.mubr.bf16.mxu0 0
    %3702 = vmatmul.mubr.bf16.gmra.mrb[0].mxu0 %v3109
    %v3703 = vpop.f32.mrb[0].mxu0
    %v3704 = vadd.f32 %v3438, %v3703
    %v3705 = vpop.f32.mrb[0].mxu0
    %v3706 = vpop.f32.mrb[0].mxu0
    %v3707 = vadd.f32 %v3441, %v3706
    %v3708 = vpop.f32.mrb[0].mxu0
    %3709 = vdwg.mxu0
    %v3710 = vld [vmem:[%s14] sm:$0x7]
    %v3712 = vlaneseq
    %v3713 = vshrl.u32 %v3712, 7
    %v3714 = vsub.s32 0, %v3713
    %v3715 = vrot.slane %v3710, %v3714
    %v3716 = vlaneseq
    %v3717 = vshrl.u32 %v3716, 7
    %v3718 = vsub.s32 1, %v3717
    %v3719 = vrot.slane %v3710, %v3718
    %v3720 = vlaneseq
    %v3721 = vshrl.u32 %v3720, 7
    %v3722 = vsub.s32 2, %v3721
    %v3723 = vrot.slane %v3710, %v3722
    %v3727 = vadd.f32 %v3607, %v3715
    %v3728 = vadd.f32 %v3609, %v3719
    %v3729 = vadd.f32 %v3680, %v3723
    %v3730 = vadd.f32 %v3611, %v3715
    %v3731 = vadd.f32 %v3613, %v3719
    %v3732 = vadd.f32 %v3683, %v3723
    %v3733 = vadd.f32 %v3617, %v3715
    %v3734 = vadd.f32 %v3619, %v3719
    %v3735 = vadd.f32 %v3688, %v3723
    %v3736 = vadd.f32 %v3621, %v3715
    %v3737 = vadd.f32 %v3623, %v3719
    %v3738 = vadd.f32 %v3691, %v3723
    %v3739 = vadd.f32 %v3627, %v3715
    %v3740 = vadd.f32 %v3629, %v3719
    %v3741 = vadd.f32 %v3696, %v3723
    %v3742 = vadd.f32 %v3631, %v3715
    %v3743 = vadd.f32 %v3633, %v3719
    %v3744 = vadd.f32 %v3699, %v3723
    %v3745 = vadd.f32 %v3637, %v3715
    %v3746 = vadd.f32 %v3639, %v3719
    %v3747 = vadd.f32 %v3704, %v3723
    %v3748 = vadd.f32 %v3641, %v3715
    %v3749 = vadd.f32 %v3643, %v3719
    %v3750 = vadd.f32 %v3707, %v3723
    %3751 = vst [vmem:[#allocation4] sm:$0xff] %v3727
    %3752 = vst [vmem:[#allocation4 + $0x8] sm:$0xff] %v3728
    %3753 = vst [vmem:[#allocation4 + $0x10] sm:$0xff] %v3729
    %3754 = vst [vmem:[#allocation4 + $0x18] sm:$0xff] %v3730
    %3755 = vst [vmem:[#allocation4 + $0x20] sm:$0xff] %v3731
    %3756 = vst [vmem:[#allocation4 + $0x28] sm:$0xff] %v3732
    %3757 = vst [vmem:[#allocation4 + $0x30] sm:$0xff] %v3733
    %3758 = vst [vmem:[#allocation4 + $0x38] sm:$0xff] %v3734
    %3759 = vst [vmem:[#allocation4 + $0x40] sm:$0xff] %v3735
    %3760 = vst [vmem:[#allocation4 + $0x48] sm:$0xff] %v3736
    %3761 = vst [vmem:[#allocation4 + $0x50] sm:$0xff] %v3737
    %3762 = vst [vmem:[#allocation4 + $0x58] sm:$0xff] %v3738
    %3763 = vst [vmem:[#allocation4 + $0x60] sm:$0xff] %v3739
    %3764 = vst [vmem:[#allocation4 + $0x68] sm:$0xff] %v3740
    %3765 = vst [vmem:[#allocation4 + $0x70] sm:$0xff] %v3741
    %3766 = vst [vmem:[#allocation4 + $0x78] sm:$0xff] %v3742
    %3767 = vst [vmem:[#allocation4 + $0x80] sm:$0xff] %v3743
    %3768 = vst [vmem:[#allocation4 + $0x88] sm:$0xff] %v3744
    %3769 = vst [vmem:[#allocation4 + $0x90] sm:$0xff] %v3745
    %3770 = vst [vmem:[#allocation4 + $0x98] sm:$0xff] %v3746
    %3771 = vst [vmem:[#allocation4 + $0xa0] sm:$0xff] %v3747
    %3772 = vst [vmem:[#allocation4 + $0xa8] sm:$0xff] %v3748
    %3773 = vst [vmem:[#allocation4 + $0xb0] sm:$0xff] %v3749
    %3774 = vst [vmem:[#allocation4 + $0xb8] sm:$0xff] %v3750
    %v3775 = vld [vmem:[%s15] sm:$0x7]
    %s3776 = scalar_lea.vmem [#allocation4], 168
    %v3777 = vld [vmem:[%s3776] sm:$0xff]
    %v3778 = vld [vmem:[%s3776 + $0x8] sm:$0xff]
    %v3779 = vld [vmem:[%s3776 + $0x10] sm:$0xff]
    %v3780 = vld [vmem:[#allocation13] sm:$0xff]
    %v3781 = vld [vmem:[#allocation13 + $0x8] sm:$0xf]
    %v3782 = vld [vmem:[#allocation13 + $0xc] sm:$0xff]
    %v3783 = vld [vmem:[#allocation13 + $0x14] sm:$0xf]
    %v3784 = vld [vmem:[#allocation13 + $0x18] sm:$0xff]
    %v3785 = vld [vmem:[#allocation13 + $0x20] sm:$0xf]
    %v3786 = vld [vmem:[#allocation13 + $0x24] sm:$0xff]
    %v3787 = vld [vmem:[#allocation13 + $0x2c] sm:$0xf]
    %v3788 = vld [vmem:[#allocation13 + $0x30] sm:$0xff]
    %v3789 = vld [vmem:[#allocation13 + $0x38] sm:$0xf]
    %v3790 = vld [vmem:[#allocation13 + $0x3c] sm:$0xff]
    %v3791 = vld [vmem:[#allocation13 + $0x44] sm:$0xf]
    %v3792 = vld [vmem:[#allocation13 + $0x48] sm:$0xff]
    %v3793 = vld [vmem:[#allocation13 + $0x50] sm:$0xf]
    %v3794 = vld [vmem:[#allocation13 + $0x54] sm:$0xff]
    %v3795 = vld [vmem:[#allocation13 + $0x5c] sm:$0xf]
    %v3796 = vld [vmem:[#allocation13 + $0x60] sm:$0xff]
    %v3797 = vld [vmem:[#allocation13 + $0x68] sm:$0xf]
    %v3798 = vld [vmem:[#allocation13 + $0x6c] sm:$0xff]
    %v3799 = vld [vmem:[#allocation13 + $0x74] sm:$0xf]
    %v3800 = vld [vmem:[#allocation13 + $0x78] sm:$0xff]
    %v3801 = vld [vmem:[#allocation13 + $0x80] sm:$0xf]
    %v3802 = vld [vmem:[#allocation13 + $0x84] sm:$0xff]
    %v3803 = vld [vmem:[#allocation13 + $0x8c] sm:$0xf]
    %v3804 = vld [vmem:[#allocation13 + $0x90] sm:$0xff]
    %v3805 = vld [vmem:[#allocation13 + $0x98] sm:$0xf]
    %v3806 = vld [vmem:[#allocation13 + $0x9c] sm:$0xff]
    %v3807 = vld [vmem:[#allocation13 + $0xa4] sm:$0xf]
    %v3808 = vld [vmem:[#allocation13 + $0xa8] sm:$0xff]
    %v3809 = vld [vmem:[#allocation13 + $0xb0] sm:$0xf]
    %v3810 = vld [vmem:[#allocation13 + $0xb4] sm:$0xff]
    %v3811 = vld [vmem:[#allocation13 + $0xbc] sm:$0xf]
    %v3813 = vlaneseq
    %v3814 = vshrl.u32 %v3813, 7
    %v3815 = vsub.s32 0, %v3814
    %v3816 = vrot.slane %v3775, %v3815
    %v3817 = vlaneseq
    %v3818 = vshrl.u32 %v3817, 7
    %v3819 = vsub.s32 1, %v3818
    %v3820 = vrot.slane %v3775, %v3819
    %v3821 = vlaneseq
    %v3822 = vshrl.u32 %v3821, 7
    %v3823 = vsub.s32 2, %v3822
    %v3824 = vrot.slane %v3775, %v3823
    %v3860 = vunpack.c.l.b16 %v3780
    %v3861 = vunpack.c.h.b16 %v3780
    %v3862 = vunpack.c.l.b16 %v3781
    %v3863 = vunpack.c.l.b16 %v3782
    %v3864 = vunpack.c.h.b16 %v3782
    %v3865 = vunpack.c.l.b16 %v3783
    %v3866 = vunpack.c.l.b16 %v3784
    %v3867 = vunpack.c.h.b16 %v3784
    %v3868 = vunpack.c.l.b16 %v3785
    %v3869 = vunpack.c.l.b16 %v3786
    %v3870 = vunpack.c.h.b16 %v3786
    %v3871 = vunpack.c.l.b16 %v3787
    %v3872 = vunpack.c.l.b16 %v3788
    %v3873 = vunpack.c.h.b16 %v3788
    %v3874 = vunpack.c.l.b16 %v3789
    %v3875 = vunpack.c.l.b16 %v3790
    %v3876 = vunpack.c.h.b16 %v3790
    %v3877 = vunpack.c.l.b16 %v3791
    %v3878 = vunpack.c.l.b16 %v3792
    %v3879 = vunpack.c.h.b16 %v3792
    %v3880 = vunpack.c.l.b16 %v3793
    %v3881 = vunpack.c.l.b16 %v3794
    %v3882 = vunpack.c.h.b16 %v3794
    %v3883 = vunpack.c.l.b16 %v3795
    %v3884 = vunpack.c.l.b16 %v3796
    %v3885 = vunpack.c.h.b16 %v3796
    %v3886 = vunpack.c.l.b16 %v3797
    %v3887 = vunpack.c.l.b16 %v3798
    %v3888 = vunpack.c.h.b16 %v3798
    %v3889 = vunpack.c.l.b16 %v3799
    %v3890 = vunpack.c.l.b16 %v3800
    %v3891 = vunpack.c.h.b16 %v3800
    %v3892 = vunpack.c.l.b16 %v3801
    %v3893 = vunpack.c.l.b16 %v3802
    %v3894 = vunpack.c.h.b16 %v3802
    %v3895 = vunpack.c.l.b16 %v3803
    %v3896 = vunpack.c.l.b16 %v3804
    %v3897 = vunpack.c.h.b16 %v3804
    %v3898 = vunpack.c.l.b16 %v3805
    %v3899 = vunpack.c.l.b16 %v3806
    %v3900 = vunpack.c.h.b16 %v3806
    %v3901 = vunpack.c.l.b16 %v3807
    %v3902 = vunpack.c.l.b16 %v3808
    %v3903 = vunpack.c.h.b16 %v3808
    %v3904 = vunpack.c.l.b16 %v3809
    %v3905 = vunpack.c.l.b16 %v3810
    %v3906 = vunpack.c.h.b16 %v3810
    %v3907 = vunpack.c.l.b16 %v3811
    %v3908 = vpack.c.b16 %v3863, %v3860
    %v3909 = vpack.c.b16 %v3864, %v3861
    %v3910 = vpack.c.b16 %v3865, %v3862
    %v3911 = vpack.c.b16 %v3869, %v3866
    %v3912 = vpack.c.b16 %v3870, %v3867
    %v3913 = vpack.c.b16 %v3871, %v3868
    %v3914 = vpack.c.b16 %v3875, %v3872
    %v3915 = vpack.c.b16 %v3876, %v3873
    %v3916 = vpack.c.b16 %v3877, %v3874
    %v3917 = vpack.c.b16 %v3881, %v3878
    %v3918 = vpack.c.b16 %v3882, %v3879
    %v3919 = vpack.c.b16 %v3883, %v3880
    %v3920 = vpack.c.b16 %v3887, %v3884
    %v3921 = vpack.c.b16 %v3888, %v3885
    %v3922 = vpack.c.b16 %v3889, %v3886
    %v3923 = vpack.c.b16 %v3893, %v3890
    %v3924 = vpack.c.b16 %v3894, %v3891
    %v3925 = vpack.c.b16 %v3895, %v3892
    %v3926 = vpack.c.b16 %v3899, %v3896
    %v3927 = vpack.c.b16 %v3900, %v3897
    %v3928 = vpack.c.b16 %v3901, %v3898
    %v3929 = vpack.c.b16 %v3905, %v3902
    %v3930 = vpack.c.b16 %v3906, %v3903
    %v3931 = vpack.c.b16 %v3907, %v3904
    %3956 = vmatprep.subr.bf16.mxu0 %v3909
    %3957 = vmatpush1.bf16.msra.mxu0 %v3908
    %3958 = vmatprep.subr.bf16.mxu0 %v3912
    %3959 = vmatpush1.bf16.msra.mxu0 %v3911
    %3960 = vmatprep.subr.bf16.mxu0 %v3915
    %3961 = vmatpush1.bf16.msra.mxu0 %v3914
    %3962 = vmatprep.subr.bf16.mxu0 %v3918
    %3963 = vmatpush1.bf16.msra.mxu0 %v3917
    %3964 = vmatprep.subr.bf16.mxu0 %v3921
    %3965 = vmatpush1.bf16.msra.mxu0 %v3920
    %3966 = vmatprep.subr.bf16.mxu0 %v3924
    %3967 = vmatpush1.bf16.msra.mxu0 %v3923
    %3968 = vmatprep.subr.bf16.mxu0 %v3927
    %3969 = vmatpush1.bf16.msra.mxu0 %v3926
    %3970 = vmatprep.subr.bf16.mxu0 %v3930
    %3971 = vmatpush1.bf16.msra.mxu0 %v3929
    %3972 = vmatprep.subr.bf16.mxu0 0
    %3973 = vmatpush1.bf16.msra.mxu0 0
    %3974 = vmatprep.subr.bf16.mxu0 0
    %3975 = vmatpush1.bf16.msra.mxu0 0
    %3976 = vmatprep.subr.bf16.mxu0 0
    %3977 = vmatpush1.bf16.msra.mxu0 0
    %3978 = vmatprep.subr.bf16.mxu0 0
    %3979 = vmatpush1.bf16.msra.mxu0 0
    %3980 = vmatprep.subr.bf16.mxu0 0
    %3981 = vmatpush1.bf16.msra.mxu0 0
    %3982 = vmatprep.subr.bf16.mxu0 0
    %3983 = vmatpush1.bf16.msra.mxu0 0
    %3984 = vmatprep.subr.bf16.mxu0 0
    %3985 = vmatpush1.bf16.msra.mxu0 0
    %3986 = vmatprep.subr.bf16.mxu0 0
    %3987 = vmatpush1.bf16.msra.mxu0 0
    %3988 = vmatprep.mubr.bf16.mxu0 0
    %3989 = vmatmul.mubr.bf16.gmra.mrb[0].mxu0 0
    %v3990 = vpop.f32.mrb[0].mxu0
    %v3991 = vadd.f32 %v3816, %v3990
    %v3992 = vpop.f32.mrb[0].mxu0
    %v3993 = vadd.f32 %v3820, %v3992
    %v3994 = vpop.f32.mrb[0].mxu0
    %v3995 = vpop.f32.mrb[0].mxu0
    %3996 = vdwg.mxu0
    %3997 = vmatprep.subr.bf16.mxu0 0
    %3998 = vmatpush1.bf16.msra.mxu0 %v3910
    %3999 = vmatprep.subr.bf16.mxu0 0
    %4000 = vmatpush1.bf16.msra.mxu0 %v3913
    %4001 = vmatprep.subr.bf16.mxu0 0
    %4002 = vmatpush1.bf16.msra.mxu0 %v3916
    %4003 = vmatprep.subr.bf16.mxu0 0
    %4004 = vmatpush1.bf16.msra.mxu0 %v3919
    %4005 = vmatprep.subr.bf16.mxu0 0
    %4006 = vmatpush1.bf16.msra.mxu0 %v3922
    %4007 = vmatprep.subr.bf16.mxu0 0
    %4008 = vmatpush1.bf16.msra.mxu0 %v3925
    %4009 = vmatprep.subr.bf16.mxu0 0
    %4010 = vmatpush1.bf16.msra.mxu0 %v3928
    %4011 = vmatprep.subr.bf16.mxu0 0
    %4012 = vmatpush1.bf16.msra.mxu0 %v3931
    %4013 = vmatprep.subr.bf16.mxu0 0
    %4014 = vmatpush1.bf16.msra.mxu0 0
    %4015 = vmatprep.subr.bf16.mxu0 0
    %4016 = vmatpush1.bf16.msra.mxu0 0
    %4017 = vmatprep.subr.bf16.mxu0 0
    %4018 = vmatpush1.bf16.msra.mxu0 0
    %4019 = vmatprep.subr.bf16.mxu0 0
    %4020 = vmatpush1.bf16.msra.mxu0 0
    %4021 = vmatprep.subr.bf16.mxu0 0
    %4022 = vmatpush1.bf16.msra.mxu0 0
    %4023 = vmatprep.subr.bf16.mxu0 0
    %4024 = vmatpush1.bf16.msra.mxu0 0
    %4025 = vmatprep.subr.bf16.mxu0 0
    %4026 = vmatpush1.bf16.msra.mxu0 0
    %4027 = vmatprep.subr.bf16.mxu0 0
    %4028 = vmatpush1.bf16.msra.mxu0 0
    %4029 = vmatprep.mubr.bf16.mxu0 0
    %4030 = vmatmul.mubr.bf16.gmra.mrb[0].mxu0 0
    %v4031 = vpop.f32.mrb[0].mxu0
    %v4032 = vadd.f32 %v3824, %v4031
    %v4033 = vpop.f32.mrb[0].mxu0
    %v4034 = vpop.f32.mrb[0].mxu0
    %v4035 = vpop.f32.mrb[0].mxu0
    %4036 = vdwg.mxu0
    %v4037 = vadd.f32 %v3777, %v3991
    %v4038 = vxor.u32 %v4037, 2147483648
    %v4039 = vmul.f32 %v4038, 1.442695
    %v4040 = vpow.pop %v4039
    %v4041 = vadd.f32 %v4040, 1.0
    %v4042 = vrcp.pop %v4041
    %v4043 = vmul.f32 1.0, %v4042
    %v4044 = vadd.f32 %v3778, %v3993
    %v4045 = vxor.u32 %v4044, 2147483648
    %v4046 = vmul.f32 %v4045, 1.442695
    %v4047 = vpow.pop %v4046
    %v4048 = vadd.f32 %v4047, 1.0
    %v4049 = vrcp.pop %v4048
    %v4050 = vmul.f32 1.0, %v4049
    %v4051 = vmul.f32 %v4043, %v4032
    %v4052 = vadd.f32 %v3779, %v4051
    %v4053 = vtanh.pop %v4052
    %v4054 = vsub.f32 1.0, %v4050
    %v4055 = vmul.f32 %v4054, %v4053
    %v4056 = vmul.f32 %v4050, 0.0
    %v4057 = vadd.f32 %v4055, %v4056
    %s4058 = scalar_lea.vmem [#allocation4], 144
    %v4059 = vld [vmem:[%s4058] sm:$0xff]
    %v4060 = vld [vmem:[%s4058 + $0x8] sm:$0xff]
    %v4061 = vld [vmem:[%s4058 + $0x10] sm:$0xff]
    %v4062 = vpack.c.bf16 %v4057, %v4057
    %4063 = vmatprep.subr.bf16.mxu0 %v3909
    %4064 = vmatpush1.bf16.msra.mxu0 %v3908
    %4065 = vmatprep.subr.bf16.mxu0 %v3912
    %4066 = vmatpush1.bf16.msra.mxu0 %v3911
    %4067 = vmatprep.subr.bf16.mxu0 %v3915
    %4068 = vmatpush1.bf16.msra.mxu0 %v3914
    %4069 = vmatprep.subr.bf16.mxu0 %v3918
    %4070 = vmatpush1.bf16.msra.mxu0 %v3917
    %4071 = vmatprep.subr.bf16.mxu0 %v3921
    %4072 = vmatpush1.bf16.msra.mxu0 %v3920
    %4073 = vmatprep.subr.bf16.mxu0 %v3924
    %4074 = vmatpush1.bf16.msra.mxu0 %v3923
    %4075 = vmatprep.subr.bf16.mxu0 %v3927
    %4076 = vmatpush1.bf16.msra.mxu0 %v3926
    %4077 = vmatprep.subr.bf16.mxu0 %v3930
    %4078 = vmatpush1.bf16.msra.mxu0 %v3929
    %4079 = vmatprep.subr.bf16.mxu0 0
    %4080 = vmatpush1.bf16.msra.mxu0 0
    %4081 = vmatprep.subr.bf16.mxu0 0
    %4082 = vmatpush1.bf16.msra.mxu0 0
    %4083 = vmatprep.subr.bf16.mxu0 0
    %4084 = vmatpush1.bf16.msra.mxu0 0
    %4085 = vmatprep.subr.bf16.mxu0 0
    %4086 = vmatpush1.bf16.msra.mxu0 0
    %4087 = vmatprep.subr.bf16.mxu0 0
    %4088 = vmatpush1.bf16.msra.mxu0 0
    %4089 = vmatprep.subr.bf16.mxu0 0
    %4090 = vmatpush1.bf16.msra.mxu0 0
    %4091 = vmatprep.subr.bf16.mxu0 0
    %4092 = vmatpush1.bf16.msra.mxu0 0
    %4093 = vmatprep.subr.bf16.mxu0 0
    %4094 = vmatpush1.bf16.msra.mxu0 0
    %4095 = vmatprep.mubr.bf16.mxu0 0
    %4096 = vmatmul.mubr.bf16.gmra.mrb[0].mxu0 %v4062
    %v4097 = vpop.f32.mrb[0].mxu0
    %v4098 = vadd.f32 %v3816, %v4097
    %v4099 = vpop.f32.mrb[0].mxu0
    %v4100 = vadd.f32 %v3820, %v4099
    %v4101 = vpop.f32.mrb[0].mxu0
    %v4102 = vpop.f32.mrb[0].mxu0
    %4103 = vdwg.mxu0
    %4104 = vmatprep.subr.bf16.mxu0 0
    %4105 = vmatpush1.bf16.msra.mxu0 %v3910
    %4106 = vmatprep.subr.bf16.mxu0 0
    %4107 = vmatpush1.bf16.msra.mxu0 %v3913
    %4108 = vmatprep.subr.bf16.mxu0 0
    %4109 = vmatpush1.bf16.msra.mxu0 %v3916
    %4110 = vmatprep.subr.bf16.mxu0 0
    %4111 = vmatpush1.bf16.msra.mxu0 %v3919
    %4112 = vmatprep.subr.bf16.mxu0 0
    %4113 = vmatpush1.bf16.msra.mxu0 %v3922
    %4114 = vmatprep.subr.bf16.mxu0 0
    %4115 = vmatpush1.bf16.msra.mxu0 %v3925
    %4116 = vmatprep.subr.bf16.mxu0 0
    %4117 = vmatpush1.bf16.msra.mxu0 %v3928
    %4118 = vmatprep.subr.bf16.mxu0 0
    %4119 = vmatpush1.bf16.msra.mxu0 %v3931
    %4120 = vmatprep.subr.bf16.mxu0 0
    %4121 = vmatpush1.bf16.msra.mxu0 0
    %4122 = vmatprep.subr.bf16.mxu0 0
    %4123 = vmatpush1.bf16.msra.mxu0 0
    %4124 = vmatprep.subr.bf16.mxu0 0
    %4125 = vmatpush1.bf16.msra.mxu0 0
    %4126 = vmatprep.subr.bf16.mxu0 0
    %4127 = vmatpush1.bf16.msra.mxu0 0
    %4128 = vmatprep.subr.bf16.mxu0 0
    %4129 = vmatpush1.bf16.msra.mxu0 0
    %4130 = vmatprep.subr.bf16.mxu0 0
    %4131 = vmatpush1.bf16.msra.mxu0 0
    %4132 = vmatprep.subr.bf16.mxu0 0
    %4133 = vmatpush1.bf16.msra.mxu0 0
    %4134 = vmatprep.subr.bf16.mxu0 0
    %4135 = vmatpush1.bf16.msra.mxu0 0
    %4136 = vmatprep.mubr.bf16.mxu0 0
    %4137 = vmatmul.mubr.bf16.gmra.mrb[0].mxu0 %v4062
    %v4138 = vpop.f32.mrb[0].mxu0
    %v4139 = vadd.f32 %v3824, %v4138
    %v4140 = vpop.f32.mrb[0].mxu0
    %v4141 = vpop.f32.mrb[0].mxu0
    %v4142 = vpop.f32.mrb[0].mxu0
    %4143 = vdwg.mxu0
    %v4144 = vadd.f32 %v4059, %v4098
    %v4145 = vxor.u32 %v4144, 2147483648
    %v4146 = vmul.f32 %v4145, 1.442695
    %v4147 = vpow.pop %v4146
    %v4148 = vadd.f32 %v4147, 1.0
    %v4149 = vrcp.pop %v4148
    %v4150 = vmul.f32 1.0, %v4149
    %v4151 = vadd.f32 %v4060, %v4100
    %v4152 = vxor.u32 %v4151, 2147483648
    %v4153 = vmul.f32 %v4152, 1.442695
    %v4154 = vpow.pop %v4153
    %v4155 = vadd.f32 %v4154, 1.0
    %v4156 = vrcp.pop %v4155
    %v4157 = vmul.f32 1.0, %v4156
    %v4158 = vmul.f32 %v4150, %v4139
    %v4159 = vadd.f32 %v4061, %v4158
    %v4160 = vtanh.pop %v4159
    %v4161 = vsub.f32 1.0, %v4157
    %v4162 = vmul.f32 %v4161, %v4160
    %v4163 = vmul.f32 %v4157, %v4057
    %v4164 = vadd.f32 %v4162, %v4163
    %s4165 = scalar_lea.vmem [#allocation4], 120
    %v4166 = vld [vmem:[%s4165] sm:$0xff]
    %v4167 = vld [vmem:[%s4165 + $0x8] sm:$0xff]
    %v4168 = vld [vmem:[%s4165 + $0x10] sm:$0xff]
    %v4169 = vpack.c.bf16 %v4164, %v4164
    %4170 = vmatprep.subr.bf16.mxu0 %v3909
    %4171 = vmatpush1.bf16.msra.mxu0 %v3908
    %4172 = vmatprep.subr.bf16.mxu0 %v3912
    %4173 = vmatpush1.bf16.msra.mxu0 %v3911
    %4174 = vmatprep.subr.bf16.mxu0 %v3915
    %4175 = vmatpush1.bf16.msra.mxu0 %v3914
    %4176 = vmatprep.subr.bf16.mxu0 %v3918
    %4177 = vmatpush1.bf16.msra.mxu0 %v3917
    %4178 = vmatprep.subr.bf16.mxu0 %v3921
    %4179 = vmatpush1.bf16.msra.mxu0 %v3920
    %4180 = vmatprep.subr.bf16.mxu0 %v3924
    %4181 = vmatpush1.bf16.msra.mxu0 %v3923
    %4182 = vmatprep.subr.bf16.mxu0 %v3927
    %4183 = vmatpush1.bf16.msra.mxu0 %v3926
    %4184 = vmatprep.subr.bf16.mxu0 %v3930
    %4185 = vmatpush1.bf16.msra.mxu0 %v3929
    %4186 = vmatprep.subr.bf16.mxu0 0
    %4187 = vmatpush1.bf16.msra.mxu0 0
    %4188 = vmatprep.subr.bf16.mxu0 0
    %4189 = vmatpush1.bf16.msra.mxu0 0
    %4190 = vmatprep.subr.bf16.mxu0 0
    %4191 = vmatpush1.bf16.msra.mxu0 0
    %4192 = vmatprep.subr.bf16.mxu0 0
    %4193 = vmatpush1.bf16.msra.mxu0 0
    %4194 = vmatprep.subr.bf16.mxu0 0
    %4195 = vmatpush1.bf16.msra.mxu0 0
    %4196 = vmatprep.subr.bf16.mxu0 0
    %4197 = vmatpush1.bf16.msra.mxu0 0
    %4198 = vmatprep.subr.bf16.mxu0 0
    %4199 = vmatpush1.bf16.msra.mxu0 0
    %4200 = vmatprep.subr.bf16.mxu0 0
    %4201 = vmatpush1.bf16.msra.mxu0 0
    %4202 = vmatprep.mubr.bf16.mxu0 0
    %4203 = vmatmul.mubr.bf16.gmra.mrb[0].mxu0 %v4169
    %v4204 = vpop.f32.mrb[0].mxu0
    %v4205 = vadd.f32 %v3816, %v4204
    %v4206 = vpop.f32.mrb[0].mxu0
    %v4207 = vadd.f32 %v3820, %v4206
    %v4208 = vpop.f32.mrb[0].mxu0
    %v4209 = vpop.f32.mrb[0].mxu0
    %4210 = vdwg.mxu0
    %4211 = vmatprep.subr.bf16.mxu0 0
    %4212 = vmatpush1.bf16.msra.mxu0 %v3910
    %4213 = vmatprep.subr.bf16.mxu0 0
    %4214 = vmatpush1.bf16.msra.mxu0 %v3913
    %4215 = vmatprep.subr.bf16.mxu0 0
    %4216 = vmatpush1.bf16.msra.mxu0 %v3916
    %4217 = vmatprep.subr.bf16.mxu0 0
    %4218 = vmatpush1.bf16.msra.mxu0 %v3919
    %4219 = vmatprep.subr.bf16.mxu0 0
    %4220 = vmatpush1.bf16.msra.mxu0 %v3922
    %4221 = vmatprep.subr.bf16.mxu0 0
    %4222 = vmatpush1.bf16.msra.mxu0 %v3925
    %4223 = vmatprep.subr.bf16.mxu0 0
    %4224 = vmatpush1.bf16.msra.mxu0 %v3928
    %4225 = vmatprep.subr.bf16.mxu0 0
    %4226 = vmatpush1.bf16.msra.mxu0 %v3931
    %4227 = vmatprep.subr.bf16.mxu0 0
    %4228 = vmatpush1.bf16.msra.mxu0 0
    %4229 = vmatprep.subr.bf16.mxu0 0
    %4230 = vmatpush1.bf16.msra.mxu0 0
    %4231 = vmatprep.subr.bf16.mxu0 0
    %4232 = vmatpush1.bf16.msra.mxu0 0
    %4233 = vmatprep.subr.bf16.mxu0 0
    %4234 = vmatpush1.bf16.msra.mxu0 0
    %4235 = vmatprep.subr.bf16.mxu0 0
    %4236 = vmatpush1.bf16.msra.mxu0 0
    %4237 = vmatprep.subr.bf16.mxu0 0
    %4238 = vmatpush1.bf16.msra.mxu0 0
    %4239 = vmatprep.subr.bf16.mxu0 0
    %4240 = vmatpush1.bf16.msra.mxu0 0
    %4241 = vmatprep.subr.bf16.mxu0 0
    %4242 = vmatpush1.bf16.msra.mxu0 0
    %4243 = vmatprep.mubr.bf16.mxu0 0
    %4244 = vmatmul.mubr.bf16.gmra.mrb[0].mxu0 %v4169
    %v4245 = vpop.f32.mrb[0].mxu0
    %v4246 = vadd.f32 %v3824, %v4245
    %v4247 = vpop.f32.mrb[0].mxu0
    %v4248 = vpop.f32.mrb[0].mxu0
    %v4249 = vpop.f32.mrb[0].mxu0
    %4250 = vdwg.mxu0
    %v4251 = vadd.f32 %v4166, %v4205
    %v4252 = vxor.u32 %v4251, 2147483648
    %v4253 = vmul.f32 %v4252, 1.442695
    %v4254 = vpow.pop %v4253
    %v4255 = vadd.f32 %v4254, 1.0
    %v4256 = vrcp.pop %v4255
    %v4257 = vmul.f32 1.0, %v4256
    %v4258 = vadd.f32 %v4167, %v4207
    %v4259 = vxor.u32 %v4258, 2147483648
    %v4260 = vmul.f32 %v4259, 1.442695
    %v4261 = vpow.pop %v4260
    %v4262 = vadd.f32 %v4261, 1.0
    %v4263 = vrcp.pop %v4262
    %v4264 = vmul.f32 1.0, %v4263
    %v4265 = vmul.f32 %v4257, %v4246
    %v4266 = vadd.f32 %v4168, %v4265
    %v4267 = vtanh.pop %v4266
    %v4268 = vsub.f32 1.0, %v4264
    %v4269 = vmul.f32 %v4268, %v4267
    %v4270 = vmul.f32 %v4264, %v4164
    %v4271 = vadd.f32 %v4269, %v4270
    %s4272 = scalar_lea.vmem [#allocation4], 96
    %v4273 = vld [vmem:[%s4272] sm:$0xff]
    %v4274 = vld [vmem:[%s4272 + $0x8] sm:$0xff]
    %v4275 = vld [vmem:[%s4272 + $0x10] sm:$0xff]
    %v4276 = vpack.c.bf16 %v4271, %v4271
    %4277 = vmatprep.subr.bf16.mxu0 %v3909
    %4278 = vmatpush1.bf16.msra.mxu0 %v3908
    %4279 = vmatprep.subr.bf16.mxu0 %v3912
    %4280 = vmatpush1.bf16.msra.mxu0 %v3911
    %4281 = vmatprep.subr.bf16.mxu0 %v3915
    %4282 = vmatpush1.bf16.msra.mxu0 %v3914
    %4283 = vmatprep.subr.bf16.mxu0 %v3918
    %4284 = vmatpush1.bf16.msra.mxu0 %v3917
    %4285 = vmatprep.subr.bf16.mxu0 %v3921
    %4286 = vmatpush1.bf16.msra.mxu0 %v3920
    %4287 = vmatprep.subr.bf16.mxu0 %v3924
    %4288 = vmatpush1.bf16.msra.mxu0 %v3923
    %4289 = vmatprep.subr.bf16.mxu0 %v3927
    %4290 = vmatpush1.bf16.msra.mxu0 %v3926
    %4291 = vmatprep.subr.bf16.mxu0 %v3930
    %4292 = vmatpush1.bf16.msra.mxu0 %v3929
    %4293 = vmatprep.subr.bf16.mxu0 0
    %4294 = vmatpush1.bf16.msra.mxu0 0
    %4295 = vmatprep.subr.bf16.mxu0 0
    %4296 = vmatpush1.bf16.msra.mxu0 0
    %4297 = vmatprep.subr.bf16.mxu0 0
    %4298 = vmatpush1.bf16.msra.mxu0 0
    %4299 = vmatprep.subr.bf16.mxu0 0
    %4300 = vmatpush1.bf16.msra.mxu0 0
    %4301 = vmatprep.subr.bf16.mxu0 0
    %4302 = vmatpush1.bf16.msra.mxu0 0
    %4303 = vmatprep.subr.bf16.mxu0 0
    %4304 = vmatpush1.bf16.msra.mxu0 0
    %4305 = vmatprep.subr.bf16.mxu0 0
    %4306 = vmatpush1.bf16.msra.mxu0 0
    %4307 = vmatprep.subr.bf16.mxu0 0
    %4308 = vmatpush1.bf16.msra.mxu0 0
    %4309 = vmatprep.mubr.bf16.mxu0 0
    %4310 = vmatmul.mubr.bf16.gmra.mrb[0].mxu0 %v4276
    %v4311 = vpop.f32.mrb[0].mxu0
    %v4312 = vadd.f32 %v3816, %v4311
    %v4313 = vpop.f32.mrb[0].mxu0
    %v4314 = vadd.f32 %v3820, %v4313
    %v4315 = vpop.f32.mrb[0].mxu0
    %v4316 = vpop.f32.mrb[0].mxu0
    %4317 = vdwg.mxu0
    %4318 = vmatprep.subr.bf16.mxu0 0
    %4319 = vmatpush1.bf16.msra.mxu0 %v3910
    %4320 = vmatprep.subr.bf16.mxu0 0
    %4321 = vmatpush1.bf16.msra.mxu0 %v3913
    %4322 = vmatprep.subr.bf16.mxu0 0
    %4323 = vmatpush1.bf16.msra.mxu0 %v3916
    %4324 = vmatprep.subr.bf16.mxu0 0
    %4325 = vmatpush1.bf16.msra.mxu0 %v3919
    %4326 = vmatprep.subr.bf16.mxu0 0
    %4327 = vmatpush1.bf16.msra.mxu0 %v3922
    %4328 = vmatprep.subr.bf16.mxu0 0
    %4329 = vmatpush1.bf16.msra.mxu0 %v3925
    %4330 = vmatprep.subr.bf16.mxu0 0
    %4331 = vmatpush1.bf16.msra.mxu0 %v3928
    %4332 = vmatprep.subr.bf16.mxu0 0
    %4333 = vmatpush1.bf16.msra.mxu0 %v3931
    %4334 = vmatprep.subr.bf16.mxu0 0
    %4335 = vmatpush1.bf16.msra.mxu0 0
    %4336 = vmatprep.subr.bf16.mxu0 0
    %4337 = vmatpush1.bf16.msra.mxu0 0
    %4338 = vmatprep.subr.bf16.mxu0 0
    %4339 = vmatpush1.bf16.msra.mxu0 0
    %4340 = vmatprep.subr.bf16.mxu0 0
    %4341 = vmatpush1.bf16.msra.mxu0 0
    %4342 = vmatprep.subr.bf16.mxu0 0
    %4343 = vmatpush1.bf16.msra.mxu0 0
    %4344 = vmatprep.subr.bf16.mxu0 0
    %4345 = vmatpush1.bf16.msra.mxu0 0
    %4346 = vmatprep.subr.bf16.mxu0 0
    %4347 = vmatpush1.bf16.msra.mxu0 0
    %4348 = vmatprep.subr.bf16.mxu0 0
    %4349 = vmatpush1.bf16.msra.mxu0 0
    %4350 = vmatprep.mubr.bf16.mxu0 0
    %4351 = vmatmul.mubr.bf16.gmra.mrb[0].mxu0 %v4276
    %v4352 = vpop.f32.mrb[0].mxu0
    %v4353 = vadd.f32 %v3824, %v4352
    %v4354 = vpop.f32.mrb[0].mxu0
    %v4355 = vpop.f32.mrb[0].mxu0
    %v4356 = vpop.f32.mrb[0].mxu0
    %4357 = vdwg.mxu0
    %v4358 = vadd.f32 %v4273, %v4312
    %v4359 = vxor.u32 %v4358, 2147483648
    %v4360 = vmul.f32 %v4359, 1.442695
    %v4361 = vpow.pop %v4360
    %v4362 = vadd.f32 %v4361, 1.0
    %v4363 = vrcp.pop %v4362
    %v4364 = vmul.f32 1.0, %v4363
    %v4365 = vadd.f32 %v4274, %v4314
    %v4366 = vxor.u32 %v4365, 2147483648
    %v4367 = vmul.f32 %v4366, 1.442695
    %v4368 = vpow.pop %v4367
    %v4369 = vadd.f32 %v4368, 1.0
    %v4370 = vrcp.pop %v4369
    %v4371 = vmul.f32 1.0, %v4370
    %v4372 = vmul.f32 %v4364, %v4353
    %v4373 = vadd.f32 %v4275, %v4372
    %v4374 = vtanh.pop %v4373
    %v4375 = vsub.f32 1.0, %v4371
    %v4376 = vmul.f32 %v4375, %v4374
    %v4377 = vmul.f32 %v4371, %v4271
    %v4378 = vadd.f32 %v4376, %v4377
    %s4379 = scalar_lea.vmem [#allocation4], 72
    %v4380 = vld [vmem:[%s4379] sm:$0xff]
    %v4381 = vld [vmem:[%s4379 + $0x8] sm:$0xff]
    %v4382 = vld [vmem:[%s4379 + $0x10] sm:$0xff]
    %v4383 = vpack.c.bf16 %v4378, %v4378
    %4384 = vmatprep.subr.bf16.mxu0 %v3909
    %4385 = vmatpush1.bf16.msra.mxu0 %v3908
    %4386 = vmatprep.subr.bf16.mxu0 %v3912
    %4387 = vmatpush1.bf16.msra.mxu0 %v3911
    %4388 = vmatprep.subr.bf16.mxu0 %v3915
    %4389 = vmatpush1.bf16.msra.mxu0 %v3914
    %4390 = vmatprep.subr.bf16.mxu0 %v3918
    %4391 = vmatpush1.bf16.msra.mxu0 %v3917
    %4392 = vmatprep.subr.bf16.mxu0 %v3921
    %4393 = vmatpush1.bf16.msra.mxu0 %v3920
    %4394 = vmatprep.subr.bf16.mxu0 %v3924
    %4395 = vmatpush1.bf16.msra.mxu0 %v3923
    %4396 = vmatprep.subr.bf16.mxu0 %v3927
    %4397 = vmatpush1.bf16.msra.mxu0 %v3926
    %4398 = vmatprep.subr.bf16.mxu0 %v3930
    %4399 = vmatpush1.bf16.msra.mxu0 %v3929
    %4400 = vmatprep.subr.bf16.mxu0 0
    %4401 = vmatpush1.bf16.msra.mxu0 0
    %4402 = vmatprep.subr.bf16.mxu0 0
    %4403 = vmatpush1.bf16.msra.mxu0 0
    %4404 = vmatprep.subr.bf16.mxu0 0
    %4405 = vmatpush1.bf16.msra.mxu0 0
    %4406 = vmatprep.subr.bf16.mxu0 0
    %4407 = vmatpush1.bf16.msra.mxu0 0
    %4408 = vmatprep.subr.bf16.mxu0 0
    %4409 = vmatpush1.bf16.msra.mxu0 0
    %4410 = vmatprep.subr.bf16.mxu0 0
    %4411 = vmatpush1.bf16.msra.mxu0 0
    %4412 = vmatprep.subr.bf16.mxu0 0
    %4413 = vmatpush1.bf16.msra.mxu0 0
    %4414 = vmatprep.subr.bf16.mxu0 0
    %4415 = vmatpush1.bf16.msra.mxu0 0
    %4416 = vmatprep.mubr.bf16.mxu0 0
    %4417 = vmatmul.mubr.bf16.gmra.mrb[0].mxu0 %v4383
    %v4418 = vpop.f32.mrb[0].mxu0
    %v4419 = vadd.f32 %v3816, %v4418
    %v4420 = vpop.f32.mrb[0].mxu0
    %v4421 = vadd.f32 %v3820, %v4420
    %v4422 = vpop.f32.mrb[0].mxu0
    %v4423 = vpop.f32.mrb[0].mxu0
    %4424 = vdwg.mxu0
    %4425 = vmatprep.subr.bf16.mxu0 0
    %4426 = vmatpush1.bf16.msra.mxu0 %v3910
    %4427 = vmatprep.subr.bf16.mxu0 0
    %4428 = vmatpush1.bf16.msra.mxu0 %v3913
    %4429 = vmatprep.subr.bf16.mxu0 0
    %4430 = vmatpush1.bf16.msra.mxu0 %v3916
    %4431 = vmatprep.subr.bf16.mxu0 0
    %4432 = vmatpush1.bf16.msra.mxu0 %v3919
    %4433 = vmatprep.subr.bf16.mxu0 0
    %4434 = vmatpush1.bf16.msra.mxu0 %v3922
    %4435 = vmatprep.subr.bf16.mxu0 0
    %4436 = vmatpush1.bf16.msra.mxu0 %v3925
    %4437 = vmatprep.subr.bf16.mxu0 0
    %4438 = vmatpush1.bf16.msra.mxu0 %v3928
    %4439 = vmatprep.subr.bf16.mxu0 0
    %4440 = vmatpush1.bf16.msra.mxu0 %v3931
    %4441 = vmatprep.subr.bf16.mxu0 0
    %4442 = vmatpush1.bf16.msra.mxu0 0
    %4443 = vmatprep.subr.bf16.mxu0 0
    %4444 = vmatpush1.bf16.msra.mxu0 0
    %4445 = vmatprep.subr.bf16.mxu0 0
    %4446 = vmatpush1.bf16.msra.mxu0 0
    %4447 = vmatprep.subr.bf16.mxu0 0
    %4448 = vmatpush1.bf16.msra.mxu0 0
    %4449 = vmatprep.subr.bf16.mxu0 0
    %4450 = vmatpush1.bf16.msra.mxu0 0
    %4451 = vmatprep.subr.bf16.mxu0 0
    %4452 = vmatpush1.bf16.msra.mxu0 0
    %4453 = vmatprep.subr.bf16.mxu0 0
    %4454 = vmatpush1.bf16.msra.mxu0 0
    %4455 = vmatprep.subr.bf16.mxu0 0
    %4456 = vmatpush1.bf16.msra.mxu0 0
    %4457 = vmatprep.mubr.bf16.mxu0 0
    %4458 = vmatmul.mubr.bf16.gmra.mrb[0].mxu0 %v4383
    %v4459 = vpop.f32.mrb[0].mxu0
    %v4460 = vadd.f32 %v3824, %v4459
    %v4461 = vpop.f32.mrb[0].mxu0
    %v4462 = vpop.f32.mrb[0].mxu0
    %v4463 = vpop.f32.mrb[0].mxu0
    %4464 = vdwg.mxu0
    %v4465 = vadd.f32 %v4380, %v4419
    %v4466 = vxor.u32 %v4465, 2147483648
    %v4467 = vmul.f32 %v4466, 1.442695
    %v4468 = vpow.pop %v4467
    %v4469 = vadd.f32 %v4468, 1.0
    %v4470 = vrcp.pop %v4469
    %v4471 = vmul.f32 1.0, %v4470
    %v4472 = vadd.f32 %v4381, %v4421
    %v4473 = vxor.u32 %v4472, 2147483648
    %v4474 = vmul.f32 %v4473, 1.442695
    %v4475 = vpow.pop %v4474
    %v4476 = vadd.f32 %v4475, 1.0
    %v4477 = vrcp.pop %v4476
    %v4478 = vmul.f32 1.0, %v4477
    %v4479 = vmul.f32 %v4471, %v4460
    %v4480 = vadd.f32 %v4382, %v4479
    %v4481 = vtanh.pop %v4480
    %v4482 = vsub.f32 1.0, %v4478
    %v4483 = vmul.f32 %v4482, %v4481
    %v4484 = vmul.f32 %v4478, %v4378
    %v4485 = vadd.f32 %v4483, %v4484
    %s4486 = scalar_lea.vmem [#allocation4], 48
    %v4487 = vld [vmem:[%s4486] sm:$0xff]
    %v4488 = vld [vmem:[%s4486 + $0x8] sm:$0xff]
    %v4489 = vld [vmem:[%s4486 + $0x10] sm:$0xff]
    %v4490 = vpack.c.bf16 %v4485, %v4485
    %4491 = vmatprep.subr.bf16.mxu0 %v3909
    %4492 = vmatpush1.bf16.msra.mxu0 %v3908
    %4493 = vmatprep.subr.bf16.mxu0 %v3912
    %4494 = vmatpush1.bf16.msra.mxu0 %v3911
    %4495 = vmatprep.subr.bf16.mxu0 %v3915
    %4496 = vmatpush1.bf16.msra.mxu0 %v3914
    %4497 = vmatprep.subr.bf16.mxu0 %v3918
    %4498 = vmatpush1.bf16.msra.mxu0 %v3917
    %4499 = vmatprep.subr.bf16.mxu0 %v3921
    %4500 = vmatpush1.bf16.msra.mxu0 %v3920
    %4501 = vmatprep.subr.bf16.mxu0 %v3924
    %4502 = vmatpush1.bf16.msra.mxu0 %v3923
    %4503 = vmatprep.subr.bf16.mxu0 %v3927
    %4504 = vmatpush1.bf16.msra.mxu0 %v3926
    %4505 = vmatprep.subr.bf16.mxu0 %v3930
    %4506 = vmatpush1.bf16.msra.mxu0 %v3929
    %4507 = vmatprep.subr.bf16.mxu0 0
    %4508 = vmatpush1.bf16.msra.mxu0 0
    %4509 = vmatprep.subr.bf16.mxu0 0
    %4510 = vmatpush1.bf16.msra.mxu0 0
    %4511 = vmatprep.subr.bf16.mxu0 0
    %4512 = vmatpush1.bf16.msra.mxu0 0
    %4513 = vmatprep.subr.bf16.mxu0 0
    %4514 = vmatpush1.bf16.msra.mxu0 0
    %4515 = vmatprep.subr.bf16.mxu0 0
    %4516 = vmatpush1.bf16.msra.mxu0 0
    %4517 = vmatprep.subr.bf16.mxu0 0
    %4518 = vmatpush1.bf16.msra.mxu0 0
    %4519 = vmatprep.subr.bf16.mxu0 0
    %4520 = vmatpush1.bf16.msra.mxu0 0
    %4521 = vmatprep.subr.bf16.mxu0 0
    %4522 = vmatpush1.bf16.msra.mxu0 0
    %4523 = vmatprep.mubr.bf16.mxu0 0
    %4524 = vmatmul.mubr.bf16.gmra.mrb[0].mxu0 %v4490
    %v4525 = vpop.f32.mrb[0].mxu0
    %v4526 = vadd.f32 %v3816, %v4525
    %v4527 = vpop.f32.mrb[0].mxu0
    %v4528 = vadd.f32 %v3820, %v4527
    %v4529 = vpop.f32.mrb[0].mxu0
    %v4530 = vpop.f32.mrb[0].mxu0
    %4531 = vdwg.mxu0
    %4532 = vmatprep.subr.bf16.mxu0 0
    %4533 = vmatpush1.bf16.msra.mxu0 %v3910
    %4534 = vmatprep.subr.bf16.mxu0 0
    %4535 = vmatpush1.bf16.msra.mxu0 %v3913
    %4536 = vmatprep.subr.bf16.mxu0 0
    %4537 = vmatpush1.bf16.msra.mxu0 %v3916
    %4538 = vmatprep.subr.bf16.mxu0 0
    %4539 = vmatpush1.bf16.msra.mxu0 %v3919
    %4540 = vmatprep.subr.bf16.mxu0 0
    %4541 = vmatpush1.bf16.msra.mxu0 %v3922
    %4542 = vmatprep.subr.bf16.mxu0 0
    %4543 = vmatpush1.bf16.msra.mxu0 %v3925
    %4544 = vmatprep.subr.bf16.mxu0 0
    %4545 = vmatpush1.bf16.msra.mxu0 %v3928
    %4546 = vmatprep.subr.bf16.mxu0 0
    %4547 = vmatpush1.bf16.msra.mxu0 %v3931
    %4548 = vmatprep.subr.bf16.mxu0 0
    %4549 = vmatpush1.bf16.msra.mxu0 0
    %4550 = vmatprep.subr.bf16.mxu0 0
    %4551 = vmatpush1.bf16.msra.mxu0 0
    %4552 = vmatprep.subr.bf16.mxu0 0
    %4553 = vmatpush1.bf16.msra.mxu0 0
    %4554 = vmatprep.subr.bf16.mxu0 0
    %4555 = vmatpush1.bf16.msra.mxu0 0
    %4556 = vmatprep.subr.bf16.mxu0 0
    %4557 = vmatpush1.bf16.msra.mxu0 0
    %4558 = vmatprep.subr.bf16.mxu0 0
    %4559 = vmatpush1.bf16.msra.mxu0 0
    %4560 = vmatprep.subr.bf16.mxu0 0
    %4561 = vmatpush1.bf16.msra.mxu0 0
    %4562 = vmatprep.subr.bf16.mxu0 0
    %4563 = vmatpush1.bf16.msra.mxu0 0
    %4564 = vmatprep.mubr.bf16.mxu0 0
    %4565 = vmatmul.mubr.bf16.gmra.mrb[0].mxu0 %v4490
    %v4566 = vpop.f32.mrb[0].mxu0
    %v4567 = vadd.f32 %v3824, %v4566
    %v4568 = vpop.f32.mrb[0].mxu0
    %v4569 = vpop.f32.mrb[0].mxu0
    %v4570 = vpop.f32.mrb[0].mxu0
    %4571 = vdwg.mxu0
    %v4572 = vadd.f32 %v4487, %v4526
    %v4573 = vxor.u32 %v4572, 2147483648
    %v4574 = vmul.f32 %v4573, 1.442695
    %v4575 = vpow.pop %v4574
    %v4576 = vadd.f32 %v4575, 1.0
    %v4577 = vrcp.pop %v4576
    %v4578 = vmul.f32 1.0, %v4577
    %v4579 = vadd.f32 %v4488, %v4528
    %v4580 = vxor.u32 %v4579, 2147483648
    %v4581 = vmul.f32 %v4580, 1.442695
    %v4582 = vpow.pop %v4581
    %v4583 = vadd.f32 %v4582, 1.0
    %v4584 = vrcp.pop %v4583
    %v4585 = vmul.f32 1.0, %v4584
    %v4586 = vmul.f32 %v4578, %v4567
    %v4587 = vadd.f32 %v4489, %v4586
    %v4588 = vtanh.pop %v4587
    %v4589 = vsub.f32 1.0, %v4585
    %v4590 = vmul.f32 %v4589, %v4588
    %v4591 = vmul.f32 %v4585, %v4485
    %v4592 = vadd.f32 %v4590, %v4591
    %s4593 = scalar_lea.vmem [#allocation4], 24
    %v4594 = vld [vmem:[%s4593] sm:$0xff]
    %v4595 = vld [vmem:[%s4593 + $0x8] sm:$0xff]
    %v4596 = vld [vmem:[%s4593 + $0x10] sm:$0xff]
    %v4597 = vpack.c.bf16 %v4592, %v4592
    %4598 = vmatprep.subr.bf16.mxu0 %v3909
    %4599 = vmatpush1.bf16.msra.mxu0 %v3908
    %4600 = vmatprep.subr.bf16.mxu0 %v3912
    %4601 = vmatpush1.bf16.msra.mxu0 %v3911
    %4602 = vmatprep.subr.bf16.mxu0 %v3915
    %4603 = vmatpush1.bf16.msra.mxu0 %v3914
    %4604 = vmatprep.subr.bf16.mxu0 %v3918
    %4605 = vmatpush1.bf16.msra.mxu0 %v3917
    %4606 = vmatprep.subr.bf16.mxu0 %v3921
    %4607 = vmatpush1.bf16.msra.mxu0 %v3920
    %4608 = vmatprep.subr.bf16.mxu0 %v3924
    %4609 = vmatpush1.bf16.msra.mxu0 %v3923
    %4610 = vmatprep.subr.bf16.mxu0 %v3927
    %4611 = vmatpush1.bf16.msra.mxu0 %v3926
    %4612 = vmatprep.subr.bf16.mxu0 %v3930
    %4613 = vmatpush1.bf16.msra.mxu0 %v3929
    %4614 = vmatprep.subr.bf16.mxu0 0
    %4615 = vmatpush1.bf16.msra.mxu0 0
    %4616 = vmatprep.subr.bf16.mxu0 0
    %4617 = vmatpush1.bf16.msra.mxu0 0
    %4618 = vmatprep.subr.bf16.mxu0 0
    %4619 = vmatpush1.bf16.msra.mxu0 0
    %4620 = vmatprep.subr.bf16.mxu0 0
    %4621 = vmatpush1.bf16.msra.mxu0 0
    %4622 = vmatprep.subr.bf16.mxu0 0
    %4623 = vmatpush1.bf16.msra.mxu0 0
    %4624 = vmatprep.subr.bf16.mxu0 0
    %4625 = vmatpush1.bf16.msra.mxu0 0
    %4626 = vmatprep.subr.bf16.mxu0 0
    %4627 = vmatpush1.bf16.msra.mxu0 0
    %4628 = vmatprep.subr.bf16.mxu0 0
    %4629 = vmatpush1.bf16.msra.mxu0 0
    %4630 = vmatprep.mubr.bf16.mxu0 0
    %4631 = vmatmul.mubr.bf16.gmra.mrb[0].mxu0 %v4597
    %v4632 = vpop.f32.mrb[0].mxu0
    %v4633 = vadd.f32 %v3816, %v4632
    %v4634 = vpop.f32.mrb[0].mxu0
    %v4635 = vadd.f32 %v3820, %v4634
    %v4636 = vpop.f32.mrb[0].mxu0
    %v4637 = vpop.f32.mrb[0].mxu0
    %4638 = vdwg.mxu0
    %4639 = vmatprep.subr.bf16.mxu0 0
    %4640 = vmatpush1.bf16.msra.mxu0 %v3910
    %4641 = vmatprep.subr.bf16.mxu0 0
    %4642 = vmatpush1.bf16.msra.mxu0 %v3913
    %4643 = vmatprep.subr.bf16.mxu0 0
    %4644 = vmatpush1.bf16.msra.mxu0 %v3916
    %4645 = vmatprep.subr.bf16.mxu0 0
    %4646 = vmatpush1.bf16.msra.mxu0 %v3919
    %4647 = vmatprep.subr.bf16.mxu0 0
    %4648 = vmatpush1.bf16.msra.mxu0 %v3922
    %4649 = vmatprep.subr.bf16.mxu0 0
    %4650 = vmatpush1.bf16.msra.mxu0 %v3925
    %4651 = vmatprep.subr.bf16.mxu0 0
    %4652 = vmatpush1.bf16.msra.mxu0 %v3928
    %4653 = vmatprep.subr.bf16.mxu0 0
    %4654 = vmatpush1.bf16.msra.mxu0 %v3931
    %4655 = vmatprep.subr.bf16.mxu0 0
    %4656 = vmatpush1.bf16.msra.mxu0 0
    %4657 = vmatprep.subr.bf16.mxu0 0
    %4658 = vmatpush1.bf16.msra.mxu0 0
    %4659 = vmatprep.subr.bf16.mxu0 0
    %4660 = vmatpush1.bf16.msra.mxu0 0
    %4661 = vmatprep.subr.bf16.mxu0 0
    %4662 = vmatpush1.bf16.msra.mxu0 0
    %4663 = vmatprep.subr.bf16.mxu0 0
    %4664 = vmatpush1.bf16.msra.mxu0 0
    %4665 = vmatprep.subr.bf16.mxu0 0
    %4666 = vmatpush1.bf16.msra.mxu0 0
    %4667 = vmatprep.subr.bf16.mxu0 0
    %4668 = vmatpush1.bf16.msra.mxu0 0
    %4669 = vmatprep.subr.bf16.mxu0 0
    %4670 = vmatpush1.bf16.msra.mxu0 0
    %4671 = vmatprep.mubr.bf16.mxu0 0
    %4672 = vmatmul.mubr.bf16.gmra.mrb[0].mxu0 %v4597
    %v4673 = vpop.f32.mrb[0].mxu0
    %v4674 = vadd.f32 %v3824, %v4673
    %v4675 = vpop.f32.mrb[0].mxu0
    %v4676 = vpop.f32.mrb[0].mxu0
    %v4677 = vpop.f32.mrb[0].mxu0
    %4678 = vdwg.mxu0
    %v4679 = vadd.f32 %v4594, %v4633
    %v4680 = vxor.u32 %v4679, 2147483648
    %v4681 = vmul.f32 %v4680, 1.442695
    %v4682 = vpow.pop %v4681
    %v4683 = vadd.f32 %v4682, 1.0
    %v4684 = vrcp.pop %v4683
    %v4685 = vmul.f32 1.0, %v4684
    %v4686 = vadd.f32 %v4595, %v4635
    %v4687 = vxor.u32 %v4686, 2147483648
    %v4688 = vmul.f32 %v4687, 1.442695
    %v4689 = vpow.pop %v4688
    %v4690 = vadd.f32 %v4689, 1.0
    %v4691 = vrcp.pop %v4690
    %v4692 = vmul.f32 1.0, %v4691
    %v4693 = vmul.f32 %v4685, %v4674
    %v4694 = vadd.f32 %v4596, %v4693
    %v4695 = vtanh.pop %v4694
    %v4696 = vsub.f32 1.0, %v4692
    %v4697 = vmul.f32 %v4696, %v4695
    %v4698 = vmul.f32 %v4692, %v4592
    %v4699 = vadd.f32 %v4697, %v4698
    %v4700 = vld [vmem:[#allocation4] sm:$0xff]
    %v4701 = vld [vmem:[#allocation4 + $0x8] sm:$0xff]
    %v4702 = vld [vmem:[#allocation4 + $0x10] sm:$0xff]
    %v4703 = vpack.c.bf16 %v4699, %v4699
    %4704 = vmatprep.subr.bf16.mxu0 %v3909
    %4705 = vmatpush1.bf16.msra.mxu0 %v3908
    %4706 = vmatprep.subr.bf16.mxu0 %v3912
    %4707 = vmatpush1.bf16.msra.mxu0 %v3911
    %4708 = vmatprep.subr.bf16.mxu0 %v3915
    %4709 = vmatpush1.bf16.msra.mxu0 %v3914
    %4710 = vmatprep.subr.bf16.mxu0 %v3918
    %4711 = vmatpush1.bf16.msra.mxu0 %v3917
    %4712 = vmatprep.subr.bf16.mxu0 %v3921
    %4713 = vmatpush1.bf16.msra.mxu0 %v3920
    %4714 = vmatprep.subr.bf16.mxu0 %v3924
    %4715 = vmatpush1.bf16.msra.mxu0 %v3923
    %4716 = vmatprep.subr.bf16.mxu0 %v3927
    %4717 = vmatpush1.bf16.msra.mxu0 %v3926
    %4718 = vmatprep.subr.bf16.mxu0 %v3930
    %4719 = vmatpush1.bf16.msra.mxu0 %v3929
    %4720 = vmatprep.subr.bf16.mxu0 0
    %4721 = vmatpush1.bf16.msra.mxu0 0
    %4722 = vmatprep.subr.bf16.mxu0 0
    %4723 = vmatpush1.bf16.msra.mxu0 0
    %4724 = vmatprep.subr.bf16.mxu0 0
    %4725 = vmatpush1.bf16.msra.mxu0 0
    %4726 = vmatprep.subr.bf16.mxu0 0
    %4727 = vmatpush1.bf16.msra.mxu0 0
    %4728 = vmatprep.subr.bf16.mxu0 0
    %4729 = vmatpush1.bf16.msra.mxu0 0
    %4730 = vmatprep.subr.bf16.mxu0 0
    %4731 = vmatpush1.bf16.msra.mxu0 0
    %4732 = vmatprep.subr.bf16.mxu0 0
    %4733 = vmatpush1.bf16.msra.mxu0 0
    %4734 = vmatprep.subr.bf16.mxu0 0
    %4735 = vmatpush1.bf16.msra.mxu0 0
    %4736 = vmatprep.mubr.bf16.mxu0 0
    %4737 = vmatmul.mubr.bf16.gmra.mrb[0].mxu0 %v4703
    %v4738 = vpop.f32.mrb[0].mxu0
    %v4739 = vadd.f32 %v3816, %v4738
    %v4740 = vpop.f32.mrb[0].mxu0
    %v4741 = vadd.f32 %v3820, %v4740
    %v4742 = vpop.f32.mrb[0].mxu0
    %v4743 = vpop.f32.mrb[0].mxu0
    %4744 = vdwg.mxu0
    %4745 = vmatprep.subr.bf16.mxu0 0
    %4746 = vmatpush1.bf16.msra.mxu0 %v3910
    %4747 = vmatprep.subr.bf16.mxu0 0
    %4748 = vmatpush1.bf16.msra.mxu0 %v3913
    %4749 = vmatprep.subr.bf16.mxu0 0
    %4750 = vmatpush1.bf16.msra.mxu0 %v3916
    %4751 = vmatprep.subr.bf16.mxu0 0
    %4752 = vmatpush1.bf16.msra.mxu0 %v3919
    %4753 = vmatprep.subr.bf16.mxu0 0
    %4754 = vmatpush1.bf16.msra.mxu0 %v3922
    %4755 = vmatprep.subr.bf16.mxu0 0
    %4756 = vmatpush1.bf16.msra.mxu0 %v3925
    %4757 = vmatprep.subr.bf16.mxu0 0
    %4758 = vmatpush1.bf16.msra.mxu0 %v3928
    %4759 = vmatprep.subr.bf16.mxu0 0
    %4760 = vmatpush1.bf16.msra.mxu0 %v3931
    %4761 = vmatprep.subr.bf16.mxu0 0
    %4762 = vmatpush1.bf16.msra.mxu0 0
    %4763 = vmatprep.subr.bf16.mxu0 0
    %4764 = vmatpush1.bf16.msra.mxu0 0
    %4765 = vmatprep.subr.bf16.mxu0 0
    %4766 = vmatpush1.bf16.msra.mxu0 0
    %4767 = vmatprep.subr.bf16.mxu0 0
    %4768 = vmatpush1.bf16.msra.mxu0 0
    %4769 = vmatprep.subr.bf16.mxu0 0
    %4770 = vmatpush1.bf16.msra.mxu0 0
    %4771 = vmatprep.subr.bf16.mxu0 0
    %4772 = vmatpush1.bf16.msra.mxu0 0
    %4773 = vmatprep.subr.bf16.mxu0 0
    %4774 = vmatpush1.bf16.msra.mxu0 0
    %4775 = vmatprep.subr.bf16.mxu0 0
    %4776 = vmatpush1.bf16.msra.mxu0 0
    %4777 = vmatprep.mubr.bf16.mxu0 0
    %4778 = vmatmul.mubr.bf16.gmra.mrb[0].mxu0 %v4703
    %v4779 = vpop.f32.mrb[0].mxu0
    %v4780 = vadd.f32 %v3824, %v4779
    %v4781 = vpop.f32.mrb[0].mxu0
    %v4782 = vpop.f32.mrb[0].mxu0
    %v4783 = vpop.f32.mrb[0].mxu0
    %4784 = vdwg.mxu0
    %v4785 = vadd.f32 %v4700, %v4739
    %v4786 = vxor.u32 %v4785, 2147483648
    %v4787 = vmul.f32 %v4786, 1.442695
    %v4788 = vpow.pop %v4787
    %v4789 = vadd.f32 %v4788, 1.0
    %v4790 = vrcp.pop %v4789
    %v4791 = vmul.f32 1.0, %v4790
    %v4792 = vadd.f32 %v4701, %v4741
    %v4793 = vxor.u32 %v4792, 2147483648
    %v4794 = vmul.f32 %v4793, 1.442695
    %v4795 = vpow.pop %v4794
    %v4796 = vadd.f32 %v4795, 1.0
    %v4797 = vrcp.pop %v4796
    %v4798 = vmul.f32 1.0, %v4797
    %v4799 = vmul.f32 %v4791, %v4780
    %v4800 = vadd.f32 %v4702, %v4799
    %v4801 = vtanh.pop %v4800
    %v4802 = vsub.f32 1.0, %v4798
    %v4803 = vmul.f32 %v4802, %v4801
    %v4804 = vmul.f32 %v4798, %v4699
    %v4805 = vadd.f32 %v4803, %v4804
    %v4806 = vtanh.pop %v4805
    %v4807 = vpack.c.bf16 %v4806, %v4806
    %v4808 = vld [vmem:[#allocation15] sm:$0xf]
    %v4809 = vld [vmem:[#allocation15 + $0x4] sm:$0xf]
    %v4810 = vld [vmem:[#allocation15 + $0x8] sm:$0xf]
    %v4811 = vld [vmem:[#allocation15 + $0xc] sm:$0xf]
    %v4812 = vld [vmem:[#allocation15 + $0x10] sm:$0xf]
    %v4813 = vld [vmem:[#allocation15 + $0x14] sm:$0xf]
    %v4814 = vld [vmem:[#allocation15 + $0x18] sm:$0xf]
    %v4815 = vld [vmem:[#allocation15 + $0x1c] sm:$0xf]
    %v4816 = vld [vmem:[#allocation15 + $0x20] sm:$0xf]
    %v4817 = vld [vmem:[#allocation15 + $0x24] sm:$0xf]
    %v4818 = vld [vmem:[#allocation15 + $0x28] sm:$0xf]
    %v4819 = vld [vmem:[#allocation15 + $0x2c] sm:$0xf]
    %v4820 = vld [vmem:[#allocation15 + $0x30] sm:$0xf]
    %v4821 = vld [vmem:[#allocation15 + $0x34] sm:$0xf]
    %v4822 = vld [vmem:[#allocation15 + $0x38] sm:$0xf]
    %v4823 = vld [vmem:[#allocation15 + $0x3c] sm:$0xf]
    %v4824 = vld [vmem:[%s17] sm:$0x1]
    %v4826 = vlaneseq
    %v4827 = vshrl.u32 %v4826, 7
    %v4828 = vsub.s32 0, %v4827
    %v4829 = vrot.slane %v4824, %v4828
    %v4847 = vunpack.c.l.b16 %v4808
    %v4848 = vunpack.c.l.b16 %v4809
    %v4849 = vunpack.c.l.b16 %v4810
    %v4850 = vunpack.c.l.b16 %v4811
    %v4851 = vunpack.c.l.b16 %v4812
    %v4852 = vunpack.c.l.b16 %v4813
    %v4853 = vunpack.c.l.b16 %v4814
    %v4854 = vunpack.c.l.b16 %v4815
    %v4855 = vunpack.c.l.b16 %v4816
    %v4856 = vunpack.c.l.b16 %v4817
    %v4857 = vunpack.c.l.b16 %v4818
    %v4858 = vunpack.c.l.b16 %v4819
    %v4859 = vunpack.c.l.b16 %v4820
    %v4860 = vunpack.c.l.b16 %v4821
    %v4861 = vunpack.c.l.b16 %v4822
    %v4862 = vunpack.c.l.b16 %v4823
    %v4863 = vpack.c.b16 %v4848, %v4847
    %v4864 = vpack.c.b16 %v4850, %v4849
    %v4865 = vpack.c.b16 %v4852, %v4851
    %v4866 = vpack.c.b16 %v4854, %v4853
    %v4867 = vpack.c.b16 %v4856, %v4855
    %v4868 = vpack.c.b16 %v4858, %v4857
    %v4869 = vpack.c.b16 %v4860, %v4859
    %v4870 = vpack.c.b16 %v4862, %v4861
    %4879 = vmatprep.subr.bf16.mxu0 0
    %4880 = vmatpush1.bf16.msra.mxu0 %v4863
    %4881 = vmatprep.subr.bf16.mxu0 0
    %4882 = vmatpush1.bf16.msra.mxu0 %v4864
    %4883 = vmatprep.subr.bf16.mxu0 0
    %4884 = vmatpush1.bf16.msra.mxu0 %v4865
    %4885 = vmatprep.subr.bf16.mxu0 0
    %4886 = vmatpush1.bf16.msra.mxu0 %v4866
    %4887 = vmatprep.subr.bf16.mxu0 0
    %4888 = vmatpush1.bf16.msra.mxu0 %v4867
    %4889 = vmatprep.subr.bf16.mxu0 0
    %4890 = vmatpush1.bf16.msra.mxu0 %v4868
    %4891 = vmatprep.subr.bf16.mxu0 0
    %4892 = vmatpush1.bf16.msra.mxu0 %v4869
    %4893 = vmatprep.subr.bf16.mxu0 0
    %4894 = vmatpush1.bf16.msra.mxu0 %v4870
    %4895 = vmatprep.subr.bf16.mxu0 0
    %4896 = vmatpush1.bf16.msra.mxu0 0
    %4897 = vmatprep.subr.bf16.mxu0 0
    %4898 = vmatpush1.bf16.msra.mxu0 0
    %4899 = vmatprep.subr.bf16.mxu0 0
    %4900 = vmatpush1.bf16.msra.mxu0 0
    %4901 = vmatprep.subr.bf16.mxu0 0
    %4902 = vmatpush1.bf16.msra.mxu0 0
    %4903 = vmatprep.subr.bf16.mxu0 0
    %4904 = vmatpush1.bf16.msra.mxu0 0
    %4905 = vmatprep.subr.bf16.mxu0 0
    %4906 = vmatpush1.bf16.msra.mxu0 0
    %4907 = vmatprep.subr.bf16.mxu0 0
    %4908 = vmatpush1.bf16.msra.mxu0 0
    %4909 = vmatprep.subr.bf16.mxu0 0
    %4910 = vmatpush1.bf16.msra.mxu0 0
    %4911 = vmatprep.mubr.bf16.mxu0 0
    %4912 = vmatmul.mubr.bf16.gmra.mrb[0].mxu0 %v4807
    %v4913 = vpop.f32.mrb[0].mxu0
    %v4914 = vadd.f32 %v4829, %v4913
    %v4915 = vpop.f32.mrb[0].mxu0
    %v4916 = vpop.f32.mrb[0].mxu0
    %v4917 = vpop.f32.mrb[0].mxu0
    %4918 = vdwg.mxu0
    %v4919 = vtanh.pop %v4914
    %v4920 = vpack.c.bf16 %v4919, %v4919
    %v4921 = vld [vmem:[#allocation16] sm:$0xf]
    %v4922 = vld [vmem:[#allocation16 + $0x4] sm:$0xf]
    %v4923 = vld [vmem:[#allocation16 + $0x8] sm:$0xf]
    %v4924 = vld [vmem:[#allocation16 + $0xc] sm:$0xf]
    %v4925 = vld [vmem:[#allocation16 + $0x10] sm:$0xf]
    %v4926 = vld [vmem:[#allocation16 + $0x14] sm:$0xf]
    %v4927 = vld [vmem:[#allocation16 + $0x18] sm:$0xf]
    %v4928 = vld [vmem:[#allocation16 + $0x1c] sm:$0xf]
    %v4929 = vld [vmem:[#allocation16 + $0x20] sm:$0xf]
    %v4930 = vld [vmem:[#allocation16 + $0x24] sm:$0xf]
    %v4931 = vld [vmem:[#allocation16 + $0x28] sm:$0xf]
    %v4932 = vld [vmem:[#allocation16 + $0x2c] sm:$0xf]
    %v4933 = vld [vmem:[#allocation16 + $0x30] sm:$0xf]
    %v4934 = vld [vmem:[#allocation16 + $0x34] sm:$0xf]
    %v4935 = vld [vmem:[#allocation16 + $0x38] sm:$0xf]
    %v4936 = vld [vmem:[#allocation16 + $0x3c] sm:$0xf]
    %v4937 = vld [vmem:[%s19] sm:$0x1]
    %v4939 = vlaneseq
    %v4940 = vshrl.u32 %v4939, 7
    %v4941 = vsub.s32 0, %v4940
    %v4942 = vrot.slane %v4937, %v4941
    %v4960 = vunpack.c.l.b16 %v4921
    %v4961 = vunpack.c.l.b16 %v4922
    %v4962 = vunpack.c.l.b16 %v4923
    %v4963 = vunpack.c.l.b16 %v4924
    %v4964 = vunpack.c.l.b16 %v4925
    %v4965 = vunpack.c.l.b16 %v4926
    %v4966 = vunpack.c.l.b16 %v4927
    %v4967 = vunpack.c.l.b16 %v4928
    %v4968 = vunpack.c.l.b16 %v4929
    %v4969 = vunpack.c.l.b16 %v4930
    %v4970 = vunpack.c.l.b16 %v4931
    %v4971 = vunpack.c.l.b16 %v4932
    %v4972 = vunpack.c.l.b16 %v4933
    %v4973 = vunpack.c.l.b16 %v4934
    %v4974 = vunpack.c.l.b16 %v4935
    %v4975 = vunpack.c.l.b16 %v4936
    %v4976 = vpack.c.b16 %v4961, %v4960
    %v4977 = vpack.c.b16 %v4963, %v4962
    %v4978 = vpack.c.b16 %v4965, %v4964
    %v4979 = vpack.c.b16 %v4967, %v4966
    %v4980 = vpack.c.b16 %v4969, %v4968
    %v4981 = vpack.c.b16 %v4971, %v4970
    %v4982 = vpack.c.b16 %v4973, %v4972
    %v4983 = vpack.c.b16 %v4975, %v4974
    %4992 = vmatprep.subr.bf16.mxu0 0
    %4993 = vmatpush1.bf16.msra.mxu0 %v4976
    %4994 = vmatprep.subr.bf16.mxu0 0
    %4995 = vmatpush1.bf16.msra.mxu0 %v4977
    %4996 = vmatprep.subr.bf16.mxu0 0
    %4997 = vmatpush1.bf16.msra.mxu0 %v4978
    %4998 = vmatprep.subr.bf16.mxu0 0
    %4999 = vmatpush1.bf16.msra.mxu0 %v4979
    %5000 = vmatprep.subr.bf16.mxu0 0
    %5001 = vmatpush1.bf16.msra.mxu0 %v4980
    %5002 = vmatprep.subr.bf16.mxu0 0
    %5003 = vmatpush1.bf16.msra.mxu0 %v4981
    %5004 = vmatprep.subr.bf16.mxu0 0
    %5005 = vmatpush1.bf16.msra.mxu0 %v4982
    %5006 = vmatprep.subr.bf16.mxu0 0
    %5007 = vmatpush1.bf16.msra.mxu0 %v4983
    %5008 = vmatprep.subr.bf16.mxu0 0
    %5009 = vmatpush1.bf16.msra.mxu0 0
    %5010 = vmatprep.subr.bf16.mxu0 0
    %5011 = vmatpush1.bf16.msra.mxu0 0
    %5012 = vmatprep.subr.bf16.mxu0 0
    %5013 = vmatpush1.bf16.msra.mxu0 0
    %5014 = vmatprep.subr.bf16.mxu0 0
    %5015 = vmatpush1.bf16.msra.mxu0 0
    %5016 = vmatprep.subr.bf16.mxu0 0
    %5017 = vmatpush1.bf16.msra.mxu0 0
    %5018 = vmatprep.subr.bf16.mxu0 0
    %5019 = vmatpush1.bf16.msra.mxu0 0
    %5020 = vmatprep.subr.bf16.mxu0 0
    %5021 = vmatpush1.bf16.msra.mxu0 0
    %5022 = vmatprep.subr.bf16.mxu0 0
    %5023 = vmatpush1.bf16.msra.mxu0 0
    %5024 = vmatprep.mubr.bf16.mxu0 0
    %5025 = vmatmul.mubr.bf16.gmra.mrb[0].mxu0 %v4920
    %v5026 = vpop.f32.mrb[0].mxu0
    %v5027 = vadd.f32 %v4942, %v5026
    %v5028 = vpop.f32.mrb[0].mxu0
    %v5029 = vpop.f32.mrb[0].mxu0
    %v5030 = vpop.f32.mrb[0].mxu0
    %5031 = vdwg.mxu0
    %5032 = vst [vmem:[%s20] sm:$0xff] %v5027
    // Predicated region
    $region114: #{vqa_forward.1} parent=1 // pred_check
      _
    $region115: #{vqa_forward.1} parent=1 // pred_check_branch
      %5034 = sbr.rel (0) target = $region117
    $region116: #{vqa_forward.1} parent=1 // pred_region
      _
    $region117: #{vqa_forward.1} parent=1 // pred_fallthru
      _
    // Predicated region
    $region118: #{vqa_forward.1} parent=1 // pred_check
      _
    $region119: #{vqa_forward.1} parent=1 // pred_check_branch
      %5036 = sbr.rel (0) target = $region121
    $region120: #{vqa_forward.1} parent=1 // pred_region
      _
    $region121: #{vqa_forward.1} parent=1 // pred_fallthru
      _
    %5037 = vsyncpa [#allocation6], 1
    %5038 = vsyncpa [#allocation8], 1
    %5039 = vsyncpa [#allocation11], 1
    %5040 = vsyncpa [#allocation14], 1
    %5041 = vsyncpa [#allocation17], 1

</llo_original>
